<compile_context>
chip_gen: v7x
topology: tpu7x:2x2x1
jax: 0.10.0
libtpu: 0.0.40
codegen_flags: <defaults>
</compile_context>

<pallas_src>
import jax
import jax.numpy as jnp
from jax.experimental import pallas as pl
from jax.experimental.pallas import tpu as pltpu

SMILES_CHARS = ['*', ' ', '#', '%', '(', ')', '+', '-', '.', '/', '=', '@',
                '[', '\\', ']', '0', '1', '2', '3', '4', '5', '6', '7', '8',
                '9', 'Br', 'Cl', 'F', 'H', 'C', 'I', 'K', 'N', 'O', 'P', 'S',
                'br', 'cl', 'f', 'h', 'c', 'i', 'k', 'n', 'o', 'p', 's']

VOCAB = len(SMILES_CHARS)            # 47
VOCAB_PAD = 128                      # padded vocab (extra rows are zero)
SMILES_IN = 500
ENC_DIMS = 100
ENC_PAD = 128                        # 100 -> 128
PRED_IN = 25100
SEQ_LEN = PRED_IN // ENC_DIMS - 1    # 250  (250*100 + 1*100 = 25100)
SEQ_PAD = 256                        # 250 -> 256
K_TOTAL = SEQ_PAD * ENC_PAD          # 32768 padded reduction width
K_TILE = 8192                        # predictor K tile (4 grid steps)


def _pick_row_tile(n_rows):
    # Largest of (1024, 512, 256) dividing n_rows = B * SEQ_PAD while keeping
    # >= 2 grid steps (pipelining; v7x megacore sharding of the parallel axis).
    for t in (1024, 512, 256):
        if n_rows % t == 0 and n_rows // t >= 2:
            return t
    for t in (1024, 512, 256):
        if n_rows % t == 0:
            return t
    return n_rows


# ----------------------------- Pallas kernels ------------------------------

def _encoder_kernel(tok_ref, t_ref, b_ref, enc_ref):
    rows = tok_ref.shape[0]
    vocab = t_ref.shape[0]
    # Embedding + folded smiles_encoder: one-hot (exact in bf16) -> a single
    # (rows,128)x(128,128) bf16 MXU pass with f32 accumulation, bias + ReLU
    # on the VPU in f32, lane-dense bf16 store.
    onehot = (tok_ref[...] ==
              jax.lax.broadcasted_iota(jnp.int32, (rows, vocab), 1)
              ).astype(jnp.bfloat16)                                   # (TR,128)
    enc = jnp.dot(onehot, t_ref[...],
                  preferred_element_type=jnp.float32) + b_ref[...]    # (TR,128) f32
    enc_ref[...] = jnp.maximum(enc, 0.0).astype(jnp.bfloat16)


def _predictor_kernel(enc_ref, wp1a_ref, wt_ref, ww_ref, bw_ref, wp1b_ref,
                      bp1_ref, wp2r_ref, bp2_ref, out_ref, acc_ref):
    k = pl.program_id(0)

    @pl.when(k == 0)
    def _init():
        acc_ref[...] = jnp.zeros_like(acc_ref)

    # Partial (B,H) contribution of this K tile (bf16 operands, f32 acc).
    acc_ref[...] += jnp.dot(enc_ref[...], wp1a_ref[...],
                            preferred_element_type=jnp.float32)

    @pl.when(k == pl.num_programs(0) - 1)
    def _finalize():
        # weight_encoder: ReLU(weight @ ww + bw), tiny, kept in f32.
        wenc = jnp.maximum(wt_ref[...] * ww_ref[...] + bw_ref[...], 0.0)  # (B,128)
        h2 = (acc_ref[...]
              + jnp.dot(wenc, wp1b_ref[...], preferred_element_type=jnp.float32)
              + bp1_ref[...])                                             # (B,H)
        # Second predictor Linear (H -> 1) as a VPU reduce, then ReLU.
        y = jnp.sum(h2 * wp2r_ref[...], axis=-1, keepdims=True) + bp2_ref[...]
        out_ref[...] = jnp.maximum(y, 0.0)                                # (B,1)


# ------------------------------ Parameters ---------------------------------

def init_params(key, embedding_dims, n_hidden):
    """Unpadded parameters matching the PyTorch module layout (W stored as in->out)."""
    ks = jax.random.split(key, 11)

    def unif(k, shape, fan_in):
        bound = 1.0 / float(fan_in) ** 0.5
        return jax.random.uniform(k, shape, jnp.float32, -bound, bound)

    emb = jax.random.normal(ks[0], (VOCAB, embedding_dims), jnp.float32)
    emb = emb.at[0].set(0.0)        # padding_idx=0 row is zero at init

    return dict(
        emb=emb,
        w1=unif(ks[1], (embedding_dims, SMILES_IN), embedding_dims),
        b1=unif(ks[2], (1, SMILES_IN), embedding_dims),
        w2=unif(ks[3], (SMILES_IN, ENC_DIMS), SMILES_IN),
        b2=unif(ks[4], (1, ENC_DIMS), SMILES_IN),
        ww=unif(ks[5], (1, ENC_DIMS), 1),
        bw=unif(ks[6], (1, ENC_DIMS), 1),
        wp1=unif(ks[7], (PRED_IN, n_hidden), PRED_IN),
        bp1=unif(ks[8], (1, n_hidden), PRED_IN),
        wp2=unif(ks[9], (n_hidden, 1), n_hidden),
        bp2=unif(ks[10], (1, 1), n_hidden),
    )


def prepare_params(p, embedding_dims, n_hidden):
    """One-time folding / zero-padding / re-layout of the weights for the kernels."""
    H = n_hidden

    # Fold embedding + smiles_encoder (two back-to-back Linears):
    #   enc_pre(tok) = emb[tok] @ w1 @ w2 + (b1 @ w2 + b2)
    t_full = p['emb'] @ p['w1'] @ p['w2']                        # (VOCAB, ENC_DIMS)
    b_full = p['b1'] @ p['w2'] + p['b2']                         # (1, ENC_DIMS)
    t_p = (jnp.zeros((VOCAB_PAD, ENC_PAD), jnp.float32)
           .at[:VOCAB, :ENC_DIMS].set(t_full)).astype(jnp.bfloat16)
    b_p = jnp.zeros((1, ENC_PAD), jnp.float32).at[:, :ENC_DIMS].set(b_full)

    ww_p = jnp.zeros((1, ENC_PAD), jnp.float32).at[:, :ENC_DIMS].set(p['ww'])
    bw_p = jnp.zeros((1, ENC_PAD), jnp.float32).at[:, :ENC_DIMS].set(p['bw'])

    # Split predictor first-layer weights: smiles part, re-laid-out so its K
    # axis matches the zero-padded (SEQ_PAD * ENC_PAD) enc stream and stored
    # bf16 (it is the dominant HBM stream); weight-encoder part kept f32 (tiny).
    wp1_sm = p['wp1'][:SEQ_LEN * ENC_DIMS].reshape(SEQ_LEN, ENC_DIMS, H)
    wp1a = (jnp.zeros((SEQ_PAD, ENC_PAD, H), jnp.float32)
            .at[:SEQ_LEN, :ENC_DIMS, :].set(wp1_sm)
            .reshape(SEQ_PAD * ENC_PAD, H)).astype(jnp.bfloat16)
    wp1b = (jnp.zeros((ENC_PAD, H), jnp.float32)
            .at[:ENC_DIMS, :].set(p['wp1'][SEQ_LEN * ENC_DIMS:]))

    return dict(t=t_p, b=b_p, ww=ww_p, bw=bw_p, wp1a=wp1a, wp1b=wp1b,
                bp1=p['bp1'], wp2r=p['wp2'].T, bp2=p['bp2'])


# ------------------------------- Forward -----------------------------------

@jax.jit
def linear_logp_forward(pp, smiles, weight):
    B, S = smiles.shape
    assert S == SEQ_LEN, f"expected seq len {SEQ_LEN}, got {S}"
    H = pp['bp1'].shape[1]

    # ---- Encoder: folded, gridded over row tiles of the padded token stream.
    tok = jnp.pad(smiles.astype(jnp.int32), ((0, 0), (0, SEQ_PAD - S)))
    N = B * SEQ_PAD
    tok = tok.reshape(N, 1)
    TR = _pick_row_tile(N)

    enc = pl.pallas_call(
        _encoder_kernel,
        out_shape=jax.ShapeDtypeStruct((N, ENC_PAD), jnp.bfloat16),
        grid=(N // TR,),
        in_specs=[
            pl.BlockSpec((TR, 1), lambda i: (i, 0)),              # tokens (streamed)
            pl.BlockSpec((VOCAB_PAD, ENC_PAD), lambda i: (0, 0)), # folded table (resident)
            pl.BlockSpec((1, ENC_PAD), lambda i: (0, 0)),         # folded bias
        ],
        out_specs=pl.BlockSpec((TR, ENC_PAD), lambda i: (i, 0)),
        compiler_params=pltpu.CompilerParams(
            dimension_semantics=("parallel",),
            vmem_limit_bytes=32 * 1024 * 1024),
        cost_estimate=pl.CostEstimate(
            flops=2 * N * VOCAB_PAD * ENC_PAD,
            transcendentals=0,
            bytes_accessed=(4 * N + 2 * VOCAB_PAD * ENC_PAD + 4 * ENC_PAD
                            + 2 * N * ENC_PAD)),
    )(tok, pp['t'], pp['b'])

    # Free, contiguous HBM reshape: (B*SEQ_PAD, 128) -> (B, SEQ_PAD*128).
    encflat = enc.reshape(B, K_TOTAL)
    wt = weight.reshape(B, 1).astype(jnp.float32)

    # ---- Predictor: K-tiled bf16 streams with f32 VMEM accumulator. ----
    num_k = K_TOTAL // K_TILE
    out = pl.pallas_call(
        _predictor_kernel,
        out_shape=jax.ShapeDtypeStruct((B, 1), jnp.float32),
        grid=(num_k,),
        in_specs=[
            pl.BlockSpec((B, K_TILE), lambda k: (0, k)),         # enc stream (bf16)
            pl.BlockSpec((K_TILE, H), lambda k: (k, 0)),         # wp1a stream (bf16)
            pl.BlockSpec((B, 1), lambda k: (0, 0)),              # weight input
            pl.BlockSpec((1, ENC_PAD), lambda k: (0, 0)),        # ww
            pl.BlockSpec((1, ENC_PAD), lambda k: (0, 0)),        # bw
            pl.BlockSpec((ENC_PAD, H), lambda k: (0, 0)),        # wp1b (f32)
            pl.BlockSpec((1, H), lambda k: (0, 0)),              # bp1
            pl.BlockSpec((1, H), lambda k: (0, 0)),              # wp2 (row)
            pl.BlockSpec((1, 1), lambda k: (0, 0)),              # bp2
        ],
        out_specs=pl.BlockSpec((B, 1), lambda k: (0, 0)),
        scratch_shapes=[pltpu.VMEM((B, H), jnp.float32)],
        compiler_params=pltpu.CompilerParams(
            dimension_semantics=("arbitrary",),
            vmem_limit_bytes=32 * 1024 * 1024),
        cost_estimate=pl.CostEstimate(
            flops=2 * B * (K_TOTAL * H + ENC_PAD * H + 2 * H),
            transcendentals=0,
            bytes_accessed=(2 * B * K_TOTAL + 2 * K_TOTAL * H
                            + 4 * (ENC_PAD * H + 2 * ENC_PAD + 2 * H + 2 * B + 1))),
    )(encflat, pp['wp1a'], wt, pp['ww'], pp['bw'], pp['wp1b'],
      pp['bp1'], pp['wp2r'], pp['bp2'])

    return out.reshape(B, 1, 1)


# Pure-JAX reference (semantics identical to the PyTorch module).
def reference_forward(params, smiles, weight):
    B, S = smiles.shape
    emb = params['emb'][smiles]                                         # (B,S,E)
    h = emb @ params['w1'] + params['b1']
    enc = jnp.maximum(h @ params['w2'] + params['b2'], 0.0)             # (B,S,100)
    wenc = jnp.maximum(weight.reshape(B, 1) @ params['ww'] + params['bw'], 0.0)
    mol = jnp.concatenate([enc.reshape(B, -1), wenc], axis=1)           # (B,25100)
    h2 = mol @ params['wp1'] + params['bp1']
    y = jnp.maximum(h2 @ params['wp2'] + params['bp2'], 0.0)
    return y.reshape(B, 1, 1)


if __name__ == "__main__":
    B, EMB_DIMS, N_HIDDEN = 2, 32, 32

    key = jax.random.PRNGKey(0)
    k_params, k_smiles, k_weight = jax.random.split(key, 3)

    params = init_params(k_params, EMB_DIMS, N_HIDDEN)
    pparams = prepare_params(params, EMB_DIMS, N_HIDDEN)

    smiles = jax.random.randint(k_smiles, (B, SEQ_LEN), 0, VOCAB, dtype=jnp.int32)
    weight = jax.random.uniform(k_weight, (B, 1, 1), jnp.float32, 0.0, 500.0)

    out = linear_logp_forward(pparams, smiles, weight)
    jax.block_until_ready(out)

    ref = reference_forward(params, smiles, weight)
    assert out.shape == (B, 1, 1), out.shape
    assert jnp.allclose(out, ref, rtol=1e-3, atol=1e-2), (out, ref)

    print("KERNEL_OK")
</pallas_src>

<mosaic_0001>
module attributes {stable_mosaic.version = 11 : i64} {
  func.func @_encoder_kernel(%arg0: i32, %arg1: memref<256x1xi32, #tpu.memory_space<vmem>>, %arg2: memref<128x128xbf16, #tpu.memory_space<vmem>>, %arg3: memref<1x128xf32, #tpu.memory_space<vmem>>, %arg4: memref<256x128xbf16, #tpu.memory_space<vmem>>) attributes {dimension_semantics = [#tpu.dimension_semantics<parallel>], iteration_bounds = array<i64: 2>, scalar_prefetch = 0 : i64, scratch_operands = 0 : i64, tpu.core_type = #tpu.core_type<tc>, window_params = [{transform_indices = @transform_0, window_bounds = array<i64: 256, 1>}, {pipeline_mode = #tpu.pipeline_mode<synchronous>, transform_indices = @transform_1, window_bounds = array<i64: 128, 128>}, {pipeline_mode = #tpu.pipeline_mode<synchronous>, transform_indices = @transform_2, window_bounds = array<i64: 1, 128>}, {transform_indices = @transform_3, window_bounds = array<i64: 256, 128>}]} {
    %c0 = arith.constant 0 : index
    %c0_0 = arith.constant 0 : index
    %0 = vector.load %arg1[%c0, %c0_0] : memref<256x1xi32, #tpu.memory_space<vmem>>, vector<256x1xi32>
    %1 = tpu.iota {dimensions = array<i32: 1>} : vector<256x128xi32>
    %2 = vector.broadcast %0 : vector<256x1xi32> to vector<256x128xi32>
    %3 = arith.cmpi eq, %2, %1 : vector<256x128xi32>
    %4 = arith.extui %3 : vector<256x128xi1> to vector<256x128xi32>
    %5 = arith.sitofp %4 : vector<256x128xi32> to vector<256x128xf32>
    %6 = arith.truncf %5 : vector<256x128xf32> to vector<256x128xbf16>
    %c0_1 = arith.constant 0 : index
    %c0_2 = arith.constant 0 : index
    %7 = vector.load %arg2[%c0_1, %c0_2] : memref<128x128xbf16, #tpu.memory_space<vmem>>, vector<128x128xbf16>
    %cst = arith.constant dense<0.000000e+00> : vector<256x128xf32>
    %8 = tpu.matmul %6, %7, %cst {dimension_numbers = #tpu.dot_dimension_numbers<[1], [0], [0], [1], [0, 0, 1, 1], [], []>} : vector<256x128xbf16>, vector<128x128xbf16>, vector<256x128xf32> -> vector<256x128xf32>
    %c0_3 = arith.constant 0 : index
    %c0_4 = arith.constant 0 : index
    %9 = vector.load %arg3[%c0_3, %c0_4] : memref<1x128xf32, #tpu.memory_space<vmem>>, vector<1x128xf32>
    %10 = vector.broadcast %9 : vector<1x128xf32> to vector<256x128xf32>
    %11 = arith.addf %8, %10 : vector<256x128xf32>
    %cst_5 = arith.constant 0.000000e+00 : f32
    %12 = vector.broadcast %cst_5 : f32 to vector<256x128xf32>
    %13 = arith.maximumf %11, %12 : vector<256x128xf32>
    %14 = arith.truncf %13 : vector<256x128xf32> to vector<256x128xbf16>
    %c0_6 = arith.constant 0 : index
    %c0_7 = arith.constant 0 : index
    %15 = vector.load %arg4[%c0_6, %c0_7] : memref<256x128xbf16, #tpu.memory_space<vmem>>, vector<256x128xbf16>
    tpu.vector_store %arg4[%c0_6, %c0_7], %14 {strides = array<i32>} : memref<256x128xbf16, #tpu.memory_space<vmem>>, vector<256x128xbf16>,
    return
  }
  func.func @transform_0(%arg0: i32) -> (i32, i32) {
    %c0_i32 = arith.constant 0 : i32
    %c0_i32_0 = arith.constant 0 : i32
    return %arg0, %c0_i32 : i32, i32
  }
  func.func @transform_1(%arg0: i32) -> (i32, i32) {
    %c0_i32 = arith.constant 0 : i32
    %c0_i32_0 = arith.constant 0 : i32
    %c0_i32_1 = arith.constant 0 : i32
    return %c0_i32, %c0_i32_0 : i32, i32
  }
  func.func @transform_2(%arg0: i32) -> (i32, i32) {
    %c0_i32 = arith.constant 0 : i32
    %c0_i32_0 = arith.constant 0 : i32
    %c0_i32_1 = arith.constant 0 : i32
    return %c0_i32, %c0_i32_0 : i32, i32
  }
  func.func @transform_3(%arg0: i32) -> (i32, i32) {
    %c0_i32 = arith.constant 0 : i32
    %c0_i32_0 = arith.constant 0 : i32
    return %arg0, %c0_i32 : i32, i32
  }
}

module attributes {stable_mosaic.version = 11 : i64} {
  func.func @_predictor_kernel(%arg0: i32, %arg1: memref<2x8192xbf16, #tpu.memory_space<vmem>>, %arg2: memref<8192x32xbf16, #tpu.memory_space<vmem>>, %arg3: memref<2x1xf32, #tpu.memory_space<vmem>>, %arg4: memref<1x128xf32, #tpu.memory_space<vmem>>, %arg5: memref<1x128xf32, #tpu.memory_space<vmem>>, %arg6: memref<128x32xf32, #tpu.memory_space<vmem>>, %arg7: memref<1x32xf32, #tpu.memory_space<vmem>>, %arg8: memref<1x32xf32, #tpu.memory_space<vmem>>, %arg9: memref<1x1xf32, #tpu.memory_space<vmem>>, %arg10: memref<2x1xf32, #tpu.memory_space<vmem>>, %arg11: memref<2x32xf32, #tpu.memory_space<vmem>>) attributes {dimension_semantics = [#tpu.dimension_semantics<arbitrary>], iteration_bounds = array<i64: 4>, scalar_prefetch = 0 : i64, scratch_operands = 1 : i64, tpu.core_type = #tpu.core_type<tc>, window_params = [{transform_indices = @transform_0, window_bounds = array<i64: 2, 8192>}, {transform_indices = @transform_1, window_bounds = array<i64: 8192, 32>}, {pipeline_mode = #tpu.pipeline_mode<synchronous>, transform_indices = @transform_2, window_bounds = array<i64: 2, 1>}, {pipeline_mode = #tpu.pipeline_mode<synchronous>, transform_indices = @transform_3, window_bounds = array<i64: 1, 128>}, {pipeline_mode = #tpu.pipeline_mode<synchronous>, transform_indices = @transform_4, window_bounds = array<i64: 1, 128>}, {pipeline_mode = #tpu.pipeline_mode<synchronous>, transform_indices = @transform_5, window_bounds = array<i64: 128, 32>}, {pipeline_mode = #tpu.pipeline_mode<synchronous>, transform_indices = @transform_6, window_bounds = array<i64: 1, 32>}, {pipeline_mode = #tpu.pipeline_mode<synchronous>, transform_indices = @transform_7, window_bounds = array<i64: 1, 32>}, {pipeline_mode = #tpu.pipeline_mode<synchronous>, transform_indices = @transform_8, window_bounds = array<i64: 1, 1>}, {pipeline_mode = #tpu.pipeline_mode<synchronous>, transform_indices = @transform_9, window_bounds = array<i64: 2, 1>}]} {
    %c0_i32 = arith.constant 0 : i32
    %0 = arith.cmpi eq, %arg0, %c0_i32 : i32
    %1 = arith.extui %0 : i1 to i32
    %c0_i32_0 = arith.constant 0 : i32
    %2 = arith.cmpi ne, %1, %c0_i32_0 : i32
    scf.if %2 {
      %cst_9 = arith.constant 0.000000e+00 : f32
      %12 = vector.broadcast %cst_9 : f32 to vector<2x32xf32>
      %c0_10 = arith.constant 0 : index
      %c0_11 = arith.constant 0 : index
      %13 = vector.load %arg11[%c0_10, %c0_11] : memref<2x32xf32, #tpu.memory_space<vmem>>, vector<2x32xf32>
      tpu.vector_store %arg11[%c0_10, %c0_11], %12 {strides = array<i32>} : memref<2x32xf32, #tpu.memory_space<vmem>>, vector<2x32xf32>,
    } else {
    }
    %c0 = arith.constant 0 : index
    %c0_1 = arith.constant 0 : index
    %3 = vector.load %arg11[%c0, %c0_1] : memref<2x32xf32, #tpu.memory_space<vmem>>, vector<2x32xf32>
    %c0_2 = arith.constant 0 : index
    %c0_3 = arith.constant 0 : index
    %4 = vector.load %arg1[%c0_2, %c0_3] : memref<2x8192xbf16, #tpu.memory_space<vmem>>, vector<2x8192xbf16>
    %c0_4 = arith.constant 0 : index
    %c0_5 = arith.constant 0 : index
    %5 = vector.load %arg2[%c0_4, %c0_5] : memref<8192x32xbf16, #tpu.memory_space<vmem>>, vector<8192x32xbf16>
    %cst = arith.constant dense<0.000000e+00> : vector<2x32xf32>
    %6 = tpu.matmul %4, %5, %cst {dimension_numbers = #tpu.dot_dimension_numbers<[1], [0], [0], [1], [0, 0, 1, 1], [], []>} : vector<2x8192xbf16>, vector<8192x32xbf16>, vector<2x32xf32> -> vector<2x32xf32>
    %7 = arith.addf %3, %6 : vector<2x32xf32>
    %c0_6 = arith.constant 0 : index
    %c0_7 = arith.constant 0 : index
    %8 = vector.load %arg11[%c0_6, %c0_7] : memref<2x32xf32, #tpu.memory_space<vmem>>, vector<2x32xf32>
    tpu.vector_store %arg11[%c0_6, %c0_7], %7 {strides = array<i32>} : memref<2x32xf32, #tpu.memory_space<vmem>>, vector<2x32xf32>,
    %c3_i32 = arith.constant 3 : i32
    %9 = arith.cmpi eq, %arg0, %c3_i32 : i32
    %10 = arith.extui %9 : i1 to i32
    %c0_i32_8 = arith.constant 0 : i32
    %11 = arith.cmpi ne, %10, %c0_i32_8 : i32
    scf.if %11 {
      %c0_9 = arith.constant 0 : index
      %c0_10 = arith.constant 0 : index
      %12 = vector.load %arg3[%c0_9, %c0_10] : memref<2x1xf32, #tpu.memory_space<vmem>>, vector<2x1xf32>
      %c0_11 = arith.constant 0 : index
      %c0_12 = arith.constant 0 : index
      %13 = vector.load %arg4[%c0_11, %c0_12] : memref<1x128xf32, #tpu.memory_space<vmem>>, vector<1x128xf32>
      %14 = vector.broadcast %12 : vector<2x1xf32> to vector<2x128xf32>
      %15 = vector.broadcast %13 : vector<1x128xf32> to vector<2x128xf32>
      %16 = arith.mulf %14, %15 : vector<2x128xf32>
      %c0_13 = arith.constant 0 : index
      %c0_14 = arith.constant 0 : index
      %17 = vector.load %arg5[%c0_13, %c0_14] : memref<1x128xf32, #tpu.memory_space<vmem>>, vector<1x128xf32>
      %18 = vector.broadcast %17 : vector<1x128xf32> to vector<2x128xf32>
      %19 = arith.addf %16, %18 : vector<2x128xf32>
      %cst_15 = arith.constant 0.000000e+00 : f32
      %20 = vector.broadcast %cst_15 : f32 to vector<2x128xf32>
      %21 = arith.maximumf %19, %20 : vector<2x128xf32>
      %c0_16 = arith.constant 0 : index
      %c0_17 = arith.constant 0 : index
      %22 = vector.load %arg11[%c0_16, %c0_17] : memref<2x32xf32, #tpu.memory_space<vmem>>, vector<2x32xf32>
      %c0_18 = arith.constant 0 : index
      %c0_19 = arith.constant 0 : index
      %23 = vector.load %arg6[%c0_18, %c0_19] : memref<128x32xf32, #tpu.memory_space<vmem>>, vector<128x32xf32>
      %cst_20 = arith.constant dense<0.000000e+00> : vector<2x32xf32>
      %24 = tpu.matmul %21, %23, %cst_20 {dimension_numbers = #tpu.dot_dimension_numbers<[1], [0], [0], [1], [0, 0, 1, 1], [], []>} : vector<2x128xf32>, vector<128x32xf32>, vector<2x32xf32> -> vector<2x32xf32>
      %25 = arith.addf %22, %24 : vector<2x32xf32>
      %c0_21 = arith.constant 0 : index
      %c0_22 = arith.constant 0 : index
      %26 = vector.load %arg7[%c0_21, %c0_22] : memref<1x32xf32, #tpu.memory_space<vmem>>, vector<1x32xf32>
      %27 = vector.broadcast %26 : vector<1x32xf32> to vector<2x32xf32>
      %28 = arith.addf %25, %27 : vector<2x32xf32>
      %c0_23 = arith.constant 0 : index
      %c0_24 = arith.constant 0 : index
      %29 = vector.load %arg8[%c0_23, %c0_24] : memref<1x32xf32, #tpu.memory_space<vmem>>, vector<1x32xf32>
      %30 = vector.broadcast %29 : vector<1x32xf32> to vector<2x32xf32>
      %31 = arith.mulf %28, %30 : vector<2x32xf32>
      %cst_25 = arith.constant dense<0.000000e+00> : vector<2xf32>
      %32 = vector.multi_reduction <add>, %31, %cst_25 [1] : vector<2x32xf32> to vector<2xf32>
      %33 = vector.shape_cast %32 : vector<2xf32> to vector<2x1xf32>
      %c0_26 = arith.constant 0 : index
      %c0_27 = arith.constant 0 : index
      %34 = vector.load %arg9[%c0_26, %c0_27] : memref<1x1xf32, #tpu.memory_space<vmem>>, vector<1x1xf32>
      %35 = vector.broadcast %34 : vector<1x1xf32> to vector<2x1xf32>
      %36 = arith.addf %33, %35 : vector<2x1xf32>
      %cst_28 = arith.constant 0.000000e+00 : f32
      %37 = vector.broadcast %cst_28 : f32 to vector<2x1xf32>
      %38 = arith.maximumf %36, %37 : vector<2x1xf32>
      %c0_29 = arith.constant 0 : index
      %c0_30 = arith.constant 0 : index
      %39 = vector.load %arg10[%c0_29, %c0_30] : memref<2x1xf32, #tpu.memory_space<vmem>>, vector<2x1xf32>
      tpu.vector_store %arg10[%c0_29, %c0_30], %38 {strides = array<i32>} : memref<2x1xf32, #tpu.memory_space<vmem>>, vector<2x1xf32>,
    } else {
    }
    return
  }
  func.func @transform_0(%arg0: i32) -> (i32, i32) {
    %c0_i32 = arith.constant 0 : i32
    %c0_i32_0 = arith.constant 0 : i32
    return %c0_i32, %arg0 : i32, i32
  }
  func.func @transform_1(%arg0: i32) -> (i32, i32) {
    %c0_i32 = arith.constant 0 : i32
    %c0_i32_0 = arith.constant 0 : i32
    return %arg0, %c0_i32 : i32, i32
  }
  func.func @transform_2(%arg0: i32) -> (i32, i32) {
    %c0_i32 = arith.constant 0 : i32
    %c0_i32_0 = arith.constant 0 : i32
    %c0_i32_1 = arith.constant 0 : i32
    return %c0_i32, %c0_i32_0 : i32, i32
  }
  func.func @transform_3(%arg0: i32) -> (i32, i32) {
    %c0_i32 = arith.constant 0 : i32
    %c0_i32_0 = arith.constant 0 : i32
    %c0_i32_1 = arith.constant 0 : i32
    return %c0_i32, %c0_i32_0 : i32, i32
  }
  func.func @transform_4(%arg0: i32) -> (i32, i32) {
    %c0_i32 = arith.constant 0 : i32
    %c0_i32_0 = arith.constant 0 : i32
    %c0_i32_1 = arith.constant 0 : i32
    return %c0_i32, %c0_i32_0 : i32, i32
  }
  func.func @transform_5(%arg0: i32) -> (i32, i32) {
    %c0_i32 = arith.constant 0 : i32
    %c0_i32_0 = arith.constant 0 : i32
    %c0_i32_1 = arith.constant 0 : i32
    return %c0_i32, %c0_i32_0 : i32, i32
  }
  func.func @transform_6(%arg0: i32) -> (i32, i32) {
    %c0_i32 = arith.constant 0 : i32
    %c0_i32_0 = arith.constant 0 : i32
    %c0_i32_1 = arith.constant 0 : i32
    return %c0_i32, %c0_i32_0 : i32, i32
  }
  func.func @transform_7(%arg0: i32) -> (i32, i32) {
    %c0_i32 = arith.constant 0 : i32
    %c0_i32_0 = arith.constant 0 : i32
    %c0_i32_1 = arith.constant 0 : i32
    return %c0_i32, %c0_i32_0 : i32, i32
  }
  func.func @transform_8(%arg0: i32) -> (i32, i32) {
    %c0_i32 = arith.constant 0 : i32
    %c0_i32_0 = arith.constant 0 : i32
    %c0_i32_1 = arith.constant 0 : i32
    return %c0_i32, %c0_i32_0 : i32, i32
  }
  func.func @transform_9(%arg0: i32) -> (i32, i32) {
    %c0_i32 = arith.constant 0 : i32
    %c0_i32_0 = arith.constant 0 : i32
    %c0_i32_1 = arith.constant 0 : i32
    return %c0_i32, %c0_i32_0 : i32, i32
  }
}

</mosaic_0001>

<llo_original>
// kernel: linear_logp_forward.2
$region0: #{linear_logp_forward.2}
  #allocation0 [shape = 'u32[]', space=smem, size = 0x4, offset = 0x4, fixed_abs, tag = 'smem constant byte address 0x4 - core index']
  #allocation1 [shape = 'u32[144,128]{1,0:T(1,128)}', space=vmem, size = 0x12000, scoped, tag = 'internal scratch']
  %s0 = inlined_call_operand.vmem [shape: s32[512,1], index: 0, kind: input, shape index: {}]
  %s1 = inlined_call_operand.hbm [shape: bf16[128,128], index: 1, kind: input, shape index: {}]
  %s2 = inlined_call_operand.hbm [shape: f32[1,128], index: 2, kind: input, shape index: {}]
  %s3 = inlined_call_operand.vmem [shape: bf16[512,128], index: 3, kind: output, shape index: {}]
  %s4 = sld [smem:[#allocation0]]
  $region53: #{linear_logp_forward.2} parent=0
    _
  %s6 = ssub.s32 1, %s4
  %s7 = scalar_select 0, %s6, %s4
  $region1: #{linear_logp_forward.2} parent=0
    #allocation2 [shape = 'u8[32768]{0}', space=vmem, size = 0x8000, scoped, tag = 'input window, operand 1, single buffered']
    #allocation3 [shape = 's32[2]{0}', space=sflag, size = 0x8, scoped, tag = 'scoped memory for linear_logp_forward.2']
    #allocation4 [shape = 'u8[512]{0}', space=vmem, size = 0x400, scoped, tag = 'input window, operand 2, single buffered']
    #allocation5 [shape = 's32[1]{0}', space=sflag, size = 0x4, scoped, tag = 'scoped memory for linear_logp_forward.2']
    %8 = vsyncpa [#allocation3], 0
    %9 = vsyncpa [#allocation5], 0
    loop: start=0, step=1, limit=4
    $region2: #{linear_logp_forward.2} parent=1 // loop_pre_header
      _
    $region3: #{linear_logp_forward.2} parent=1 // loop_header
      %s11 = sphi 0, %s15
      %p12 = scmp.ge.s32.totalorder %s11, 4
      %s21 = sphi 0, %s23
      %s24 = sphi 0, %s21
      %s25 = sphi 0, %s24
      %s41 = sphi 0, %s25
      %s45 = sphi 0, %s45
      %s47 = sphi 0, %s45
      %s48 = sphi 0, %s47
      %s62 = sphi 0, %s48
      %s66 = sphi 0, %s66
      %s68 = sphi 0, %s66
      %s69 = sphi 0, %s68
      %s83 = sphi 0, %s69
      %s89 = sphi 0, %s91
      %s92 = sphi 0, %s89
      %s93 = sphi 0, %s92
      %s109 = sphi 0, %s93
    $region4: #{linear_logp_forward.2} parent=1 // loop_header_branch
      %14 = sbr.rel (%p12) target = $region8
    $region5: #{linear_logp_forward.2} parent=1 // loop_body
      %s16 = ssub.s32 %s11, 1
      %s17 = ssub.s32 %s11, 2
      %s18 = sadd.s32 %s11, 1
      %s19 = ssub.s32 %s11, %s18
      %p20 = scmp.eq.s32.totalorder %s19, 0
      %s22 = sadd.s32 %s21, 1
      %s23 = scalar_select %p20, %s21, %s22
      %p26 = pneg %p20
      %p27 = scmp.eq.s32.totalorder %s11, 1
      %p28 = por %p26, %p27
      %p29 = scmp.ne.s32.totalorder %s21, %s24
      %p30 = scmp.eq.s32.totalorder %s11, 0
      %p31 = por %p29, %p30
      %p32 = scmp.ne.s32.totalorder %s21, %s24
      %p33 = scmp.eq.s32.totalorder %s16, 1
      %p34 = por %p32, %p33
      %p35 = scmp.ne.s32.totalorder %s24, %s25
      %p36 = scmp.eq.s32.totalorder %s16, 0
      %p37 = por %p35, %p36
      %p38 = scmp.ne.s32.totalorder %s24, %s25
      %p39 = scmp.eq.s32.totalorder %s17, 1
      %p40 = por %p38, %p39
      %p42 = scmp.ne.s32.totalorder %s25, %s41
      %p43 = scmp.eq.s32.totalorder %s17, 0
      %p44 = por %p42, %p43
      %s46 = sadd.s32 %s45, 1
      %p49 = scmp.eq.s32.totalorder %s11, 1
      %p50 = scmp.ne.s32.totalorder %s45, %s47
      %p51 = scmp.eq.s32.totalorder %s11, 0
      %p52 = por %p50, %p51
      %p53 = scmp.ne.s32.totalorder %s45, %s47
      %p54 = scmp.eq.s32.totalorder %s16, 1
      %p55 = por %p53, %p54
      %p56 = scmp.ne.s32.totalorder %s47, %s48
      %p57 = scmp.eq.s32.totalorder %s16, 0
      %p58 = por %p56, %p57
      %p59 = scmp.ne.s32.totalorder %s47, %s48
      %p60 = scmp.eq.s32.totalorder %s17, 1
      %p61 = por %p59, %p60
      %p63 = scmp.ne.s32.totalorder %s48, %s62
      %p64 = scmp.eq.s32.totalorder %s17, 0
      %p65 = por %p63, %p64
      %s67 = sadd.s32 %s66, 1
      %p70 = scmp.eq.s32.totalorder %s11, 1
      %p71 = scmp.ne.s32.totalorder %s66, %s68
      %p72 = scmp.eq.s32.totalorder %s11, 0
      %p73 = por %p71, %p72
      %p74 = scmp.ne.s32.totalorder %s66, %s68
      %p75 = scmp.eq.s32.totalorder %s16, 1
      %p76 = por %p74, %p75
      %p77 = scmp.ne.s32.totalorder %s68, %s69
      %p78 = scmp.eq.s32.totalorder %s16, 0
      %p79 = por %p77, %p78
      %p80 = scmp.ne.s32.totalorder %s68, %s69
      %p81 = scmp.eq.s32.totalorder %s17, 1
      %p82 = por %p80, %p81
      %p84 = scmp.ne.s32.totalorder %s69, %s83
      %p85 = scmp.eq.s32.totalorder %s17, 0
      %p86 = por %p84, %p85
      %s87 = ssub.s32 %s11, %s18
      %p88 = scmp.eq.s32.totalorder %s87, 0
      %s90 = sadd.s32 %s89, 1
      %s91 = scalar_select %p88, %s89, %s90
      %p94 = pneg %p88
      %p95 = scmp.eq.s32.totalorder %s11, 1
      %p96 = por %p94, %p95
      %p97 = scmp.ne.s32.totalorder %s89, %s92
      %p98 = scmp.eq.s32.totalorder %s11, 0
      %p99 = por %p97, %p98
      %p100 = scmp.ne.s32.totalorder %s89, %s92
      %p101 = scmp.eq.s32.totalorder %s16, 1
      %p102 = por %p100, %p101
      %p103 = scmp.ne.s32.totalorder %s92, %s93
      %p104 = scmp.eq.s32.totalorder %s16, 0
      %p105 = por %p103, %p104
      %p106 = scmp.ne.s32.totalorder %s92, %s93
      %p107 = scmp.eq.s32.totalorder %s17, 1
      %p108 = por %p106, %p107
      %p110 = scmp.ne.s32.totalorder %s93, %s109
      %p111 = scmp.eq.s32.totalorder %s17, 0
      %p112 = por %p110, %p111
      %p113 = scmp.le.s32.totalorder 1, %s11
      %p114 = scmp.lt.s32.totalorder %s11, 3
      %p115 = pnand %p113, %p114
      %p116 = pneg %p115
      // Predicated region
      $region9: #{linear_logp_forward.2} parent=5 // pred_check
        _
      $region10: #{linear_logp_forward.2} parent=5 // pred_check_branch
        %118 = sbr.rel (%p115) target = $region12
      $region11: #{linear_logp_forward.2} parent=5 // pred_region
        %s119 = ssub.s32 %s11, 1
        // Predicated region
        $region13: #{linear_logp_forward.2} parent=11 // pred_check
          %p120 = pneg %p58
        $region14: #{linear_logp_forward.2} parent=11 // pred_check_branch
          %122 = sbr.rel (%p120) target = $region16
        $region15: #{linear_logp_forward.2} parent=11 // pred_region
          %s124 = ssub.s32 1024, 1024
          %125 = vsyncadd [#allocation3], %s124
          %s126 = sshll.u32 [#allocation2], 4
          %s127 = int_to_ptr.vmem [resolvable:$true] %s126
          %132 = dma.hbm_to_vmem [thread:$0]  %s1, 1024, %s127, [#allocation3], 64, 64, 4
        $region16: #{linear_logp_forward.2} parent=11 // pred_fallthru
          _
        // Predicated region
        $region17: #{linear_logp_forward.2} parent=11 // pred_check
          %p133 = pneg %p79
        $region18: #{linear_logp_forward.2} parent=11 // pred_check_branch
          %135 = sbr.rel (%p133) target = $region20
        $region19: #{linear_logp_forward.2} parent=11 // pred_region
          %s137 = ssub.s32 16, 16
          %138 = vsyncadd [#allocation5], %s137
          %s140 = sshll.u32 [#allocation4], 4
          %s141 = int_to_ptr.vmem [resolvable:$true] %s140
          %143 = dma.hbm_to_vmem [thread:$0]  %s2, 16, %s141, [#allocation5]
        $region20: #{linear_logp_forward.2} parent=11 // pred_fallthru
          _
      $region12: #{linear_logp_forward.2} parent=5 // pred_fallthru
        _
      %p144 = scmp.lt.s32.totalorder %s11, 2
      // Predicated region
      $region21: #{linear_logp_forward.2} parent=5 // pred_check
        %p145 = pneg %p144
      $region22: #{linear_logp_forward.2} parent=5 // pred_check_branch
        %147 = sbr.rel (%p145) target = $region24
      $region23: #{linear_logp_forward.2} parent=5 // pred_region
        // Predicated region
        $region25: #{linear_logp_forward.2} parent=23 // pred_check
          %p148 = pneg %p31
        $region26: #{linear_logp_forward.2} parent=23 // pred_check_branch
          %150 = sbr.rel (%p148) target = $region28
        $region27: #{linear_logp_forward.2} parent=23 // pred_region
          %s151 = smul.u32 32, %s11
          %p152 = scmp.lt.s32.totalorder %s151, 63
          %s153 = scalar_select %p152, %s151, 63
          %s154 = smul.addr %s153, 8
          %s155 = scalar_lea.vmem %s0, %s154
          %s156 = smul.u32 32, %s11
        $region28: #{linear_logp_forward.2} parent=23 // pred_fallthru
          _
      $region24: #{linear_logp_forward.2} parent=5 // pred_fallthru
        _
      %p157 = scmp.le.s32.totalorder 1, %s11
      %p158 = scmp.lt.s32.totalorder %s11, 3
      %p159 = pnand %p157, %p158
      %p160 = pneg %p159
      // Predicated region
      $region29: #{linear_logp_forward.2} parent=5 // pred_check
        _
      $region30: #{linear_logp_forward.2} parent=5 // pred_check_branch
        %162 = sbr.rel (%p159) target = $region32
      $region31: #{linear_logp_forward.2} parent=5 // pred_region
        %s163 = ssub.s32 %s11, 1
        // Predicated region
        $region33: #{linear_logp_forward.2} parent=31 // pred_check
          %p164 = pneg %p58
        $region34: #{linear_logp_forward.2} parent=31 // pred_check_branch
          %166 = sbr.rel (%p164) target = $region36
        $region35: #{linear_logp_forward.2} parent=31 // pred_region
          %167 = dma.done [#allocation3], 1024
        $region36: #{linear_logp_forward.2} parent=31 // pred_fallthru
          _
        // Predicated region
        $region37: #{linear_logp_forward.2} parent=31 // pred_check
          %p168 = pneg %p79
        $region38: #{linear_logp_forward.2} parent=31 // pred_check_branch
          %170 = sbr.rel (%p168) target = $region40
        $region39: #{linear_logp_forward.2} parent=31 // pred_region
          %171 = dma.done [#allocation5], 16
        $region40: #{linear_logp_forward.2} parent=31 // pred_fallthru
          _
        %s172 = smul.u32 32, %s16
        %p173 = scmp.lt.s32.totalorder %s172, 63
        %s174 = scalar_select %p173, %s172, 63
        %s175 = smul.addr %s174, 8
        %s176 = scalar_lea.vmem %s0, %s175
        %p177 = pneg %p37
        %p178 = pneg %p34
        %p179 = pneg %p58
        %p180 = pneg %p55
        %p181 = pneg %p79
        %p182 = pneg %p76
        %p183 = pneg %p105
        %p184 = pneg %p102
        %s185 = smul.u32 32, %s16
        %p186 = scmp.lt.s32.totalorder %s185, 63
        %s187 = scalar_select %p186, %s185, 63
        %s188 = smul.addr %s187, 4
        %s189 = scalar_lea.vmem %s3, %s188
        %s190 = smul.u32 32, %s16
        %p191 = scmp.lt.s32.totalorder %s190, 63
        %s192 = scalar_select %p191, %s190, 63
        %s193 = smul.addr %s192, 8
        %s194 = scalar_lea.vmem %s0, %s193
        %s195 = smul.u32 32, %s16
        %s196 = smul.u32 32, %s16
        %p197 = scmp.lt.s32.totalorder %s196, 63
        %s198 = scalar_select %p197, %s196, 63
        %s199 = smul.addr %s198, 4
        %s200 = scalar_lea.vmem %s3, %s199
        %s201 = smul.u32 32, %s16
        %v203 = vld [vmem:[%s194] sm:$0xff]
        %v204 = vld [vmem:[%s194 + $0x8] sm:$0xff]
        %v205 = vld [vmem:[%s194 + $0x10] sm:$0xff]
        %v206 = vld [vmem:[%s194 + $0x18] sm:$0xff]
        %v207 = vld [vmem:[%s194 + $0x20] sm:$0xff]
        %v208 = vld [vmem:[%s194 + $0x28] sm:$0xff]
        %v209 = vld [vmem:[%s194 + $0x30] sm:$0xff]
        %v210 = vld [vmem:[%s194 + $0x38] sm:$0xff]
        %v211 = vld [vmem:[%s194 + $0x40] sm:$0xff]
        %v212 = vld [vmem:[%s194 + $0x48] sm:$0xff]
        %v213 = vld [vmem:[%s194 + $0x50] sm:$0xff]
        %v214 = vld [vmem:[%s194 + $0x58] sm:$0xff]
        %v215 = vld [vmem:[%s194 + $0x60] sm:$0xff]
        %v216 = vld [vmem:[%s194 + $0x68] sm:$0xff]
        %v217 = vld [vmem:[%s194 + $0x70] sm:$0xff]
        %v218 = vld [vmem:[%s194 + $0x78] sm:$0xff]
        %v219 = vld [vmem:[%s194 + $0x80] sm:$0xff]
        %v220 = vld [vmem:[%s194 + $0x88] sm:$0xff]
        %v221 = vld [vmem:[%s194 + $0x90] sm:$0xff]
        %v222 = vld [vmem:[%s194 + $0x98] sm:$0xff]
        %v223 = vld [vmem:[%s194 + $0xa0] sm:$0xff]
        %v224 = vld [vmem:[%s194 + $0xa8] sm:$0xff]
        %v225 = vld [vmem:[%s194 + $0xb0] sm:$0xff]
        %v226 = vld [vmem:[%s194 + $0xb8] sm:$0xff]
        %v227 = vld [vmem:[%s194 + $0xc0] sm:$0xff]
        %v228 = vld [vmem:[%s194 + $0xc8] sm:$0xff]
        %v229 = vld [vmem:[%s194 + $0xd0] sm:$0xff]
        %v230 = vld [vmem:[%s194 + $0xd8] sm:$0xff]
        %v231 = vld [vmem:[%s194 + $0xe0] sm:$0xff]
        %v232 = vld [vmem:[%s194 + $0xe8] sm:$0xff]
        %v233 = vld [vmem:[%s194 + $0xf0] sm:$0xff]
        %v234 = vld [vmem:[%s194 + $0xf8] sm:$0xff]
        %v235 = vlaneseq
        %v236 = vand.u32 %v235, 127
        %237 = vset.pattern.permute.xlu0 0
        %238 = vperm.xlu0 %237, %v203
        %v239 = vpop.permute.xlu0 %238
        %240 = vset.pattern.permute.xlu0 0
        %241 = vperm.xlu0 %240, %v204
        %v242 = vpop.permute.xlu0 %241
        %243 = vset.pattern.permute.xlu0 0
        %244 = vperm.xlu0 %243, %v205
        %v245 = vpop.permute.xlu0 %244
        %246 = vset.pattern.permute.xlu0 0
        %247 = vperm.xlu0 %246, %v206
        %v248 = vpop.permute.xlu0 %247
        %249 = vset.pattern.permute.xlu0 0
        %250 = vperm.xlu0 %249, %v207
        %v251 = vpop.permute.xlu0 %250
        %252 = vset.pattern.permute.xlu0 0
        %253 = vperm.xlu0 %252, %v208
        %v254 = vpop.permute.xlu0 %253
        %255 = vset.pattern.permute.xlu0 0
        %256 = vperm.xlu0 %255, %v209
        %v257 = vpop.permute.xlu0 %256
        %258 = vset.pattern.permute.xlu0 0
        %259 = vperm.xlu0 %258, %v210
        %v260 = vpop.permute.xlu0 %259
        %261 = vset.pattern.permute.xlu0 0
        %262 = vperm.xlu0 %261, %v211
        %v263 = vpop.permute.xlu0 %262
        %264 = vset.pattern.permute.xlu0 0
        %265 = vperm.xlu0 %264, %v212
        %v266 = vpop.permute.xlu0 %265
        %267 = vset.pattern.permute.xlu0 0
        %268 = vperm.xlu0 %267, %v213
        %v269 = vpop.permute.xlu0 %268
        %270 = vset.pattern.permute.xlu0 0
        %271 = vperm.xlu0 %270, %v214
        %v272 = vpop.permute.xlu0 %271
        %273 = vset.pattern.permute.xlu0 0
        %274 = vperm.xlu0 %273, %v215
        %v275 = vpop.permute.xlu0 %274
        %276 = vset.pattern.permute.xlu0 0
        %277 = vperm.xlu0 %276, %v216
        %v278 = vpop.permute.xlu0 %277
        %279 = vset.pattern.permute.xlu0 0
        %280 = vperm.xlu0 %279, %v217
        %v281 = vpop.permute.xlu0 %280
        %282 = vset.pattern.permute.xlu0 0
        %283 = vperm.xlu0 %282, %v218
        %v284 = vpop.permute.xlu0 %283
        %285 = vset.pattern.permute.xlu0 0
        %286 = vperm.xlu0 %285, %v219
        %v287 = vpop.permute.xlu0 %286
        %288 = vset.pattern.permute.xlu0 0
        %289 = vperm.xlu0 %288, %v220
        %v290 = vpop.permute.xlu0 %289
        %291 = vset.pattern.permute.xlu0 0
        %292 = vperm.xlu0 %291, %v221
        %v293 = vpop.permute.xlu0 %292
        %294 = vset.pattern.permute.xlu0 0
        %295 = vperm.xlu0 %294, %v222
        %v296 = vpop.permute.xlu0 %295
        %297 = vset.pattern.permute.xlu0 0
        %298 = vperm.xlu0 %297, %v223
        %v299 = vpop.permute.xlu0 %298
        %300 = vset.pattern.permute.xlu0 0
        %301 = vperm.xlu0 %300, %v224
        %v302 = vpop.permute.xlu0 %301
        %303 = vset.pattern.permute.xlu0 0
        %304 = vperm.xlu0 %303, %v225
        %v305 = vpop.permute.xlu0 %304
        %306 = vset.pattern.permute.xlu0 0
        %307 = vperm.xlu0 %306, %v226
        %v308 = vpop.permute.xlu0 %307
        %309 = vset.pattern.permute.xlu0 0
        %310 = vperm.xlu0 %309, %v227
        %v311 = vpop.permute.xlu0 %310
        %312 = vset.pattern.permute.xlu0 0
        %313 = vperm.xlu0 %312, %v228
        %v314 = vpop.permute.xlu0 %313
        %315 = vset.pattern.permute.xlu0 0
        %316 = vperm.xlu0 %315, %v229
        %v317 = vpop.permute.xlu0 %316
        %318 = vset.pattern.permute.xlu0 0
        %319 = vperm.xlu0 %318, %v230
        %v320 = vpop.permute.xlu0 %319
        %321 = vset.pattern.permute.xlu0 0
        %322 = vperm.xlu0 %321, %v231
        %v323 = vpop.permute.xlu0 %322
        %324 = vset.pattern.permute.xlu0 0
        %325 = vperm.xlu0 %324, %v232
        %v326 = vpop.permute.xlu0 %325
        %327 = vset.pattern.permute.xlu0 0
        %328 = vperm.xlu0 %327, %v233
        %v329 = vpop.permute.xlu0 %328
        %330 = vset.pattern.permute.xlu0 0
        %331 = vperm.xlu0 %330, %v234
        %v332 = vpop.permute.xlu0 %331
        %vm333 = vcmp.eq.s32.totalorder %v239, %v236
        %vm334 = vcmp.eq.s32.totalorder %v242, %v236
        %vm335 = vcmp.eq.s32.totalorder %v245, %v236
        %vm336 = vcmp.eq.s32.totalorder %v248, %v236
        %vm337 = vcmp.eq.s32.totalorder %v251, %v236
        %vm338 = vcmp.eq.s32.totalorder %v254, %v236
        %vm339 = vcmp.eq.s32.totalorder %v257, %v236
        %vm340 = vcmp.eq.s32.totalorder %v260, %v236
        %vm341 = vcmp.eq.s32.totalorder %v263, %v236
        %vm342 = vcmp.eq.s32.totalorder %v266, %v236
        %vm343 = vcmp.eq.s32.totalorder %v269, %v236
        %vm344 = vcmp.eq.s32.totalorder %v272, %v236
        %vm345 = vcmp.eq.s32.totalorder %v275, %v236
        %vm346 = vcmp.eq.s32.totalorder %v278, %v236
        %vm347 = vcmp.eq.s32.totalorder %v281, %v236
        %vm348 = vcmp.eq.s32.totalorder %v284, %v236
        %vm349 = vcmp.eq.s32.totalorder %v287, %v236
        %vm350 = vcmp.eq.s32.totalorder %v290, %v236
        %vm351 = vcmp.eq.s32.totalorder %v293, %v236
        %vm352 = vcmp.eq.s32.totalorder %v296, %v236
        %vm353 = vcmp.eq.s32.totalorder %v299, %v236
        %vm354 = vcmp.eq.s32.totalorder %v302, %v236
        %vm355 = vcmp.eq.s32.totalorder %v305, %v236
        %vm356 = vcmp.eq.s32.totalorder %v308, %v236
        %vm357 = vcmp.eq.s32.totalorder %v311, %v236
        %vm358 = vcmp.eq.s32.totalorder %v314, %v236
        %vm359 = vcmp.eq.s32.totalorder %v317, %v236
        %vm360 = vcmp.eq.s32.totalorder %v320, %v236
        %vm361 = vcmp.eq.s32.totalorder %v323, %v236
        %vm362 = vcmp.eq.s32.totalorder %v326, %v236
        %vm363 = vcmp.eq.s32.totalorder %v329, %v236
        %vm364 = vcmp.eq.s32.totalorder %v332, %v236
        %v365 = vsel %vm333, 1, 0
        %v366 = vsel %vm334, 1, 0
        %v367 = vsel %vm335, 1, 0
        %v368 = vsel %vm336, 1, 0
        %v369 = vsel %vm337, 1, 0
        %v370 = vsel %vm338, 1, 0
        %v371 = vsel %vm339, 1, 0
        %v372 = vsel %vm340, 1, 0
        %v373 = vsel %vm341, 1, 0
        %v374 = vsel %vm342, 1, 0
        %v375 = vsel %vm343, 1, 0
        %v376 = vsel %vm344, 1, 0
        %v377 = vsel %vm345, 1, 0
        %v378 = vsel %vm346, 1, 0
        %v379 = vsel %vm347, 1, 0
        %v380 = vsel %vm348, 1, 0
        %v381 = vsel %vm349, 1, 0
        %v382 = vsel %vm350, 1, 0
        %v383 = vsel %vm351, 1, 0
        %v384 = vsel %vm352, 1, 0
        %v385 = vsel %vm353, 1, 0
        %v386 = vsel %vm354, 1, 0
        %v387 = vsel %vm355, 1, 0
        %v388 = vsel %vm356, 1, 0
        %v389 = vsel %vm357, 1, 0
        %v390 = vsel %vm358, 1, 0
        %v391 = vsel %vm359, 1, 0
        %v392 = vsel %vm360, 1, 0
        %v393 = vsel %vm361, 1, 0
        %v394 = vsel %vm362, 1, 0
        %v395 = vsel %vm363, 1, 0
        %v396 = vsel %vm364, 1, 0
        %v397 = vcvt.s32.f32 %v365
        %v398 = vcvt.s32.f32 %v366
        %v399 = vcvt.s32.f32 %v367
        %v400 = vcvt.s32.f32 %v368
        %v401 = vcvt.s32.f32 %v369
        %v402 = vcvt.s32.f32 %v370
        %v403 = vcvt.s32.f32 %v371
        %v404 = vcvt.s32.f32 %v372
        %v405 = vcvt.s32.f32 %v373
        %v406 = vcvt.s32.f32 %v374
        %v407 = vcvt.s32.f32 %v375
        %v408 = vcvt.s32.f32 %v376
        %v409 = vcvt.s32.f32 %v377
        %v410 = vcvt.s32.f32 %v378
        %v411 = vcvt.s32.f32 %v379
        %v412 = vcvt.s32.f32 %v380
        %v413 = vcvt.s32.f32 %v381
        %v414 = vcvt.s32.f32 %v382
        %v415 = vcvt.s32.f32 %v383
        %v416 = vcvt.s32.f32 %v384
        %v417 = vcvt.s32.f32 %v385
        %v418 = vcvt.s32.f32 %v386
        %v419 = vcvt.s32.f32 %v387
        %v420 = vcvt.s32.f32 %v388
        %v421 = vcvt.s32.f32 %v389
        %v422 = vcvt.s32.f32 %v390
        %v423 = vcvt.s32.f32 %v391
        %v424 = vcvt.s32.f32 %v392
        %v425 = vcvt.s32.f32 %v393
        %v426 = vcvt.s32.f32 %v394
        %v427 = vcvt.s32.f32 %v395
        %v428 = vcvt.s32.f32 %v396
        %v429 = vpack.c.bf16 %v398, %v397
        %v430 = vpack.c.bf16 %v400, %v399
        %v431 = vpack.c.bf16 %v402, %v401
        %v432 = vpack.c.bf16 %v404, %v403
        %v433 = vpack.c.bf16 %v406, %v405
        %v434 = vpack.c.bf16 %v408, %v407
        %v435 = vpack.c.bf16 %v410, %v409
        %v436 = vpack.c.bf16 %v412, %v411
        %v437 = vpack.c.bf16 %v414, %v413
        %v438 = vpack.c.bf16 %v416, %v415
        %v439 = vpack.c.bf16 %v418, %v417
        %v440 = vpack.c.bf16 %v420, %v419
        %v441 = vpack.c.bf16 %v422, %v421
        %v442 = vpack.c.bf16 %v424, %v423
        %v443 = vpack.c.bf16 %v426, %v425
        %v444 = vpack.c.bf16 %v428, %v427
        %v445 = vld [vmem:[#allocation2] sm:$0xf]
        %v446 = vld [vmem:[#allocation2 + $0x4] sm:$0xf]
        %v447 = vld [vmem:[#allocation2 + $0x8] sm:$0xf]
        %v448 = vld [vmem:[#allocation2 + $0xc] sm:$0xf]
        %v449 = vld [vmem:[#allocation2 + $0x10] sm:$0xf]
        %v450 = vld [vmem:[#allocation2 + $0x14] sm:$0xf]
        %v451 = vld [vmem:[#allocation2 + $0x18] sm:$0xf]
        %v452 = vld [vmem:[#allocation2 + $0x1c] sm:$0xf]
        %v453 = vld [vmem:[#allocation2 + $0x20] sm:$0xf]
        %v454 = vld [vmem:[#allocation2 + $0x24] sm:$0xf]
        %v455 = vld [vmem:[#allocation2 + $0x28] sm:$0xf]
        %v456 = vld [vmem:[#allocation2 + $0x2c] sm:$0xf]
        %v457 = vld [vmem:[#allocation2 + $0x30] sm:$0xf]
        %v458 = vld [vmem:[#allocation2 + $0x34] sm:$0xf]
        %v459 = vld [vmem:[#allocation2 + $0x38] sm:$0xf]
        %v460 = vld [vmem:[#allocation2 + $0x3c] sm:$0xf]
        %v461 = vld [vmem:[#allocation4] sm:$0x1]
        %v463 = vlaneseq
        %v464 = vshrl.u32 %v463, 7
        %v465 = vsub.s32 0, %v464
        %v466 = vrot.slane %v461, %v465
        %v484 = vunpack.c.l.b16 %v445
        %v485 = vunpack.c.l.b16 %v446
        %v486 = vunpack.c.l.b16 %v447
        %v487 = vunpack.c.l.b16 %v448
        %v488 = vunpack.c.l.b16 %v449
        %v489 = vunpack.c.l.b16 %v450
        %v490 = vunpack.c.l.b16 %v451
        %v491 = vunpack.c.l.b16 %v452
        %v492 = vunpack.c.l.b16 %v453
        %v493 = vunpack.c.l.b16 %v454
        %v494 = vunpack.c.l.b16 %v455
        %v495 = vunpack.c.l.b16 %v456
        %v496 = vunpack.c.l.b16 %v457
        %v497 = vunpack.c.l.b16 %v458
        %v498 = vunpack.c.l.b16 %v459
        %v499 = vunpack.c.l.b16 %v460
        %v500 = vpack.c.b16 %v485, %v484
        %v501 = vpack.c.b16 %v487, %v486
        %v502 = vpack.c.b16 %v489, %v488
        %v503 = vpack.c.b16 %v491, %v490
        %v504 = vpack.c.b16 %v493, %v492
        %v505 = vpack.c.b16 %v495, %v494
        %v506 = vpack.c.b16 %v497, %v496
        %v507 = vpack.c.b16 %v499, %v498
        %516 = vmatprep.subr.bf16.mxu0 0
        %517 = vmatpush1.bf16.msra.mxu0 %v500
        %518 = vmatprep.subr.bf16.mxu0 0
        %519 = vmatpush1.bf16.msra.mxu0 %v501
        %520 = vmatprep.subr.bf16.mxu0 0
        %521 = vmatpush1.bf16.msra.mxu0 %v502
        %522 = vmatprep.subr.bf16.mxu0 0
        %523 = vmatpush1.bf16.msra.mxu0 %v503
        %524 = vmatprep.subr.bf16.mxu0 0
        %525 = vmatpush1.bf16.msra.mxu0 %v504
        %526 = vmatprep.subr.bf16.mxu0 0
        %527 = vmatpush1.bf16.msra.mxu0 %v505
        %528 = vmatprep.subr.bf16.mxu0 0
        %529 = vmatpush1.bf16.msra.mxu0 %v506
        %530 = vmatprep.subr.bf16.mxu0 0
        %531 = vmatpush1.bf16.msra.mxu0 %v507
        %532 = vmatprep.subr.bf16.mxu0 0
        %533 = vmatpush1.bf16.msra.mxu0 0
        %534 = vmatprep.subr.bf16.mxu0 0
        %535 = vmatpush1.bf16.msra.mxu0 0
        %536 = vmatprep.subr.bf16.mxu0 0
        %537 = vmatpush1.bf16.msra.mxu0 0
        %538 = vmatprep.subr.bf16.mxu0 0
        %539 = vmatpush1.bf16.msra.mxu0 0
        %540 = vmatprep.subr.bf16.mxu0 0
        %541 = vmatpush1.bf16.msra.mxu0 0
        %542 = vmatprep.subr.bf16.mxu0 0
        %543 = vmatpush1.bf16.msra.mxu0 0
        %544 = vmatprep.subr.bf16.mxu0 0
        %545 = vmatpush1.bf16.msra.mxu0 0
        %546 = vmatprep.subr.bf16.mxu0 0
        %547 = vmatpush1.bf16.msra.mxu0 0
        %548 = vmatprep.mubr.bf16.mxu0 0
        %549 = vmatmul.mubr.bf16.gmra.mrb[0].mxu0 %v429
        %v550 = vpop.f32.mrb[0].mxu0
        %v551 = vadd.f32 %v466, %v550
        %v552 = vpop.f32.mrb[0].mxu0
        %v553 = vpop.f32.mrb[0].mxu0
        %v554 = vadd.f32 %v466, %v553
        %v555 = vpop.f32.mrb[0].mxu0
        %556 = vmatprep.mubr.bf16.mxu0 0
        %557 = vmatmul.mubr.bf16.gmra.mrb[0].mxu0 %v430
        %v558 = vpop.f32.mrb[0].mxu0
        %v559 = vadd.f32 %v466, %v558
        %v560 = vpop.f32.mrb[0].mxu0
        %v561 = vpop.f32.mrb[0].mxu0
        %v562 = vadd.f32 %v466, %v561
        %v563 = vpop.f32.mrb[0].mxu0
        %564 = vmatprep.mubr.bf16.mxu0 0
        %565 = vmatmul.mubr.bf16.gmra.mrb[0].mxu0 %v431
        %v566 = vpop.f32.mrb[0].mxu0
        %v567 = vadd.f32 %v466, %v566
        %v568 = vpop.f32.mrb[0].mxu0
        %v569 = vpop.f32.mrb[0].mxu0
        %v570 = vadd.f32 %v466, %v569
        %v571 = vpop.f32.mrb[0].mxu0
        %572 = vmatprep.mubr.bf16.mxu0 0
        %573 = vmatmul.mubr.bf16.gmra.mrb[0].mxu0 %v432
        %v574 = vpop.f32.mrb[0].mxu0
        %v575 = vadd.f32 %v466, %v574
        %v576 = vpop.f32.mrb[0].mxu0
        %v577 = vpop.f32.mrb[0].mxu0
        %v578 = vadd.f32 %v466, %v577
        %v579 = vpop.f32.mrb[0].mxu0
        %580 = vmatprep.mubr.bf16.mxu0 0
        %581 = vmatmul.mubr.bf16.gmra.mrb[0].mxu0 %v433
        %v582 = vpop.f32.mrb[0].mxu0
        %v583 = vadd.f32 %v466, %v582
        %v584 = vpop.f32.mrb[0].mxu0
        %v585 = vpop.f32.mrb[0].mxu0
        %v586 = vadd.f32 %v466, %v585
        %v587 = vpop.f32.mrb[0].mxu0
        %588 = vmatprep.mubr.bf16.mxu0 0
        %589 = vmatmul.mubr.bf16.gmra.mrb[0].mxu0 %v434
        %v590 = vpop.f32.mrb[0].mxu0
        %v591 = vadd.f32 %v466, %v590
        %v592 = vpop.f32.mrb[0].mxu0
        %v593 = vpop.f32.mrb[0].mxu0
        %v594 = vadd.f32 %v466, %v593
        %v595 = vpop.f32.mrb[0].mxu0
        %596 = vmatprep.mubr.bf16.mxu0 0
        %597 = vmatmul.mubr.bf16.gmra.mrb[0].mxu0 %v435
        %v598 = vpop.f32.mrb[0].mxu0
        %v599 = vadd.f32 %v466, %v598
        %v600 = vpop.f32.mrb[0].mxu0
        %v601 = vpop.f32.mrb[0].mxu0
        %v602 = vadd.f32 %v466, %v601
        %v603 = vpop.f32.mrb[0].mxu0
        %604 = vmatprep.mubr.bf16.mxu0 0
        %605 = vmatmul.mubr.bf16.gmra.mrb[0].mxu0 %v436
        %v606 = vpop.f32.mrb[0].mxu0
        %v607 = vadd.f32 %v466, %v606
        %v608 = vpop.f32.mrb[0].mxu0
        %v609 = vpop.f32.mrb[0].mxu0
        %v610 = vadd.f32 %v466, %v609
        %v611 = vpop.f32.mrb[0].mxu0
        %612 = vmatprep.mubr.bf16.mxu0 0
        %613 = vmatmul.mubr.bf16.gmra.mrb[0].mxu0 %v437
        %v614 = vpop.f32.mrb[0].mxu0
        %v615 = vadd.f32 %v466, %v614
        %v616 = vpop.f32.mrb[0].mxu0
        %v617 = vpop.f32.mrb[0].mxu0
        %v618 = vadd.f32 %v466, %v617
        %v619 = vpop.f32.mrb[0].mxu0
        %620 = vmatprep.mubr.bf16.mxu0 0
        %621 = vmatmul.mubr.bf16.gmra.mrb[0].mxu0 %v438
        %v622 = vpop.f32.mrb[0].mxu0
        %v623 = vadd.f32 %v466, %v622
        %v624 = vpop.f32.mrb[0].mxu0
        %v625 = vpop.f32.mrb[0].mxu0
        %v626 = vadd.f32 %v466, %v625
        %v627 = vpop.f32.mrb[0].mxu0
        %628 = vmatprep.mubr.bf16.mxu0 0
        %629 = vmatmul.mubr.bf16.gmra.mrb[0].mxu0 %v439
        %v630 = vpop.f32.mrb[0].mxu0
        %v631 = vadd.f32 %v466, %v630
        %v632 = vpop.f32.mrb[0].mxu0
        %v633 = vpop.f32.mrb[0].mxu0
        %v634 = vadd.f32 %v466, %v633
        %v635 = vpop.f32.mrb[0].mxu0
        %636 = vmatprep.mubr.bf16.mxu0 0
        %637 = vmatmul.mubr.bf16.gmra.mrb[0].mxu0 %v440
        %v638 = vpop.f32.mrb[0].mxu0
        %v639 = vadd.f32 %v466, %v638
        %v640 = vpop.f32.mrb[0].mxu0
        %v641 = vpop.f32.mrb[0].mxu0
        %v642 = vadd.f32 %v466, %v641
        %v643 = vpop.f32.mrb[0].mxu0
        %644 = vmatprep.mubr.bf16.mxu0 0
        %645 = vmatmul.mubr.bf16.gmra.mrb[0].mxu0 %v441
        %v646 = vpop.f32.mrb[0].mxu0
        %v647 = vadd.f32 %v466, %v646
        %v648 = vpop.f32.mrb[0].mxu0
        %v649 = vpop.f32.mrb[0].mxu0
        %v650 = vadd.f32 %v466, %v649
        %v651 = vpop.f32.mrb[0].mxu0
        %652 = vmatprep.mubr.bf16.mxu0 0
        %653 = vmatmul.mubr.bf16.gmra.mrb[0].mxu0 %v442
        %v654 = vpop.f32.mrb[0].mxu0
        %v655 = vadd.f32 %v466, %v654
        %v656 = vpop.f32.mrb[0].mxu0
        %v657 = vpop.f32.mrb[0].mxu0
        %v658 = vadd.f32 %v466, %v657
        %v659 = vpop.f32.mrb[0].mxu0
        %660 = vmatprep.mubr.bf16.mxu0 0
        %661 = vmatmul.mubr.bf16.gmra.mrb[0].mxu0 %v443
        %v662 = vpop.f32.mrb[0].mxu0
        %v663 = vadd.f32 %v466, %v662
        %v664 = vpop.f32.mrb[0].mxu0
        %v665 = vpop.f32.mrb[0].mxu0
        %v666 = vadd.f32 %v466, %v665
        %v667 = vpop.f32.mrb[0].mxu0
        %668 = vmatprep.mubr.bf16.mxu0 0
        %669 = vmatmul.mubr.bf16.gmra.mrb[0].mxu0 %v444
        %v670 = vpop.f32.mrb[0].mxu0
        %v671 = vadd.f32 %v466, %v670
        %v672 = vpop.f32.mrb[0].mxu0
        %v673 = vpop.f32.mrb[0].mxu0
        %v674 = vadd.f32 %v466, %v673
        %v675 = vpop.f32.mrb[0].mxu0
        %676 = vdwg.mxu0
        %v677 = vmax.f32 %v551, 0.0
        %v678 = vmax.f32 %v554, 0.0
        %v679 = vmax.f32 %v559, 0.0
        %v680 = vmax.f32 %v562, 0.0
        %v681 = vmax.f32 %v567, 0.0
        %v682 = vmax.f32 %v570, 0.0
        %v683 = vmax.f32 %v575, 0.0
        %v684 = vmax.f32 %v578, 0.0
        %v685 = vmax.f32 %v583, 0.0
        %v686 = vmax.f32 %v586, 0.0
        %v687 = vmax.f32 %v591, 0.0
        %v688 = vmax.f32 %v594, 0.0
        %v689 = vmax.f32 %v599, 0.0
        %v690 = vmax.f32 %v602, 0.0
        %v691 = vmax.f32 %v607, 0.0
        %v692 = vmax.f32 %v610, 0.0
        %v693 = vmax.f32 %v615, 0.0
        %v694 = vmax.f32 %v618, 0.0
        %v695 = vmax.f32 %v623, 0.0
        %v696 = vmax.f32 %v626, 0.0
        %v697 = vmax.f32 %v631, 0.0
        %v698 = vmax.f32 %v634, 0.0
        %v699 = vmax.f32 %v639, 0.0
        %v700 = vmax.f32 %v642, 0.0
        %v701 = vmax.f32 %v647, 0.0
        %v702 = vmax.f32 %v650, 0.0
        %v703 = vmax.f32 %v655, 0.0
        %v704 = vmax.f32 %v658, 0.0
        %v705 = vmax.f32 %v663, 0.0
        %v706 = vmax.f32 %v666, 0.0
        %v707 = vmax.f32 %v671, 0.0
        %v708 = vmax.f32 %v674, 0.0
        %v709 = vpack.c.bf16 %v678, %v677
        %v710 = vpack.c.bf16 %v680, %v679
        %v711 = vpack.c.bf16 %v682, %v681
        %v712 = vpack.c.bf16 %v684, %v683
        %v713 = vpack.c.bf16 %v686, %v685
        %v714 = vpack.c.bf16 %v688, %v687
        %v715 = vpack.c.bf16 %v690, %v689
        %v716 = vpack.c.bf16 %v692, %v691
        %v717 = vpack.c.bf16 %v694, %v693
        %v718 = vpack.c.bf16 %v696, %v695
        %v719 = vpack.c.bf16 %v698, %v697
        %v720 = vpack.c.bf16 %v700, %v699
        %v721 = vpack.c.bf16 %v702, %v701
        %v722 = vpack.c.bf16 %v704, %v703
        %v723 = vpack.c.bf16 %v706, %v705
        %v724 = vpack.c.bf16 %v708, %v707
        %v741 = vunpack.c.l.b16 %v709
        %v742 = vunpack.c.h.b16 %v709
        %v743 = vunpack.c.l.b16 %v710
        %v744 = vunpack.c.h.b16 %v710
        %v745 = vunpack.c.l.b16 %v711
        %v746 = vunpack.c.h.b16 %v711
        %v747 = vunpack.c.l.b16 %v712
        %v748 = vunpack.c.h.b16 %v712
        %v749 = vunpack.c.l.b16 %v713
        %v750 = vunpack.c.h.b16 %v713
        %v751 = vunpack.c.l.b16 %v714
        %v752 = vunpack.c.h.b16 %v714
        %v753 = vunpack.c.l.b16 %v715
        %v754 = vunpack.c.h.b16 %v715
        %v755 = vunpack.c.l.b16 %v716
        %v756 = vunpack.c.h.b16 %v716
        %v757 = vunpack.c.l.b16 %v717
        %v758 = vunpack.c.h.b16 %v717
        %v759 = vunpack.c.l.b16 %v718
        %v760 = vunpack.c.h.b16 %v718
        %v761 = vunpack.c.l.b16 %v719
        %v762 = vunpack.c.h.b16 %v719
        %v763 = vunpack.c.l.b16 %v720
        %v764 = vunpack.c.h.b16 %v720
        %v765 = vunpack.c.l.b16 %v721
        %v766 = vunpack.c.h.b16 %v721
        %v767 = vunpack.c.l.b16 %v722
        %v768 = vunpack.c.h.b16 %v722
        %v769 = vunpack.c.l.b16 %v723
        %v770 = vunpack.c.h.b16 %v723
        %v771 = vunpack.c.l.b16 %v724
        %v772 = vunpack.c.h.b16 %v724
        %v773 = vpack.c.b16 %v741, %v741
        %v774 = vpack.c.b16 %v742, %v742
        %v775 = vpack.c.b16 %v743, %v743
        %v776 = vpack.c.b16 %v744, %v744
        %v777 = vpack.c.b16 %v745, %v745
        %v778 = vpack.c.b16 %v746, %v746
        %v779 = vpack.c.b16 %v747, %v747
        %v780 = vpack.c.b16 %v748, %v748
        %v781 = vpack.c.b16 %v749, %v749
        %v782 = vpack.c.b16 %v750, %v750
        %v783 = vpack.c.b16 %v751, %v751
        %v784 = vpack.c.b16 %v752, %v752
        %v785 = vpack.c.b16 %v753, %v753
        %v786 = vpack.c.b16 %v754, %v754
        %v787 = vpack.c.b16 %v755, %v755
        %v788 = vpack.c.b16 %v756, %v756
        %v789 = vpack.c.b16 %v757, %v757
        %v790 = vpack.c.b16 %v758, %v758
        %v791 = vpack.c.b16 %v759, %v759
        %v792 = vpack.c.b16 %v760, %v760
        %v793 = vpack.c.b16 %v761, %v761
        %v794 = vpack.c.b16 %v762, %v762
        %v795 = vpack.c.b16 %v763, %v763
        %v796 = vpack.c.b16 %v764, %v764
        %v797 = vpack.c.b16 %v765, %v765
        %v798 = vpack.c.b16 %v766, %v766
        %v799 = vpack.c.b16 %v767, %v767
        %v800 = vpack.c.b16 %v768, %v768
        %v801 = vpack.c.b16 %v769, %v769
        %v802 = vpack.c.b16 %v770, %v770
        %v803 = vpack.c.b16 %v771, %v771
        %v804 = vpack.c.b16 %v772, %v772
        %837 = vst [vmem:[%s200] sm:$0xf] %v773
        %838 = vst [vmem:[%s200 + $0x4] sm:$0xf] %v774
        %839 = vst [vmem:[%s200 + $0x8] sm:$0xf] %v775
        %840 = vst [vmem:[%s200 + $0xc] sm:$0xf] %v776
        %841 = vst [vmem:[%s200 + $0x10] sm:$0xf] %v777
        %842 = vst [vmem:[%s200 + $0x14] sm:$0xf] %v778
        %843 = vst [vmem:[%s200 + $0x18] sm:$0xf] %v779
        %844 = vst [vmem:[%s200 + $0x1c] sm:$0xf] %v780
        %845 = vst [vmem:[%s200 + $0x20] sm:$0xf] %v781
        %846 = vst [vmem:[%s200 + $0x24] sm:$0xf] %v782
        %847 = vst [vmem:[%s200 + $0x28] sm:$0xf] %v783
        %848 = vst [vmem:[%s200 + $0x2c] sm:$0xf] %v784
        %849 = vst [vmem:[%s200 + $0x30] sm:$0xf] %v785
        %850 = vst [vmem:[%s200 + $0x34] sm:$0xf] %v786
        %851 = vst [vmem:[%s200 + $0x38] sm:$0xf] %v787
        %852 = vst [vmem:[%s200 + $0x3c] sm:$0xf] %v788
        %853 = vst [vmem:[%s200 + $0x40] sm:$0xf] %v789
        %854 = vst [vmem:[%s200 + $0x44] sm:$0xf] %v790
        %855 = vst [vmem:[%s200 + $0x48] sm:$0xf] %v791
        %856 = vst [vmem:[%s200 + $0x4c] sm:$0xf] %v792
        %857 = vst [vmem:[%s200 + $0x50] sm:$0xf] %v793
        %858 = vst [vmem:[%s200 + $0x54] sm:$0xf] %v794
        %859 = vst [vmem:[%s200 + $0x58] sm:$0xf] %v795
        %860 = vst [vmem:[%s200 + $0x5c] sm:$0xf] %v796
        %861 = vst [vmem:[%s200 + $0x60] sm:$0xf] %v797
        %862 = vst [vmem:[%s200 + $0x64] sm:$0xf] %v798
        %863 = vst [vmem:[%s200 + $0x68] sm:$0xf] %v799
        %864 = vst [vmem:[%s200 + $0x6c] sm:$0xf] %v800
        %865 = vst [vmem:[%s200 + $0x70] sm:$0xf] %v801
        %866 = vst [vmem:[%s200 + $0x74] sm:$0xf] %v802
        %867 = vst [vmem:[%s200 + $0x78] sm:$0xf] %v803
        %868 = vst [vmem:[%s200 + $0x7c] sm:$0xf] %v804
        %s869 = smul.u32 32, %s16
        %p870 = scmp.lt.s32.totalorder %s869, 63
        %s871 = scalar_select %p870, %s869, 63
        %s872 = smul.addr %s871, 4
        %s873 = scalar_lea.vmem %s3, %s872
        // Predicated region
        $region41: #{linear_logp_forward.2} parent=31 // pred_check
          %p874 = pneg %p102
        $region42: #{linear_logp_forward.2} parent=31 // pred_check_branch
          %876 = sbr.rel (%p874) target = $region44
        $region43: #{linear_logp_forward.2} parent=31 // pred_region
          %s877 = smul.u32 32, %s16
        $region44: #{linear_logp_forward.2} parent=31 // pred_fallthru
          _
      $region32: #{linear_logp_forward.2} parent=5 // pred_fallthru
        _
      %p878 = scmp.le.s32.totalorder 2, %s11
      // Predicated region
      $region45: #{linear_logp_forward.2} parent=5 // pred_check
        %p879 = pneg %p878
      $region46: #{linear_logp_forward.2} parent=5 // pred_check_branch
        %881 = sbr.rel (%p879) target = $region48
      $region47: #{linear_logp_forward.2} parent=5 // pred_region
        %s882 = ssub.s32 %s11, 2
        // Predicated region
        $region49: #{linear_logp_forward.2} parent=47 // pred_check
          %p883 = pneg %p108
        $region50: #{linear_logp_forward.2} parent=47 // pred_check_branch
          %885 = sbr.rel (%p883) target = $region52
        $region51: #{linear_logp_forward.2} parent=47 // pred_region
          %s886 = smul.u32 32, %s17
          %p887 = scmp.lt.s32.totalorder %s886, 63
          %s888 = scalar_select %p887, %s886, 63
          %s889 = smul.addr %s888, 4
          %s890 = scalar_lea.vmem %s3, %s889
        $region52: #{linear_logp_forward.2} parent=47 // pred_fallthru
          _
      $region48: #{linear_logp_forward.2} parent=5 // pred_fallthru
        _
    $region6: #{linear_logp_forward.2} parent=1 // loop_footer
      %s15 = sadd.s32 1, %s11
    $region7: #{linear_logp_forward.2} parent=1 // loop_footer_branch
      %10 = sbr.rel target = $region3
    $region8: #{linear_logp_forward.2} parent=1 // loop_exit
      _
    %891 = vsyncpa [#allocation3], 1
    %s892 = scalar_lea.sflag [#allocation3], 1
    %893 = vsyncpa %s892, 1
    %894 = vsyncpa [#allocation5], 1

// kernel: linear_logp_forward.3
$region0: #{linear_logp_forward.3}
  #allocation0 [shape = 'u32[]', space=smem, size = 0x4, offset = 0x4, fixed_abs, tag = 'smem constant byte address 0x4 - core index']
  #allocation1 [shape = 'u32[144,128]{1,0:T(1,128)}', space=vmem, size = 0x12000, scoped, tag = 'internal scratch']
  #allocation2 [shape = 'f32[2,32]{1,0:T(2,128)}', space=vmem, size = 0x400, scoped, tag = 'scratch operand']
  #allocation3 [shape = 'f32[1,1]{1,0:T(1,128)S(1)}', space=vmem, size = 0x200, scoped, tag = 'scoped memory for linear_logp_forward.3']
  %s0 = inlined_call_operand.vmem [shape: bf16[2,32768], index: 0, kind: input, shape index: {}]
  %s1 = inlined_call_operand.vmem [shape: bf16[32768,32], index: 1, kind: input, shape index: {}]
  %s2 = inlined_call_operand.vmem [shape: f32[2,1], index: 2, kind: input, shape index: {}]
  %s3 = inlined_call_operand.vmem [shape: f32[1,128], index: 3, kind: input, shape index: {}]
  %s4 = inlined_call_operand.vmem [shape: f32[1,128], index: 4, kind: input, shape index: {}]
  %s5 = inlined_call_operand.vmem [shape: f32[128,32], index: 5, kind: input, shape index: {}]
  %s6 = inlined_call_operand.vmem [shape: f32[1,32], index: 6, kind: input, shape index: {}]
  %s7 = inlined_call_operand.vmem [shape: f32[1,32], index: 7, kind: input, shape index: {}]
  %s8 = inlined_call_operand.<no memory space> [shape: f32[1,1], index: 8, kind: input, shape index: {}]
  %s9 = inlined_call_operand.vmem [shape: f32[2,1], index: 9, kind: output, shape index: {}]
  %s10 = sld [smem:[#allocation0]]
  $region77: #{linear_logp_forward.3} parent=0
    _
  %s12 = ssub.s32 1, %s10
  %s13 = scalar_select 0, %s12, %s10
  %v14 = vstv %s8
  %15 = vst [vmem:[#allocation3] sm:$0x1] %v14
  loop: start=0, step=1, limit=6
  $region2: #{linear_logp_forward.3} parent=0 // loop_pre_header
    _
  $region3: #{linear_logp_forward.3} parent=0 // loop_header
    %s17 = sphi 0, %s21
    %p18 = scmp.ge.s32.totalorder %s17, 6
    %s27 = sphi 0, %s29
    %s30 = sphi 0, %s27
    %s31 = sphi 0, %s30
    %s47 = sphi 0, %s31
    %s53 = sphi 0, %s55
    %s56 = sphi 0, %s53
    %s57 = sphi 0, %s56
    %s73 = sphi 0, %s57
    %s77 = sphi 0, %s77
    %s79 = sphi 0, %s77
    %s80 = sphi 0, %s79
    %s94 = sphi 0, %s80
    %s98 = sphi 0, %s98
    %s100 = sphi 0, %s98
    %s101 = sphi 0, %s100
    %s115 = sphi 0, %s101
    %s119 = sphi 0, %s119
    %s121 = sphi 0, %s119
    %s122 = sphi 0, %s121
    %s136 = sphi 0, %s122
    %s140 = sphi 0, %s140
    %s142 = sphi 0, %s140
    %s143 = sphi 0, %s142
    %s157 = sphi 0, %s143
    %s161 = sphi 0, %s161
    %s163 = sphi 0, %s161
    %s164 = sphi 0, %s163
    %s178 = sphi 0, %s164
    %s182 = sphi 0, %s182
    %s184 = sphi 0, %s182
    %s185 = sphi 0, %s184
    %s199 = sphi 0, %s185
    %s203 = sphi 0, %s203
    %s205 = sphi 0, %s203
    %s206 = sphi 0, %s205
    %s220 = sphi 0, %s206
    %s224 = sphi 0, %s224
    %s226 = sphi 0, %s224
    %s227 = sphi 0, %s226
    %s241 = sphi 0, %s227
  $region4: #{linear_logp_forward.3} parent=0 // loop_header_branch
    %20 = sbr.rel (%p18) target = $region8
  $region5: #{linear_logp_forward.3} parent=0 // loop_body
    %s22 = ssub.s32 %s17, 1
    %s23 = ssub.s32 %s17, 2
    %s24 = sadd.s32 %s17, 1
    %s25 = ssub.s32 %s17, %s24
    %p26 = scmp.eq.s32.totalorder %s25, 0
    %s28 = sadd.s32 %s27, 1
    %s29 = scalar_select %p26, %s27, %s28
    %p32 = pneg %p26
    %p33 = scmp.eq.s32.totalorder %s17, 3
    %p34 = por %p32, %p33
    %p35 = scmp.ne.s32.totalorder %s27, %s30
    %p36 = scmp.eq.s32.totalorder %s17, 0
    %p37 = por %p35, %p36
    %p38 = scmp.ne.s32.totalorder %s27, %s30
    %p39 = scmp.eq.s32.totalorder %s22, 3
    %p40 = por %p38, %p39
    %p41 = scmp.ne.s32.totalorder %s30, %s31
    %p42 = scmp.eq.s32.totalorder %s22, 0
    %p43 = por %p41, %p42
    %p44 = scmp.ne.s32.totalorder %s30, %s31
    %p45 = scmp.eq.s32.totalorder %s23, 3
    %p46 = por %p44, %p45
    %p48 = scmp.ne.s32.totalorder %s31, %s47
    %p49 = scmp.eq.s32.totalorder %s23, 0
    %p50 = por %p48, %p49
    %s51 = ssub.s32 %s17, %s24
    %p52 = scmp.eq.s32.totalorder %s51, 0
    %s54 = sadd.s32 %s53, 1
    %s55 = scalar_select %p52, %s53, %s54
    %p58 = pneg %p52
    %p59 = scmp.eq.s32.totalorder %s17, 3
    %p60 = por %p58, %p59
    %p61 = scmp.ne.s32.totalorder %s53, %s56
    %p62 = scmp.eq.s32.totalorder %s17, 0
    %p63 = por %p61, %p62
    %p64 = scmp.ne.s32.totalorder %s53, %s56
    %p65 = scmp.eq.s32.totalorder %s22, 3
    %p66 = por %p64, %p65
    %p67 = scmp.ne.s32.totalorder %s56, %s57
    %p68 = scmp.eq.s32.totalorder %s22, 0
    %p69 = por %p67, %p68
    %p70 = scmp.ne.s32.totalorder %s56, %s57
    %p71 = scmp.eq.s32.totalorder %s23, 3
    %p72 = por %p70, %p71
    %p74 = scmp.ne.s32.totalorder %s57, %s73
    %p75 = scmp.eq.s32.totalorder %s23, 0
    %p76 = por %p74, %p75
    %s78 = sadd.s32 %s77, 1
    %p81 = scmp.eq.s32.totalorder %s17, 3
    %p82 = scmp.ne.s32.totalorder %s77, %s79
    %p83 = scmp.eq.s32.totalorder %s17, 0
    %p84 = por %p82, %p83
    %p85 = scmp.ne.s32.totalorder %s77, %s79
    %p86 = scmp.eq.s32.totalorder %s22, 3
    %p87 = por %p85, %p86
    %p88 = scmp.ne.s32.totalorder %s79, %s80
    %p89 = scmp.eq.s32.totalorder %s22, 0
    %p90 = por %p88, %p89
    %p91 = scmp.ne.s32.totalorder %s79, %s80
    %p92 = scmp.eq.s32.totalorder %s23, 3
    %p93 = por %p91, %p92
    %p95 = scmp.ne.s32.totalorder %s80, %s94
    %p96 = scmp.eq.s32.totalorder %s23, 0
    %p97 = por %p95, %p96
    %s99 = sadd.s32 %s98, 1
    %p102 = scmp.eq.s32.totalorder %s17, 3
    %p103 = scmp.ne.s32.totalorder %s98, %s100
    %p104 = scmp.eq.s32.totalorder %s17, 0
    %p105 = por %p103, %p104
    %p106 = scmp.ne.s32.totalorder %s98, %s100
    %p107 = scmp.eq.s32.totalorder %s22, 3
    %p108 = por %p106, %p107
    %p109 = scmp.ne.s32.totalorder %s100, %s101
    %p110 = scmp.eq.s32.totalorder %s22, 0
    %p111 = por %p109, %p110
    %p112 = scmp.ne.s32.totalorder %s100, %s101
    %p113 = scmp.eq.s32.totalorder %s23, 3
    %p114 = por %p112, %p113
    %p116 = scmp.ne.s32.totalorder %s101, %s115
    %p117 = scmp.eq.s32.totalorder %s23, 0
    %p118 = por %p116, %p117
    %s120 = sadd.s32 %s119, 1
    %p123 = scmp.eq.s32.totalorder %s17, 3
    %p124 = scmp.ne.s32.totalorder %s119, %s121
    %p125 = scmp.eq.s32.totalorder %s17, 0
    %p126 = por %p124, %p125
    %p127 = scmp.ne.s32.totalorder %s119, %s121
    %p128 = scmp.eq.s32.totalorder %s22, 3
    %p129 = por %p127, %p128
    %p130 = scmp.ne.s32.totalorder %s121, %s122
    %p131 = scmp.eq.s32.totalorder %s22, 0
    %p132 = por %p130, %p131
    %p133 = scmp.ne.s32.totalorder %s121, %s122
    %p134 = scmp.eq.s32.totalorder %s23, 3
    %p135 = por %p133, %p134
    %p137 = scmp.ne.s32.totalorder %s122, %s136
    %p138 = scmp.eq.s32.totalorder %s23, 0
    %p139 = por %p137, %p138
    %s141 = sadd.s32 %s140, 1
    %p144 = scmp.eq.s32.totalorder %s17, 3
    %p145 = scmp.ne.s32.totalorder %s140, %s142
    %p146 = scmp.eq.s32.totalorder %s17, 0
    %p147 = por %p145, %p146
    %p148 = scmp.ne.s32.totalorder %s140, %s142
    %p149 = scmp.eq.s32.totalorder %s22, 3
    %p150 = por %p148, %p149
    %p151 = scmp.ne.s32.totalorder %s142, %s143
    %p152 = scmp.eq.s32.totalorder %s22, 0
    %p153 = por %p151, %p152
    %p154 = scmp.ne.s32.totalorder %s142, %s143
    %p155 = scmp.eq.s32.totalorder %s23, 3
    %p156 = por %p154, %p155
    %p158 = scmp.ne.s32.totalorder %s143, %s157
    %p159 = scmp.eq.s32.totalorder %s23, 0
    %p160 = por %p158, %p159
    %s162 = sadd.s32 %s161, 1
    %p165 = scmp.eq.s32.totalorder %s17, 3
    %p166 = scmp.ne.s32.totalorder %s161, %s163
    %p167 = scmp.eq.s32.totalorder %s17, 0
    %p168 = por %p166, %p167
    %p169 = scmp.ne.s32.totalorder %s161, %s163
    %p170 = scmp.eq.s32.totalorder %s22, 3
    %p171 = por %p169, %p170
    %p172 = scmp.ne.s32.totalorder %s163, %s164
    %p173 = scmp.eq.s32.totalorder %s22, 0
    %p174 = por %p172, %p173
    %p175 = scmp.ne.s32.totalorder %s163, %s164
    %p176 = scmp.eq.s32.totalorder %s23, 3
    %p177 = por %p175, %p176
    %p179 = scmp.ne.s32.totalorder %s164, %s178
    %p180 = scmp.eq.s32.totalorder %s23, 0
    %p181 = por %p179, %p180
    %s183 = sadd.s32 %s182, 1
    %p186 = scmp.eq.s32.totalorder %s17, 3
    %p187 = scmp.ne.s32.totalorder %s182, %s184
    %p188 = scmp.eq.s32.totalorder %s17, 0
    %p189 = por %p187, %p188
    %p190 = scmp.ne.s32.totalorder %s182, %s184
    %p191 = scmp.eq.s32.totalorder %s22, 3
    %p192 = por %p190, %p191
    %p193 = scmp.ne.s32.totalorder %s184, %s185
    %p194 = scmp.eq.s32.totalorder %s22, 0
    %p195 = por %p193, %p194
    %p196 = scmp.ne.s32.totalorder %s184, %s185
    %p197 = scmp.eq.s32.totalorder %s23, 3
    %p198 = por %p196, %p197
    %p200 = scmp.ne.s32.totalorder %s185, %s199
    %p201 = scmp.eq.s32.totalorder %s23, 0
    %p202 = por %p200, %p201
    %s204 = sadd.s32 %s203, 1
    %p207 = scmp.eq.s32.totalorder %s17, 3
    %p208 = scmp.ne.s32.totalorder %s203, %s205
    %p209 = scmp.eq.s32.totalorder %s17, 0
    %p210 = por %p208, %p209
    %p211 = scmp.ne.s32.totalorder %s203, %s205
    %p212 = scmp.eq.s32.totalorder %s22, 3
    %p213 = por %p211, %p212
    %p214 = scmp.ne.s32.totalorder %s205, %s206
    %p215 = scmp.eq.s32.totalorder %s22, 0
    %p216 = por %p214, %p215
    %p217 = scmp.ne.s32.totalorder %s205, %s206
    %p218 = scmp.eq.s32.totalorder %s23, 3
    %p219 = por %p217, %p218
    %p221 = scmp.ne.s32.totalorder %s206, %s220
    %p222 = scmp.eq.s32.totalorder %s23, 0
    %p223 = por %p221, %p222
    %s225 = sadd.s32 %s224, 1
    %p228 = scmp.eq.s32.totalorder %s17, 3
    %p229 = scmp.ne.s32.totalorder %s224, %s226
    %p230 = scmp.eq.s32.totalorder %s17, 0
    %p231 = por %p229, %p230
    %p232 = scmp.ne.s32.totalorder %s224, %s226
    %p233 = scmp.eq.s32.totalorder %s22, 3
    %p234 = por %p232, %p233
    %p235 = scmp.ne.s32.totalorder %s226, %s227
    %p236 = scmp.eq.s32.totalorder %s22, 0
    %p237 = por %p235, %p236
    %p238 = scmp.ne.s32.totalorder %s226, %s227
    %p239 = scmp.eq.s32.totalorder %s23, 3
    %p240 = por %p238, %p239
    %p242 = scmp.ne.s32.totalorder %s227, %s241
    %p243 = scmp.eq.s32.totalorder %s23, 0
    %p244 = por %p242, %p243
    %p245 = scmp.le.s32.totalorder 1, %s17
    %p246 = scmp.lt.s32.totalorder %s17, 5
    %p247 = pnand %p245, %p246
    %p248 = pneg %p247
    // Predicated region
    $region9: #{linear_logp_forward.3} parent=5 // pred_check
      _
    $region10: #{linear_logp_forward.3} parent=5 // pred_check_branch
      %250 = sbr.rel (%p247) target = $region12
    $region11: #{linear_logp_forward.3} parent=5 // pred_region
      %s251 = ssub.s32 %s17, 1
      // Predicated region
      $region13: #{linear_logp_forward.3} parent=11 // pred_check
        %p252 = pneg %p90
      $region14: #{linear_logp_forward.3} parent=11 // pred_check_branch
        %254 = sbr.rel (%p252) target = $region16
      $region15: #{linear_logp_forward.3} parent=11 // pred_region
        _
      $region16: #{linear_logp_forward.3} parent=11 // pred_fallthru
        _
      // Predicated region
      $region17: #{linear_logp_forward.3} parent=11 // pred_check
        %p255 = pneg %p111
      $region18: #{linear_logp_forward.3} parent=11 // pred_check_branch
        %257 = sbr.rel (%p255) target = $region20
      $region19: #{linear_logp_forward.3} parent=11 // pred_region
        _
      $region20: #{linear_logp_forward.3} parent=11 // pred_fallthru
        _
      // Predicated region
      $region21: #{linear_logp_forward.3} parent=11 // pred_check
        %p258 = pneg %p132
      $region22: #{linear_logp_forward.3} parent=11 // pred_check_branch
        %260 = sbr.rel (%p258) target = $region24
      $region23: #{linear_logp_forward.3} parent=11 // pred_region
        _
      $region24: #{linear_logp_forward.3} parent=11 // pred_fallthru
        _
      // Predicated region
      $region25: #{linear_logp_forward.3} parent=11 // pred_check
        %p261 = pneg %p153
      $region26: #{linear_logp_forward.3} parent=11 // pred_check_branch
        %263 = sbr.rel (%p261) target = $region28
      $region27: #{linear_logp_forward.3} parent=11 // pred_region
        _
      $region28: #{linear_logp_forward.3} parent=11 // pred_fallthru
        _
      // Predicated region
      $region29: #{linear_logp_forward.3} parent=11 // pred_check
        %p264 = pneg %p174
      $region30: #{linear_logp_forward.3} parent=11 // pred_check_branch
        %266 = sbr.rel (%p264) target = $region32
      $region31: #{linear_logp_forward.3} parent=11 // pred_region
        _
      $region32: #{linear_logp_forward.3} parent=11 // pred_fallthru
        _
      // Predicated region
      $region33: #{linear_logp_forward.3} parent=11 // pred_check
        %p267 = pneg %p195
      $region34: #{linear_logp_forward.3} parent=11 // pred_check_branch
        %269 = sbr.rel (%p267) target = $region36
      $region35: #{linear_logp_forward.3} parent=11 // pred_region
        _
      $region36: #{linear_logp_forward.3} parent=11 // pred_fallthru
        _
      // Predicated region
      $region37: #{linear_logp_forward.3} parent=11 // pred_check
        %p270 = pneg %p216
      $region38: #{linear_logp_forward.3} parent=11 // pred_check_branch
        %272 = sbr.rel (%p270) target = $region40
      $region39: #{linear_logp_forward.3} parent=11 // pred_region
        _
      $region40: #{linear_logp_forward.3} parent=11 // pred_fallthru
        _
    $region12: #{linear_logp_forward.3} parent=5 // pred_fallthru
      _
    %p273 = scmp.lt.s32.totalorder %s17, 4
    // Predicated region
    $region41: #{linear_logp_forward.3} parent=5 // pred_check
      %p274 = pneg %p273
    $region42: #{linear_logp_forward.3} parent=5 // pred_check_branch
      %276 = sbr.rel (%p274) target = $region44
    $region43: #{linear_logp_forward.3} parent=5 // pred_region
      // Predicated region
      $region45: #{linear_logp_forward.3} parent=43 // pred_check
        %p277 = pneg %p37
      $region46: #{linear_logp_forward.3} parent=43 // pred_check_branch
        %279 = sbr.rel (%p277) target = $region48
      $region47: #{linear_logp_forward.3} parent=43 // pred_region
        %s280 = smul.u32 64, %s17
        %p281 = scmp.lt.s32.totalorder %s280, 255
        %s282 = scalar_select %p281, %s280, 255
        %s283 = scalar_lea.vmem %s0, %s282
        %s284 = smul.u32 64, %s17
      $region48: #{linear_logp_forward.3} parent=43 // pred_fallthru
        _
      // Predicated region
      $region49: #{linear_logp_forward.3} parent=43 // pred_check
        %p285 = pneg %p63
      $region50: #{linear_logp_forward.3} parent=43 // pred_check_branch
        %287 = sbr.rel (%p285) target = $region52
      $region51: #{linear_logp_forward.3} parent=43 // pred_region
        %s288 = smul.u32 1024, %s17
        %p289 = scmp.lt.s32.totalorder %s288, 4095
        %s290 = scalar_select %p289, %s288, 4095
        %s291 = smul.addr %s290, 4
        %s292 = scalar_lea.vmem %s1, %s291
        %s293 = smul.u32 1024, %s17
      $region52: #{linear_logp_forward.3} parent=43 // pred_fallthru
        _
    $region44: #{linear_logp_forward.3} parent=5 // pred_fallthru
      _
    %p294 = scmp.le.s32.totalorder 1, %s17
    %p295 = scmp.lt.s32.totalorder %s17, 5
    %p296 = pnand %p294, %p295
    %p297 = pneg %p296
    // Predicated region
    $region53: #{linear_logp_forward.3} parent=5 // pred_check
      _
    $region54: #{linear_logp_forward.3} parent=5 // pred_check_branch
      %299 = sbr.rel (%p296) target = $region56
    $region55: #{linear_logp_forward.3} parent=5 // pred_region
      %s300 = ssub.s32 %s17, 1
      %s301 = smul.u32 64, %s22
      %p302 = scmp.lt.s32.totalorder %s301, 255
      %s303 = scalar_select %p302, %s301, 255
      %s304 = scalar_lea.vmem %s0, %s303
      %p305 = pneg %p43
      %p306 = pneg %p40
      %s307 = smul.u32 1024, %s22
      %p308 = scmp.lt.s32.totalorder %s307, 4095
      %s309 = scalar_select %p308, %s307, 4095
      %s310 = smul.addr %s309, 4
      %s311 = scalar_lea.vmem %s1, %s310
      %p312 = pneg %p69
      %p313 = pneg %p66
      %p314 = pneg %p90
      %p315 = pneg %p87
      %p316 = pneg %p111
      %p317 = pneg %p108
      %p318 = pneg %p132
      %p319 = pneg %p129
      %p320 = pneg %p153
      %p321 = pneg %p150
      %p322 = pneg %p174
      %p323 = pneg %p171
      %p324 = pneg %p195
      %p325 = pneg %p192
      %p326 = pneg %p216
      %p327 = pneg %p213
      %p328 = pneg %p237
      %p329 = pneg %p234
      %s330 = smul.u32 64, %s22
      %p331 = scmp.lt.s32.totalorder %s330, 255
      %s332 = scalar_select %p331, %s330, 255
      %s333 = scalar_lea.vmem %s0, %s332
      %s334 = smul.u32 64, %s22
      %s335 = smul.u32 1024, %s22
      %p336 = scmp.lt.s32.totalorder %s335, 4095
      %s337 = scalar_select %p336, %s335, 4095
      %s338 = smul.addr %s337, 4
      %s339 = scalar_lea.vmem %s1, %s338
      %s340 = smul.u32 1024, %s22
      %p342 = scmp.eq.s32.totalorder %s22, 0
      // Predicated region
      $region57: #{linear_logp_forward.3} parent=55 // pred_check
        %p343 = pneg %p342
      $region58: #{linear_logp_forward.3} parent=55 // pred_check_branch
        %345 = sbr.rel (%p343) target = $region60
      $region59: #{linear_logp_forward.3} parent=55 // pred_region
        %vm346 = vcmask 254976
        %347 = vst.msk [vmem:[#allocation2] sm:$0x3] %vm346, 0.0
      $region60: #{linear_logp_forward.3} parent=55 // pred_fallthru
        _
      %v348 = vld [vmem:[#allocation2] sm:$0x3]
      %v349 = vld [vmem:[%s333] sm:$0xff]
      %v350 = vld [vmem:[%s333 + $0x8] sm:$0xff]
      %v351 = vld [vmem:[%s333 + $0x10] sm:$0xff]
      %v352 = vld [vmem:[%s333 + $0x18] sm:$0xff]
      %v353 = vld [vmem:[%s333 + $0x20] sm:$0xff]
      %v354 = vld [vmem:[%s333 + $0x28] sm:$0xff]
      %v355 = vld [vmem:[%s333 + $0x30] sm:$0xff]
      %v356 = vld [vmem:[%s333 + $0x38] sm:$0xff]
      %v357 = vld [vmem:[%s339] sm:$0xf]
      %v358 = vld [vmem:[%s339 + $0x4] sm:$0xf]
      %v359 = vld [vmem:[%s339 + $0x8] sm:$0xf]
      %v360 = vld [vmem:[%s339 + $0xc] sm:$0xf]
      %v361 = vld [vmem:[%s339 + $0x10] sm:$0xf]
      %v362 = vld [vmem:[%s339 + $0x14] sm:$0xf]
      %v363 = vld [vmem:[%s339 + $0x18] sm:$0xf]
      %v364 = vld [vmem:[%s339 + $0x1c] sm:$0xf]
      %v365 = vld [vmem:[%s339 + $0x20] sm:$0xf]
      %v366 = vld [vmem:[%s339 + $0x24] sm:$0xf]
      %v367 = vld [vmem:[%s339 + $0x28] sm:$0xf]
      %v368 = vld [vmem:[%s339 + $0x2c] sm:$0xf]
      %v369 = vld [vmem:[%s339 + $0x30] sm:$0xf]
      %v370 = vld [vmem:[%s339 + $0x34] sm:$0xf]
      %v371 = vld [vmem:[%s339 + $0x38] sm:$0xf]
      %v372 = vld [vmem:[%s339 + $0x3c] sm:$0xf]
      %v373 = vld [vmem:[%s339 + $0x40] sm:$0xf]
      %v374 = vld [vmem:[%s339 + $0x44] sm:$0xf]
      %v375 = vld [vmem:[%s339 + $0x48] sm:$0xf]
      %v376 = vld [vmem:[%s339 + $0x4c] sm:$0xf]
      %v377 = vld [vmem:[%s339 + $0x50] sm:$0xf]
      %v378 = vld [vmem:[%s339 + $0x54] sm:$0xf]
      %v379 = vld [vmem:[%s339 + $0x58] sm:$0xf]
      %v380 = vld [vmem:[%s339 + $0x5c] sm:$0xf]
      %v381 = vld [vmem:[%s339 + $0x60] sm:$0xf]
      %v382 = vld [vmem:[%s339 + $0x64] sm:$0xf]
      %v383 = vld [vmem:[%s339 + $0x68] sm:$0xf]
      %v384 = vld [vmem:[%s339 + $0x6c] sm:$0xf]
      %v385 = vld [vmem:[%s339 + $0x70] sm:$0xf]
      %v386 = vld [vmem:[%s339 + $0x74] sm:$0xf]
      %v387 = vld [vmem:[%s339 + $0x78] sm:$0xf]
      %v388 = vld [vmem:[%s339 + $0x7c] sm:$0xf]
      %v389 = vld [vmem:[%s339 + $0x80] sm:$0xf]
      %v390 = vld [vmem:[%s339 + $0x84] sm:$0xf]
      %v391 = vld [vmem:[%s339 + $0x88] sm:$0xf]
      %v392 = vld [vmem:[%s339 + $0x8c] sm:$0xf]
      %v393 = vld [vmem:[%s339 + $0x90] sm:$0xf]
      %v394 = vld [vmem:[%s339 + $0x94] sm:$0xf]
      %v395 = vld [vmem:[%s339 + $0x98] sm:$0xf]
      %v396 = vld [vmem:[%s339 + $0x9c] sm:$0xf]
      %v397 = vld [vmem:[%s339 + $0xa0] sm:$0xf]
      %v398 = vld [vmem:[%s339 + $0xa4] sm:$0xf]
      %v399 = vld [vmem:[%s339 + $0xa8] sm:$0xf]
      %v400 = vld [vmem:[%s339 + $0xac] sm:$0xf]
      %v401 = vld [vmem:[%s339 + $0xb0] sm:$0xf]
      %v402 = vld [vmem:[%s339 + $0xb4] sm:$0xf]
      %v403 = vld [vmem:[%s339 + $0xb8] sm:$0xf]
      %v404 = vld [vmem:[%s339 + $0xbc] sm:$0xf]
      %v405 = vld [vmem:[%s339 + $0xc0] sm:$0xf]
      %v406 = vld [vmem:[%s339 + $0xc4] sm:$0xf]
      %v407 = vld [vmem:[%s339 + $0xc8] sm:$0xf]
      %v408 = vld [vmem:[%s339 + $0xcc] sm:$0xf]
      %v409 = vld [vmem:[%s339 + $0xd0] sm:$0xf]
      %v410 = vld [vmem:[%s339 + $0xd4] sm:$0xf]
      %v411 = vld [vmem:[%s339 + $0xd8] sm:$0xf]
      %v412 = vld [vmem:[%s339 + $0xdc] sm:$0xf]
      %v413 = vld [vmem:[%s339 + $0xe0] sm:$0xf]
      %v414 = vld [vmem:[%s339 + $0xe4] sm:$0xf]
      %v415 = vld [vmem:[%s339 + $0xe8] sm:$0xf]
      %v416 = vld [vmem:[%s339 + $0xec] sm:$0xf]
      %v417 = vld [vmem:[%s339 + $0xf0] sm:$0xf]
      %v418 = vld [vmem:[%s339 + $0xf4] sm:$0xf]
      %v419 = vld [vmem:[%s339 + $0xf8] sm:$0xf]
      %v420 = vld [vmem:[%s339 + $0xfc] sm:$0xf]
      %v421 = vld [vmem:[%s339 + $0x100] sm:$0xf]
      %v422 = vld [vmem:[%s339 + $0x104] sm:$0xf]
      %v423 = vld [vmem:[%s339 + $0x108] sm:$0xf]
      %v424 = vld [vmem:[%s339 + $0x10c] sm:$0xf]
      %v425 = vld [vmem:[%s339 + $0x110] sm:$0xf]
      %v426 = vld [vmem:[%s339 + $0x114] sm:$0xf]
      %v427 = vld [vmem:[%s339 + $0x118] sm:$0xf]
      %v428 = vld [vmem:[%s339 + $0x11c] sm:$0xf]
      %v429 = vld [vmem:[%s339 + $0x120] sm:$0xf]
      %v430 = vld [vmem:[%s339 + $0x124] sm:$0xf]
      %v431 = vld [vmem:[%s339 + $0x128] sm:$0xf]
      %v432 = vld [vmem:[%s339 + $0x12c] sm:$0xf]
      %v433 = vld [vmem:[%s339 + $0x130] sm:$0xf]
      %v434 = vld [vmem:[%s339 + $0x134] sm:$0xf]
      %v435 = vld [vmem:[%s339 + $0x138] sm:$0xf]
      %v436 = vld [vmem:[%s339 + $0x13c] sm:$0xf]
      %v437 = vld [vmem:[%s339 + $0x140] sm:$0xf]
      %v438 = vld [vmem:[%s339 + $0x144] sm:$0xf]
      %v439 = vld [vmem:[%s339 + $0x148] sm:$0xf]
      %v440 = vld [vmem:[%s339 + $0x14c] sm:$0xf]
      %v441 = vld [vmem:[%s339 + $0x150] sm:$0xf]
      %v442 = vld [vmem:[%s339 + $0x154] sm:$0xf]
      %v443 = vld [vmem:[%s339 + $0x158] sm:$0xf]
      %v444 = vld [vmem:[%s339 + $0x15c] sm:$0xf]
      %v445 = vld [vmem:[%s339 + $0x160] sm:$0xf]
      %v446 = vld [vmem:[%s339 + $0x164] sm:$0xf]
      %v447 = vld [vmem:[%s339 + $0x168] sm:$0xf]
      %v448 = vld [vmem:[%s339 + $0x16c] sm:$0xf]
      %v449 = vld [vmem:[%s339 + $0x170] sm:$0xf]
      %v450 = vld [vmem:[%s339 + $0x174] sm:$0xf]
      %v451 = vld [vmem:[%s339 + $0x178] sm:$0xf]
      %v452 = vld [vmem:[%s339 + $0x17c] sm:$0xf]
      %v453 = vld [vmem:[%s339 + $0x180] sm:$0xf]
      %v454 = vld [vmem:[%s339 + $0x184] sm:$0xf]
      %v455 = vld [vmem:[%s339 + $0x188] sm:$0xf]
      %v456 = vld [vmem:[%s339 + $0x18c] sm:$0xf]
      %v457 = vld [vmem:[%s339 + $0x190] sm:$0xf]
      %v458 = vld [vmem:[%s339 + $0x194] sm:$0xf]
      %v459 = vld [vmem:[%s339 + $0x198] sm:$0xf]
      %v460 = vld [vmem:[%s339 + $0x19c] sm:$0xf]
      %v461 = vld [vmem:[%s339 + $0x1a0] sm:$0xf]
      %v462 = vld [vmem:[%s339 + $0x1a4] sm:$0xf]
      %v463 = vld [vmem:[%s339 + $0x1a8] sm:$0xf]
      %v464 = vld [vmem:[%s339 + $0x1ac] sm:$0xf]
      %v465 = vld [vmem:[%s339 + $0x1b0] sm:$0xf]
      %v466 = vld [vmem:[%s339 + $0x1b4] sm:$0xf]
      %v467 = vld [vmem:[%s339 + $0x1b8] sm:$0xf]
      %v468 = vld [vmem:[%s339 + $0x1bc] sm:$0xf]
      %v469 = vld [vmem:[%s339 + $0x1c0] sm:$0xf]
      %v470 = vld [vmem:[%s339 + $0x1c4] sm:$0xf]
      %v471 = vld [vmem:[%s339 + $0x1c8] sm:$0xf]
      %v472 = vld [vmem:[%s339 + $0x1cc] sm:$0xf]
      %v473 = vld [vmem:[%s339 + $0x1d0] sm:$0xf]
      %v474 = vld [vmem:[%s339 + $0x1d4] sm:$0xf]
      %v475 = vld [vmem:[%s339 + $0x1d8] sm:$0xf]
      %v476 = vld [vmem:[%s339 + $0x1dc] sm:$0xf]
      %v477 = vld [vmem:[%s339 + $0x1e0] sm:$0xf]
      %v478 = vld [vmem:[%s339 + $0x1e4] sm:$0xf]
      %v479 = vld [vmem:[%s339 + $0x1e8] sm:$0xf]
      %v480 = vld [vmem:[%s339 + $0x1ec] sm:$0xf]
      %v481 = vld [vmem:[%s339 + $0x1f0] sm:$0xf]
      %v482 = vld [vmem:[%s339 + $0x1f4] sm:$0xf]
      %v483 = vld [vmem:[%s339 + $0x1f8] sm:$0xf]
      %v484 = vld [vmem:[%s339 + $0x1fc] sm:$0xf]
      %v485 = vld [vmem:[%s339 + $0x200] sm:$0xf]
      %v486 = vld [vmem:[%s339 + $0x204] sm:$0xf]
      %v487 = vld [vmem:[%s339 + $0x208] sm:$0xf]
      %v488 = vld [vmem:[%s339 + $0x20c] sm:$0xf]
      %v489 = vld [vmem:[%s339 + $0x210] sm:$0xf]
      %v490 = vld [vmem:[%s339 + $0x214] sm:$0xf]
      %v491 = vld [vmem:[%s339 + $0x218] sm:$0xf]
      %v492 = vld [vmem:[%s339 + $0x21c] sm:$0xf]
      %v493 = vld [vmem:[%s339 + $0x220] sm:$0xf]
      %v494 = vld [vmem:[%s339 + $0x224] sm:$0xf]
      %v495 = vld [vmem:[%s339 + $0x228] sm:$0xf]
      %v496 = vld [vmem:[%s339 + $0x22c] sm:$0xf]
      %v497 = vld [vmem:[%s339 + $0x230] sm:$0xf]
      %v498 = vld [vmem:[%s339 + $0x234] sm:$0xf]
      %v499 = vld [vmem:[%s339 + $0x238] sm:$0xf]
      %v500 = vld [vmem:[%s339 + $0x23c] sm:$0xf]
      %v501 = vld [vmem:[%s339 + $0x240] sm:$0xf]
      %v502 = vld [vmem:[%s339 + $0x244] sm:$0xf]
      %v503 = vld [vmem:[%s339 + $0x248] sm:$0xf]
      %v504 = vld [vmem:[%s339 + $0x24c] sm:$0xf]
      %v505 = vld [vmem:[%s339 + $0x250] sm:$0xf]
      %v506 = vld [vmem:[%s339 + $0x254] sm:$0xf]
      %v507 = vld [vmem:[%s339 + $0x258] sm:$0xf]
      %v508 = vld [vmem:[%s339 + $0x25c] sm:$0xf]
      %v509 = vld [vmem:[%s339 + $0x260] sm:$0xf]
      %v510 = vld [vmem:[%s339 + $0x264] sm:$0xf]
      %v511 = vld [vmem:[%s339 + $0x268] sm:$0xf]
      %v512 = vld [vmem:[%s339 + $0x26c] sm:$0xf]
      %v513 = vld [vmem:[%s339 + $0x270] sm:$0xf]
      %v514 = vld [vmem:[%s339 + $0x274] sm:$0xf]
      %v515 = vld [vmem:[%s339 + $0x278] sm:$0xf]
      %v516 = vld [vmem:[%s339 + $0x27c] sm:$0xf]
      %v517 = vld [vmem:[%s339 + $0x280] sm:$0xf]
      %v518 = vld [vmem:[%s339 + $0x284] sm:$0xf]
      %v519 = vld [vmem:[%s339 + $0x288] sm:$0xf]
      %v520 = vld [vmem:[%s339 + $0x28c] sm:$0xf]
      %v521 = vld [vmem:[%s339 + $0x290] sm:$0xf]
      %v522 = vld [vmem:[%s339 + $0x294] sm:$0xf]
      %v523 = vld [vmem:[%s339 + $0x298] sm:$0xf]
      %v524 = vld [vmem:[%s339 + $0x29c] sm:$0xf]
      %v525 = vld [vmem:[%s339 + $0x2a0] sm:$0xf]
      %v526 = vld [vmem:[%s339 + $0x2a4] sm:$0xf]
      %v527 = vld [vmem:[%s339 + $0x2a8] sm:$0xf]
      %v528 = vld [vmem:[%s339 + $0x2ac] sm:$0xf]
      %v529 = vld [vmem:[%s339 + $0x2b0] sm:$0xf]
      %v530 = vld [vmem:[%s339 + $0x2b4] sm:$0xf]
      %v531 = vld [vmem:[%s339 + $0x2b8] sm:$0xf]
      %v532 = vld [vmem:[%s339 + $0x2bc] sm:$0xf]
      %v533 = vld [vmem:[%s339 + $0x2c0] sm:$0xf]
      %v534 = vld [vmem:[%s339 + $0x2c4] sm:$0xf]
      %v535 = vld [vmem:[%s339 + $0x2c8] sm:$0xf]
      %v536 = vld [vmem:[%s339 + $0x2cc] sm:$0xf]
      %v537 = vld [vmem:[%s339 + $0x2d0] sm:$0xf]
      %v538 = vld [vmem:[%s339 + $0x2d4] sm:$0xf]
      %v539 = vld [vmem:[%s339 + $0x2d8] sm:$0xf]
      %v540 = vld [vmem:[%s339 + $0x2dc] sm:$0xf]
      %v541 = vld [vmem:[%s339 + $0x2e0] sm:$0xf]
      %v542 = vld [vmem:[%s339 + $0x2e4] sm:$0xf]
      %v543 = vld [vmem:[%s339 + $0x2e8] sm:$0xf]
      %v544 = vld [vmem:[%s339 + $0x2ec] sm:$0xf]
      %v545 = vld [vmem:[%s339 + $0x2f0] sm:$0xf]
      %v546 = vld [vmem:[%s339 + $0x2f4] sm:$0xf]
      %v547 = vld [vmem:[%s339 + $0x2f8] sm:$0xf]
      %v548 = vld [vmem:[%s339 + $0x2fc] sm:$0xf]
      %v549 = vld [vmem:[%s339 + $0x300] sm:$0xf]
      %v550 = vld [vmem:[%s339 + $0x304] sm:$0xf]
      %v551 = vld [vmem:[%s339 + $0x308] sm:$0xf]
      %v552 = vld [vmem:[%s339 + $0x30c] sm:$0xf]
      %v553 = vld [vmem:[%s339 + $0x310] sm:$0xf]
      %v554 = vld [vmem:[%s339 + $0x314] sm:$0xf]
      %v555 = vld [vmem:[%s339 + $0x318] sm:$0xf]
      %v556 = vld [vmem:[%s339 + $0x31c] sm:$0xf]
      %v557 = vld [vmem:[%s339 + $0x320] sm:$0xf]
      %v558 = vld [vmem:[%s339 + $0x324] sm:$0xf]
      %v559 = vld [vmem:[%s339 + $0x328] sm:$0xf]
      %v560 = vld [vmem:[%s339 + $0x32c] sm:$0xf]
      %v561 = vld [vmem:[%s339 + $0x330] sm:$0xf]
      %v562 = vld [vmem:[%s339 + $0x334] sm:$0xf]
      %v563 = vld [vmem:[%s339 + $0x338] sm:$0xf]
      %v564 = vld [vmem:[%s339 + $0x33c] sm:$0xf]
      %v565 = vld [vmem:[%s339 + $0x340] sm:$0xf]
      %v566 = vld [vmem:[%s339 + $0x344] sm:$0xf]
      %v567 = vld [vmem:[%s339 + $0x348] sm:$0xf]
      %v568 = vld [vmem:[%s339 + $0x34c] sm:$0xf]
      %v569 = vld [vmem:[%s339 + $0x350] sm:$0xf]
      %v570 = vld [vmem:[%s339 + $0x354] sm:$0xf]
      %v571 = vld [vmem:[%s339 + $0x358] sm:$0xf]
      %v572 = vld [vmem:[%s339 + $0x35c] sm:$0xf]
      %v573 = vld [vmem:[%s339 + $0x360] sm:$0xf]
      %v574 = vld [vmem:[%s339 + $0x364] sm:$0xf]
      %v575 = vld [vmem:[%s339 + $0x368] sm:$0xf]
      %v576 = vld [vmem:[%s339 + $0x36c] sm:$0xf]
      %v577 = vld [vmem:[%s339 + $0x370] sm:$0xf]
      %v578 = vld [vmem:[%s339 + $0x374] sm:$0xf]
      %v579 = vld [vmem:[%s339 + $0x378] sm:$0xf]
      %v580 = vld [vmem:[%s339 + $0x37c] sm:$0xf]
      %v581 = vld [vmem:[%s339 + $0x380] sm:$0xf]
      %v582 = vld [vmem:[%s339 + $0x384] sm:$0xf]
      %v583 = vld [vmem:[%s339 + $0x388] sm:$0xf]
      %v584 = vld [vmem:[%s339 + $0x38c] sm:$0xf]
      %v585 = vld [vmem:[%s339 + $0x390] sm:$0xf]
      %v586 = vld [vmem:[%s339 + $0x394] sm:$0xf]
      %v587 = vld [vmem:[%s339 + $0x398] sm:$0xf]
      %v588 = vld [vmem:[%s339 + $0x39c] sm:$0xf]
      %v589 = vld [vmem:[%s339 + $0x3a0] sm:$0xf]
      %v590 = vld [vmem:[%s339 + $0x3a4] sm:$0xf]
      %v591 = vld [vmem:[%s339 + $0x3a8] sm:$0xf]
      %v592 = vld [vmem:[%s339 + $0x3ac] sm:$0xf]
      %v593 = vld [vmem:[%s339 + $0x3b0] sm:$0xf]
      %v594 = vld [vmem:[%s339 + $0x3b4] sm:$0xf]
      %v595 = vld [vmem:[%s339 + $0x3b8] sm:$0xf]
      %v596 = vld [vmem:[%s339 + $0x3bc] sm:$0xf]
      %v597 = vld [vmem:[%s339 + $0x3c0] sm:$0xf]
      %v598 = vld [vmem:[%s339 + $0x3c4] sm:$0xf]
      %v599 = vld [vmem:[%s339 + $0x3c8] sm:$0xf]
      %v600 = vld [vmem:[%s339 + $0x3cc] sm:$0xf]
      %v601 = vld [vmem:[%s339 + $0x3d0] sm:$0xf]
      %v602 = vld [vmem:[%s339 + $0x3d4] sm:$0xf]
      %v603 = vld [vmem:[%s339 + $0x3d8] sm:$0xf]
      %v604 = vld [vmem:[%s339 + $0x3dc] sm:$0xf]
      %v605 = vld [vmem:[%s339 + $0x3e0] sm:$0xf]
      %v606 = vld [vmem:[%s339 + $0x3e4] sm:$0xf]
      %v607 = vld [vmem:[%s339 + $0x3e8] sm:$0xf]
      %v608 = vld [vmem:[%s339 + $0x3ec] sm:$0xf]
      %v609 = vld [vmem:[%s339 + $0x3f0] sm:$0xf]
      %v610 = vld [vmem:[%s339 + $0x3f4] sm:$0xf]
      %v611 = vld [vmem:[%s339 + $0x3f8] sm:$0xf]
      %v612 = vld [vmem:[%s339 + $0x3fc] sm:$0xf]
      %v613 = vld [vmem:[%s339 + $0x400] sm:$0xf]
      %v614 = vld [vmem:[%s339 + $0x404] sm:$0xf]
      %v615 = vld [vmem:[%s339 + $0x408] sm:$0xf]
      %v616 = vld [vmem:[%s339 + $0x40c] sm:$0xf]
      %v617 = vld [vmem:[%s339 + $0x410] sm:$0xf]
      %v618 = vld [vmem:[%s339 + $0x414] sm:$0xf]
      %v619 = vld [vmem:[%s339 + $0x418] sm:$0xf]
      %v620 = vld [vmem:[%s339 + $0x41c] sm:$0xf]
      %v621 = vld [vmem:[%s339 + $0x420] sm:$0xf]
      %v622 = vld [vmem:[%s339 + $0x424] sm:$0xf]
      %v623 = vld [vmem:[%s339 + $0x428] sm:$0xf]
      %v624 = vld [vmem:[%s339 + $0x42c] sm:$0xf]
      %v625 = vld [vmem:[%s339 + $0x430] sm:$0xf]
      %v626 = vld [vmem:[%s339 + $0x434] sm:$0xf]
      %v627 = vld [vmem:[%s339 + $0x438] sm:$0xf]
      %v628 = vld [vmem:[%s339 + $0x43c] sm:$0xf]
      %v629 = vld [vmem:[%s339 + $0x440] sm:$0xf]
      %v630 = vld [vmem:[%s339 + $0x444] sm:$0xf]
      %v631 = vld [vmem:[%s339 + $0x448] sm:$0xf]
      %v632 = vld [vmem:[%s339 + $0x44c] sm:$0xf]
      %v633 = vld [vmem:[%s339 + $0x450] sm:$0xf]
      %v634 = vld [vmem:[%s339 + $0x454] sm:$0xf]
      %v635 = vld [vmem:[%s339 + $0x458] sm:$0xf]
      %v636 = vld [vmem:[%s339 + $0x45c] sm:$0xf]
      %v637 = vld [vmem:[%s339 + $0x460] sm:$0xf]
      %v638 = vld [vmem:[%s339 + $0x464] sm:$0xf]
      %v639 = vld [vmem:[%s339 + $0x468] sm:$0xf]
      %v640 = vld [vmem:[%s339 + $0x46c] sm:$0xf]
      %v641 = vld [vmem:[%s339 + $0x470] sm:$0xf]
      %v642 = vld [vmem:[%s339 + $0x474] sm:$0xf]
      %v643 = vld [vmem:[%s339 + $0x478] sm:$0xf]
      %v644 = vld [vmem:[%s339 + $0x47c] sm:$0xf]
      %v645 = vld [vmem:[%s339 + $0x480] sm:$0xf]
      %v646 = vld [vmem:[%s339 + $0x484] sm:$0xf]
      %v647 = vld [vmem:[%s339 + $0x488] sm:$0xf]
      %v648 = vld [vmem:[%s339 + $0x48c] sm:$0xf]
      %v649 = vld [vmem:[%s339 + $0x490] sm:$0xf]
      %v650 = vld [vmem:[%s339 + $0x494] sm:$0xf]
      %v651 = vld [vmem:[%s339 + $0x498] sm:$0xf]
      %v652 = vld [vmem:[%s339 + $0x49c] sm:$0xf]
      %v653 = vld [vmem:[%s339 + $0x4a0] sm:$0xf]
      %v654 = vld [vmem:[%s339 + $0x4a4] sm:$0xf]
      %v655 = vld [vmem:[%s339 + $0x4a8] sm:$0xf]
      %v656 = vld [vmem:[%s339 + $0x4ac] sm:$0xf]
      %v657 = vld [vmem:[%s339 + $0x4b0] sm:$0xf]
      %v658 = vld [vmem:[%s339 + $0x4b4] sm:$0xf]
      %v659 = vld [vmem:[%s339 + $0x4b8] sm:$0xf]
      %v660 = vld [vmem:[%s339 + $0x4bc] sm:$0xf]
      %v661 = vld [vmem:[%s339 + $0x4c0] sm:$0xf]
      %v662 = vld [vmem:[%s339 + $0x4c4] sm:$0xf]
      %v663 = vld [vmem:[%s339 + $0x4c8] sm:$0xf]
      %v664 = vld [vmem:[%s339 + $0x4cc] sm:$0xf]
      %v665 = vld [vmem:[%s339 + $0x4d0] sm:$0xf]
      %v666 = vld [vmem:[%s339 + $0x4d4] sm:$0xf]
      %v667 = vld [vmem:[%s339 + $0x4d8] sm:$0xf]
      %v668 = vld [vmem:[%s339 + $0x4dc] sm:$0xf]
      %v669 = vld [vmem:[%s339 + $0x4e0] sm:$0xf]
      %v670 = vld [vmem:[%s339 + $0x4e4] sm:$0xf]
      %v671 = vld [vmem:[%s339 + $0x4e8] sm:$0xf]
      %v672 = vld [vmem:[%s339 + $0x4ec] sm:$0xf]
      %v673 = vld [vmem:[%s339 + $0x4f0] sm:$0xf]
      %v674 = vld [vmem:[%s339 + $0x4f4] sm:$0xf]
      %v675 = vld [vmem:[%s339 + $0x4f8] sm:$0xf]
      %v676 = vld [vmem:[%s339 + $0x4fc] sm:$0xf]
      %v677 = vld [vmem:[%s339 + $0x500] sm:$0xf]
      %v678 = vld [vmem:[%s339 + $0x504] sm:$0xf]
      %v679 = vld [vmem:[%s339 + $0x508] sm:$0xf]
      %v680 = vld [vmem:[%s339 + $0x50c] sm:$0xf]
      %v681 = vld [vmem:[%s339 + $0x510] sm:$0xf]
      %v682 = vld [vmem:[%s339 + $0x514] sm:$0xf]
      %v683 = vld [vmem:[%s339 + $0x518] sm:$0xf]
      %v684 = vld [vmem:[%s339 + $0x51c] sm:$0xf]
      %v685 = vld [vmem:[%s339 + $0x520] sm:$0xf]
      %v686 = vld [vmem:[%s339 + $0x524] sm:$0xf]
      %v687 = vld [vmem:[%s339 + $0x528] sm:$0xf]
      %v688 = vld [vmem:[%s339 + $0x52c] sm:$0xf]
      %v689 = vld [vmem:[%s339 + $0x530] sm:$0xf]
      %v690 = vld [vmem:[%s339 + $0x534] sm:$0xf]
      %v691 = vld [vmem:[%s339 + $0x538] sm:$0xf]
      %v692 = vld [vmem:[%s339 + $0x53c] sm:$0xf]
      %v693 = vld [vmem:[%s339 + $0x540] sm:$0xf]
      %v694 = vld [vmem:[%s339 + $0x544] sm:$0xf]
      %v695 = vld [vmem:[%s339 + $0x548] sm:$0xf]
      %v696 = vld [vmem:[%s339 + $0x54c] sm:$0xf]
      %v697 = vld [vmem:[%s339 + $0x550] sm:$0xf]
      %v698 = vld [vmem:[%s339 + $0x554] sm:$0xf]
      %v699 = vld [vmem:[%s339 + $0x558] sm:$0xf]
      %v700 = vld [vmem:[%s339 + $0x55c] sm:$0xf]
      %v701 = vld [vmem:[%s339 + $0x560] sm:$0xf]
      %v702 = vld [vmem:[%s339 + $0x564] sm:$0xf]
      %v703 = vld [vmem:[%s339 + $0x568] sm:$0xf]
      %v704 = vld [vmem:[%s339 + $0x56c] sm:$0xf]
      %v705 = vld [vmem:[%s339 + $0x570] sm:$0xf]
      %v706 = vld [vmem:[%s339 + $0x574] sm:$0xf]
      %v707 = vld [vmem:[%s339 + $0x578] sm:$0xf]
      %v708 = vld [vmem:[%s339 + $0x57c] sm:$0xf]
      %v709 = vld [vmem:[%s339 + $0x580] sm:$0xf]
      %v710 = vld [vmem:[%s339 + $0x584] sm:$0xf]
      %v711 = vld [vmem:[%s339 + $0x588] sm:$0xf]
      %v712 = vld [vmem:[%s339 + $0x58c] sm:$0xf]
      %v713 = vld [vmem:[%s339 + $0x590] sm:$0xf]
      %v714 = vld [vmem:[%s339 + $0x594] sm:$0xf]
      %v715 = vld [vmem:[%s339 + $0x598] sm:$0xf]
      %v716 = vld [vmem:[%s339 + $0x59c] sm:$0xf]
      %v717 = vld [vmem:[%s339 + $0x5a0] sm:$0xf]
      %v718 = vld [vmem:[%s339 + $0x5a4] sm:$0xf]
      %v719 = vld [vmem:[%s339 + $0x5a8] sm:$0xf]
      %v720 = vld [vmem:[%s339 + $0x5ac] sm:$0xf]
      %v721 = vld [vmem:[%s339 + $0x5b0] sm:$0xf]
      %v722 = vld [vmem:[%s339 + $0x5b4] sm:$0xf]
      %v723 = vld [vmem:[%s339 + $0x5b8] sm:$0xf]
      %v724 = vld [vmem:[%s339 + $0x5bc] sm:$0xf]
      %v725 = vld [vmem:[%s339 + $0x5c0] sm:$0xf]
      %v726 = vld [vmem:[%s339 + $0x5c4] sm:$0xf]
      %v727 = vld [vmem:[%s339 + $0x5c8] sm:$0xf]
      %v728 = vld [vmem:[%s339 + $0x5cc] sm:$0xf]
      %v729 = vld [vmem:[%s339 + $0x5d0] sm:$0xf]
      %v730 = vld [vmem:[%s339 + $0x5d4] sm:$0xf]
      %v731 = vld [vmem:[%s339 + $0x5d8] sm:$0xf]
      %v732 = vld [vmem:[%s339 + $0x5dc] sm:$0xf]
      %v733 = vld [vmem:[%s339 + $0x5e0] sm:$0xf]
      %v734 = vld [vmem:[%s339 + $0x5e4] sm:$0xf]
      %v735 = vld [vmem:[%s339 + $0x5e8] sm:$0xf]
      %v736 = vld [vmem:[%s339 + $0x5ec] sm:$0xf]
      %v737 = vld [vmem:[%s339 + $0x5f0] sm:$0xf]
      %v738 = vld [vmem:[%s339 + $0x5f4] sm:$0xf]
      %v739 = vld [vmem:[%s339 + $0x5f8] sm:$0xf]
      %v740 = vld [vmem:[%s339 + $0x5fc] sm:$0xf]
      %v741 = vld [vmem:[%s339 + $0x600] sm:$0xf]
      %v742 = vld [vmem:[%s339 + $0x604] sm:$0xf]
      %v743 = vld [vmem:[%s339 + $0x608] sm:$0xf]
      %v744 = vld [vmem:[%s339 + $0x60c] sm:$0xf]
      %v745 = vld [vmem:[%s339 + $0x610] sm:$0xf]
      %v746 = vld [vmem:[%s339 + $0x614] sm:$0xf]
      %v747 = vld [vmem:[%s339 + $0x618] sm:$0xf]
      %v748 = vld [vmem:[%s339 + $0x61c] sm:$0xf]
      %v749 = vld [vmem:[%s339 + $0x620] sm:$0xf]
      %v750 = vld [vmem:[%s339 + $0x624] sm:$0xf]
      %v751 = vld [vmem:[%s339 + $0x628] sm:$0xf]
      %v752 = vld [vmem:[%s339 + $0x62c] sm:$0xf]
      %v753 = vld [vmem:[%s339 + $0x630] sm:$0xf]
      %v754 = vld [vmem:[%s339 + $0x634] sm:$0xf]
      %v755 = vld [vmem:[%s339 + $0x638] sm:$0xf]
      %v756 = vld [vmem:[%s339 + $0x63c] sm:$0xf]
      %v757 = vld [vmem:[%s339 + $0x640] sm:$0xf]
      %v758 = vld [vmem:[%s339 + $0x644] sm:$0xf]
      %v759 = vld [vmem:[%s339 + $0x648] sm:$0xf]
      %v760 = vld [vmem:[%s339 + $0x64c] sm:$0xf]
      %v761 = vld [vmem:[%s339 + $0x650] sm:$0xf]
      %v762 = vld [vmem:[%s339 + $0x654] sm:$0xf]
      %v763 = vld [vmem:[%s339 + $0x658] sm:$0xf]
      %v764 = vld [vmem:[%s339 + $0x65c] sm:$0xf]
      %v765 = vld [vmem:[%s339 + $0x660] sm:$0xf]
      %v766 = vld [vmem:[%s339 + $0x664] sm:$0xf]
      %v767 = vld [vmem:[%s339 + $0x668] sm:$0xf]
      %v768 = vld [vmem:[%s339 + $0x66c] sm:$0xf]
      %v769 = vld [vmem:[%s339 + $0x670] sm:$0xf]
      %v770 = vld [vmem:[%s339 + $0x674] sm:$0xf]
      %v771 = vld [vmem:[%s339 + $0x678] sm:$0xf]
      %v772 = vld [vmem:[%s339 + $0x67c] sm:$0xf]
      %v773 = vld [vmem:[%s339 + $0x680] sm:$0xf]
      %v774 = vld [vmem:[%s339 + $0x684] sm:$0xf]
      %v775 = vld [vmem:[%s339 + $0x688] sm:$0xf]
      %v776 = vld [vmem:[%s339 + $0x68c] sm:$0xf]
      %v777 = vld [vmem:[%s339 + $0x690] sm:$0xf]
      %v778 = vld [vmem:[%s339 + $0x694] sm:$0xf]
      %v779 = vld [vmem:[%s339 + $0x698] sm:$0xf]
      %v780 = vld [vmem:[%s339 + $0x69c] sm:$0xf]
      %v781 = vld [vmem:[%s339 + $0x6a0] sm:$0xf]
      %v782 = vld [vmem:[%s339 + $0x6a4] sm:$0xf]
      %v783 = vld [vmem:[%s339 + $0x6a8] sm:$0xf]
      %v784 = vld [vmem:[%s339 + $0x6ac] sm:$0xf]
      %v785 = vld [vmem:[%s339 + $0x6b0] sm:$0xf]
      %v786 = vld [vmem:[%s339 + $0x6b4] sm:$0xf]
      %v787 = vld [vmem:[%s339 + $0x6b8] sm:$0xf]
      %v788 = vld [vmem:[%s339 + $0x6bc] sm:$0xf]
      %v789 = vld [vmem:[%s339 + $0x6c0] sm:$0xf]
      %v790 = vld [vmem:[%s339 + $0x6c4] sm:$0xf]
      %v791 = vld [vmem:[%s339 + $0x6c8] sm:$0xf]
      %v792 = vld [vmem:[%s339 + $0x6cc] sm:$0xf]
      %v793 = vld [vmem:[%s339 + $0x6d0] sm:$0xf]
      %v794 = vld [vmem:[%s339 + $0x6d4] sm:$0xf]
      %v795 = vld [vmem:[%s339 + $0x6d8] sm:$0xf]
      %v796 = vld [vmem:[%s339 + $0x6dc] sm:$0xf]
      %v797 = vld [vmem:[%s339 + $0x6e0] sm:$0xf]
      %v798 = vld [vmem:[%s339 + $0x6e4] sm:$0xf]
      %v799 = vld [vmem:[%s339 + $0x6e8] sm:$0xf]
      %v800 = vld [vmem:[%s339 + $0x6ec] sm:$0xf]
      %v801 = vld [vmem:[%s339 + $0x6f0] sm:$0xf]
      %v802 = vld [vmem:[%s339 + $0x6f4] sm:$0xf]
      %v803 = vld [vmem:[%s339 + $0x6f8] sm:$0xf]
      %v804 = vld [vmem:[%s339 + $0x6fc] sm:$0xf]
      %v805 = vld [vmem:[%s339 + $0x700] sm:$0xf]
      %v806 = vld [vmem:[%s339 + $0x704] sm:$0xf]
      %v807 = vld [vmem:[%s339 + $0x708] sm:$0xf]
      %v808 = vld [vmem:[%s339 + $0x70c] sm:$0xf]
      %v809 = vld [vmem:[%s339 + $0x710] sm:$0xf]
      %v810 = vld [vmem:[%s339 + $0x714] sm:$0xf]
      %v811 = vld [vmem:[%s339 + $0x718] sm:$0xf]
      %v812 = vld [vmem:[%s339 + $0x71c] sm:$0xf]
      %v813 = vld [vmem:[%s339 + $0x720] sm:$0xf]
      %v814 = vld [vmem:[%s339 + $0x724] sm:$0xf]
      %v815 = vld [vmem:[%s339 + $0x728] sm:$0xf]
      %v816 = vld [vmem:[%s339 + $0x72c] sm:$0xf]
      %v817 = vld [vmem:[%s339 + $0x730] sm:$0xf]
      %v818 = vld [vmem:[%s339 + $0x734] sm:$0xf]
      %v819 = vld [vmem:[%s339 + $0x738] sm:$0xf]
      %v820 = vld [vmem:[%s339 + $0x73c] sm:$0xf]
      %v821 = vld [vmem:[%s339 + $0x740] sm:$0xf]
      %v822 = vld [vmem:[%s339 + $0x744] sm:$0xf]
      %v823 = vld [vmem:[%s339 + $0x748] sm:$0xf]
      %v824 = vld [vmem:[%s339 + $0x74c] sm:$0xf]
      %v825 = vld [vmem:[%s339 + $0x750] sm:$0xf]
      %v826 = vld [vmem:[%s339 + $0x754] sm:$0xf]
      %v827 = vld [vmem:[%s339 + $0x758] sm:$0xf]
      %v828 = vld [vmem:[%s339 + $0x75c] sm:$0xf]
      %v829 = vld [vmem:[%s339 + $0x760] sm:$0xf]
      %v830 = vld [vmem:[%s339 + $0x764] sm:$0xf]
      %v831 = vld [vmem:[%s339 + $0x768] sm:$0xf]
      %v832 = vld [vmem:[%s339 + $0x76c] sm:$0xf]
      %v833 = vld [vmem:[%s339 + $0x770] sm:$0xf]
      %v834 = vld [vmem:[%s339 + $0x774] sm:$0xf]
      %v835 = vld [vmem:[%s339 + $0x778] sm:$0xf]
      %v836 = vld [vmem:[%s339 + $0x77c] sm:$0xf]
      %v837 = vld [vmem:[%s339 + $0x780] sm:$0xf]
      %v838 = vld [vmem:[%s339 + $0x784] sm:$0xf]
      %v839 = vld [vmem:[%s339 + $0x788] sm:$0xf]
      %v840 = vld [vmem:[%s339 + $0x78c] sm:$0xf]
      %v841 = vld [vmem:[%s339 + $0x790] sm:$0xf]
      %v842 = vld [vmem:[%s339 + $0x794] sm:$0xf]
      %v843 = vld [vmem:[%s339 + $0x798] sm:$0xf]
      %v844 = vld [vmem:[%s339 + $0x79c] sm:$0xf]
      %v845 = vld [vmem:[%s339 + $0x7a0] sm:$0xf]
      %v846 = vld [vmem:[%s339 + $0x7a4] sm:$0xf]
      %v847 = vld [vmem:[%s339 + $0x7a8] sm:$0xf]
      %v848 = vld [vmem:[%s339 + $0x7ac] sm:$0xf]
      %v849 = vld [vmem:[%s339 + $0x7b0] sm:$0xf]
      %v850 = vld [vmem:[%s339 + $0x7b4] sm:$0xf]
      %v851 = vld [vmem:[%s339 + $0x7b8] sm:$0xf]
      %v852 = vld [vmem:[%s339 + $0x7bc] sm:$0xf]
      %v853 = vld [vmem:[%s339 + $0x7c0] sm:$0xf]
      %v854 = vld [vmem:[%s339 + $0x7c4] sm:$0xf]
      %v855 = vld [vmem:[%s339 + $0x7c8] sm:$0xf]
      %v856 = vld [vmem:[%s339 + $0x7cc] sm:$0xf]
      %v857 = vld [vmem:[%s339 + $0x7d0] sm:$0xf]
      %v858 = vld [vmem:[%s339 + $0x7d4] sm:$0xf]
      %v859 = vld [vmem:[%s339 + $0x7d8] sm:$0xf]
      %v860 = vld [vmem:[%s339 + $0x7dc] sm:$0xf]
      %v861 = vld [vmem:[%s339 + $0x7e0] sm:$0xf]
      %v862 = vld [vmem:[%s339 + $0x7e4] sm:$0xf]
      %v863 = vld [vmem:[%s339 + $0x7e8] sm:$0xf]
      %v864 = vld [vmem:[%s339 + $0x7ec] sm:$0xf]
      %v865 = vld [vmem:[%s339 + $0x7f0] sm:$0xf]
      %v866 = vld [vmem:[%s339 + $0x7f4] sm:$0xf]
      %v867 = vld [vmem:[%s339 + $0x7f8] sm:$0xf]
      %v868 = vld [vmem:[%s339 + $0x7fc] sm:$0xf]
      %v869 = vld [vmem:[%s339 + $0x800] sm:$0xf]
      %v870 = vld [vmem:[%s339 + $0x804] sm:$0xf]
      %v871 = vld [vmem:[%s339 + $0x808] sm:$0xf]
      %v872 = vld [vmem:[%s339 + $0x80c] sm:$0xf]
      %v873 = vld [vmem:[%s339 + $0x810] sm:$0xf]
      %v874 = vld [vmem:[%s339 + $0x814] sm:$0xf]
      %v875 = vld [vmem:[%s339 + $0x818] sm:$0xf]
      %v876 = vld [vmem:[%s339 + $0x81c] sm:$0xf]
      %v877 = vld [vmem:[%s339 + $0x820] sm:$0xf]
      %v878 = vld [vmem:[%s339 + $0x824] sm:$0xf]
      %v879 = vld [vmem:[%s339 + $0x828] sm:$0xf]
      %v880 = vld [vmem:[%s339 + $0x82c] sm:$0xf]
      %v881 = vld [vmem:[%s339 + $0x830] sm:$0xf]
      %v882 = vld [vmem:[%s339 + $0x834] sm:$0xf]
      %v883 = vld [vmem:[%s339 + $0x838] sm:$0xf]
      %v884 = vld [vmem:[%s339 + $0x83c] sm:$0xf]
      %v885 = vld [vmem:[%s339 + $0x840] sm:$0xf]
      %v886 = vld [vmem:[%s339 + $0x844] sm:$0xf]
      %v887 = vld [vmem:[%s339 + $0x848] sm:$0xf]
      %v888 = vld [vmem:[%s339 + $0x84c] sm:$0xf]
      %v889 = vld [vmem:[%s339 + $0x850] sm:$0xf]
      %v890 = vld [vmem:[%s339 + $0x854] sm:$0xf]
      %v891 = vld [vmem:[%s339 + $0x858] sm:$0xf]
      %v892 = vld [vmem:[%s339 + $0x85c] sm:$0xf]
      %v893 = vld [vmem:[%s339 + $0x860] sm:$0xf]
      %v894 = vld [vmem:[%s339 + $0x864] sm:$0xf]
      %v895 = vld [vmem:[%s339 + $0x868] sm:$0xf]
      %v896 = vld [vmem:[%s339 + $0x86c] sm:$0xf]
      %v897 = vld [vmem:[%s339 + $0x870] sm:$0xf]
      %v898 = vld [vmem:[%s339 + $0x874] sm:$0xf]
      %v899 = vld [vmem:[%s339 + $0x878] sm:$0xf]
      %v900 = vld [vmem:[%s339 + $0x87c] sm:$0xf]
      %v901 = vld [vmem:[%s339 + $0x880] sm:$0xf]
      %v902 = vld [vmem:[%s339 + $0x884] sm:$0xf]
      %v903 = vld [vmem:[%s339 + $0x888] sm:$0xf]
      %v904 = vld [vmem:[%s339 + $0x88c] sm:$0xf]
      %v905 = vld [vmem:[%s339 + $0x890] sm:$0xf]
      %v906 = vld [vmem:[%s339 + $0x894] sm:$0xf]
      %v907 = vld [vmem:[%s339 + $0x898] sm:$0xf]
      %v908 = vld [vmem:[%s339 + $0x89c] sm:$0xf]
      %v909 = vld [vmem:[%s339 + $0x8a0] sm:$0xf]
      %v910 = vld [vmem:[%s339 + $0x8a4] sm:$0xf]
      %v911 = vld [vmem:[%s339 + $0x8a8] sm:$0xf]
      %v912 = vld [vmem:[%s339 + $0x8ac] sm:$0xf]
      %v913 = vld [vmem:[%s339 + $0x8b0] sm:$0xf]
      %v914 = vld [vmem:[%s339 + $0x8b4] sm:$0xf]
      %v915 = vld [vmem:[%s339 + $0x8b8] sm:$0xf]
      %v916 = vld [vmem:[%s339 + $0x8bc] sm:$0xf]
      %v917 = vld [vmem:[%s339 + $0x8c0] sm:$0xf]
      %v918 = vld [vmem:[%s339 + $0x8c4] sm:$0xf]
      %v919 = vld [vmem:[%s339 + $0x8c8] sm:$0xf]
      %v920 = vld [vmem:[%s339 + $0x8cc] sm:$0xf]
      %v921 = vld [vmem:[%s339 + $0x8d0] sm:$0xf]
      %v922 = vld [vmem:[%s339 + $0x8d4] sm:$0xf]
      %v923 = vld [vmem:[%s339 + $0x8d8] sm:$0xf]
      %v924 = vld [vmem:[%s339 + $0x8dc] sm:$0xf]
      %v925 = vld [vmem:[%s339 + $0x8e0] sm:$0xf]
      %v926 = vld [vmem:[%s339 + $0x8e4] sm:$0xf]
      %v927 = vld [vmem:[%s339 + $0x8e8] sm:$0xf]
      %v928 = vld [vmem:[%s339 + $0x8ec] sm:$0xf]
      %v929 = vld [vmem:[%s339 + $0x8f0] sm:$0xf]
      %v930 = vld [vmem:[%s339 + $0x8f4] sm:$0xf]
      %v931 = vld [vmem:[%s339 + $0x8f8] sm:$0xf]
      %v932 = vld [vmem:[%s339 + $0x8fc] sm:$0xf]
      %v933 = vld [vmem:[%s339 + $0x900] sm:$0xf]
      %v934 = vld [vmem:[%s339 + $0x904] sm:$0xf]
      %v935 = vld [vmem:[%s339 + $0x908] sm:$0xf]
      %v936 = vld [vmem:[%s339 + $0x90c] sm:$0xf]
      %v937 = vld [vmem:[%s339 + $0x910] sm:$0xf]
      %v938 = vld [vmem:[%s339 + $0x914] sm:$0xf]
      %v939 = vld [vmem:[%s339 + $0x918] sm:$0xf]
      %v940 = vld [vmem:[%s339 + $0x91c] sm:$0xf]
      %v941 = vld [vmem:[%s339 + $0x920] sm:$0xf]
      %v942 = vld [vmem:[%s339 + $0x924] sm:$0xf]
      %v943 = vld [vmem:[%s339 + $0x928] sm:$0xf]
      %v944 = vld [vmem:[%s339 + $0x92c] sm:$0xf]
      %v945 = vld [vmem:[%s339 + $0x930] sm:$0xf]
      %v946 = vld [vmem:[%s339 + $0x934] sm:$0xf]
      %v947 = vld [vmem:[%s339 + $0x938] sm:$0xf]
      %v948 = vld [vmem:[%s339 + $0x93c] sm:$0xf]
      %v949 = vld [vmem:[%s339 + $0x940] sm:$0xf]
      %v950 = vld [vmem:[%s339 + $0x944] sm:$0xf]
      %v951 = vld [vmem:[%s339 + $0x948] sm:$0xf]
      %v952 = vld [vmem:[%s339 + $0x94c] sm:$0xf]
      %v953 = vld [vmem:[%s339 + $0x950] sm:$0xf]
      %v954 = vld [vmem:[%s339 + $0x954] sm:$0xf]
      %v955 = vld [vmem:[%s339 + $0x958] sm:$0xf]
      %v956 = vld [vmem:[%s339 + $0x95c] sm:$0xf]
      %v957 = vld [vmem:[%s339 + $0x960] sm:$0xf]
      %v958 = vld [vmem:[%s339 + $0x964] sm:$0xf]
      %v959 = vld [vmem:[%s339 + $0x968] sm:$0xf]
      %v960 = vld [vmem:[%s339 + $0x96c] sm:$0xf]
      %v961 = vld [vmem:[%s339 + $0x970] sm:$0xf]
      %v962 = vld [vmem:[%s339 + $0x974] sm:$0xf]
      %v963 = vld [vmem:[%s339 + $0x978] sm:$0xf]
      %v964 = vld [vmem:[%s339 + $0x97c] sm:$0xf]
      %v965 = vld [vmem:[%s339 + $0x980] sm:$0xf]
      %v966 = vld [vmem:[%s339 + $0x984] sm:$0xf]
      %v967 = vld [vmem:[%s339 + $0x988] sm:$0xf]
      %v968 = vld [vmem:[%s339 + $0x98c] sm:$0xf]
      %v969 = vld [vmem:[%s339 + $0x990] sm:$0xf]
      %v970 = vld [vmem:[%s339 + $0x994] sm:$0xf]
      %v971 = vld [vmem:[%s339 + $0x998] sm:$0xf]
      %v972 = vld [vmem:[%s339 + $0x99c] sm:$0xf]
      %v973 = vld [vmem:[%s339 + $0x9a0] sm:$0xf]
      %v974 = vld [vmem:[%s339 + $0x9a4] sm:$0xf]
      %v975 = vld [vmem:[%s339 + $0x9a8] sm:$0xf]
      %v976 = vld [vmem:[%s339 + $0x9ac] sm:$0xf]
      %v977 = vld [vmem:[%s339 + $0x9b0] sm:$0xf]
      %v978 = vld [vmem:[%s339 + $0x9b4] sm:$0xf]
      %v979 = vld [vmem:[%s339 + $0x9b8] sm:$0xf]
      %v980 = vld [vmem:[%s339 + $0x9bc] sm:$0xf]
      %v981 = vld [vmem:[%s339 + $0x9c0] sm:$0xf]
      %v982 = vld [vmem:[%s339 + $0x9c4] sm:$0xf]
      %v983 = vld [vmem:[%s339 + $0x9c8] sm:$0xf]
      %v984 = vld [vmem:[%s339 + $0x9cc] sm:$0xf]
      %v985 = vld [vmem:[%s339 + $0x9d0] sm:$0xf]
      %v986 = vld [vmem:[%s339 + $0x9d4] sm:$0xf]
      %v987 = vld [vmem:[%s339 + $0x9d8] sm:$0xf]
      %v988 = vld [vmem:[%s339 + $0x9dc] sm:$0xf]
      %v989 = vld [vmem:[%s339 + $0x9e0] sm:$0xf]
      %v990 = vld [vmem:[%s339 + $0x9e4] sm:$0xf]
      %v991 = vld [vmem:[%s339 + $0x9e8] sm:$0xf]
      %v992 = vld [vmem:[%s339 + $0x9ec] sm:$0xf]
      %v993 = vld [vmem:[%s339 + $0x9f0] sm:$0xf]
      %v994 = vld [vmem:[%s339 + $0x9f4] sm:$0xf]
      %v995 = vld [vmem:[%s339 + $0x9f8] sm:$0xf]
      %v996 = vld [vmem:[%s339 + $0x9fc] sm:$0xf]
      %v997 = vld [vmem:[%s339 + $0xa00] sm:$0xf]
      %v998 = vld [vmem:[%s339 + $0xa04] sm:$0xf]
      %v999 = vld [vmem:[%s339 + $0xa08] sm:$0xf]
      %v1000 = vld [vmem:[%s339 + $0xa0c] sm:$0xf]
      %v1001 = vld [vmem:[%s339 + $0xa10] sm:$0xf]
      %v1002 = vld [vmem:[%s339 + $0xa14] sm:$0xf]
      %v1003 = vld [vmem:[%s339 + $0xa18] sm:$0xf]
      %v1004 = vld [vmem:[%s339 + $0xa1c] sm:$0xf]
      %v1005 = vld [vmem:[%s339 + $0xa20] sm:$0xf]
      %v1006 = vld [vmem:[%s339 + $0xa24] sm:$0xf]
      %v1007 = vld [vmem:[%s339 + $0xa28] sm:$0xf]
      %v1008 = vld [vmem:[%s339 + $0xa2c] sm:$0xf]
      %v1009 = vld [vmem:[%s339 + $0xa30] sm:$0xf]
      %v1010 = vld [vmem:[%s339 + $0xa34] sm:$0xf]
      %v1011 = vld [vmem:[%s339 + $0xa38] sm:$0xf]
      %v1012 = vld [vmem:[%s339 + $0xa3c] sm:$0xf]
      %v1013 = vld [vmem:[%s339 + $0xa40] sm:$0xf]
      %v1014 = vld [vmem:[%s339 + $0xa44] sm:$0xf]
      %v1015 = vld [vmem:[%s339 + $0xa48] sm:$0xf]
      %v1016 = vld [vmem:[%s339 + $0xa4c] sm:$0xf]
      %v1017 = vld [vmem:[%s339 + $0xa50] sm:$0xf]
      %v1018 = vld [vmem:[%s339 + $0xa54] sm:$0xf]
      %v1019 = vld [vmem:[%s339 + $0xa58] sm:$0xf]
      %v1020 = vld [vmem:[%s339 + $0xa5c] sm:$0xf]
      %v1021 = vld [vmem:[%s339 + $0xa60] sm:$0xf]
      %v1022 = vld [vmem:[%s339 + $0xa64] sm:$0xf]
      %v1023 = vld [vmem:[%s339 + $0xa68] sm:$0xf]
      %v1024 = vld [vmem:[%s339 + $0xa6c] sm:$0xf]
      %v1025 = vld [vmem:[%s339 + $0xa70] sm:$0xf]
      %v1026 = vld [vmem:[%s339 + $0xa74] sm:$0xf]
      %v1027 = vld [vmem:[%s339 + $0xa78] sm:$0xf]
      %v1028 = vld [vmem:[%s339 + $0xa7c] sm:$0xf]
      %v1029 = vld [vmem:[%s339 + $0xa80] sm:$0xf]
      %v1030 = vld [vmem:[%s339 + $0xa84] sm:$0xf]
      %v1031 = vld [vmem:[%s339 + $0xa88] sm:$0xf]
      %v1032 = vld [vmem:[%s339 + $0xa8c] sm:$0xf]
      %v1033 = vld [vmem:[%s339 + $0xa90] sm:$0xf]
      %v1034 = vld [vmem:[%s339 + $0xa94] sm:$0xf]
      %v1035 = vld [vmem:[%s339 + $0xa98] sm:$0xf]
      %v1036 = vld [vmem:[%s339 + $0xa9c] sm:$0xf]
      %v1037 = vld [vmem:[%s339 + $0xaa0] sm:$0xf]
      %v1038 = vld [vmem:[%s339 + $0xaa4] sm:$0xf]
      %v1039 = vld [vmem:[%s339 + $0xaa8] sm:$0xf]
      %v1040 = vld [vmem:[%s339 + $0xaac] sm:$0xf]
      %v1041 = vld [vmem:[%s339 + $0xab0] sm:$0xf]
      %v1042 = vld [vmem:[%s339 + $0xab4] sm:$0xf]
      %v1043 = vld [vmem:[%s339 + $0xab8] sm:$0xf]
      %v1044 = vld [vmem:[%s339 + $0xabc] sm:$0xf]
      %v1045 = vld [vmem:[%s339 + $0xac0] sm:$0xf]
      %v1046 = vld [vmem:[%s339 + $0xac4] sm:$0xf]
      %v1047 = vld [vmem:[%s339 + $0xac8] sm:$0xf]
      %v1048 = vld [vmem:[%s339 + $0xacc] sm:$0xf]
      %v1049 = vld [vmem:[%s339 + $0xad0] sm:$0xf]
      %v1050 = vld [vmem:[%s339 + $0xad4] sm:$0xf]
      %v1051 = vld [vmem:[%s339 + $0xad8] sm:$0xf]
      %v1052 = vld [vmem:[%s339 + $0xadc] sm:$0xf]
      %v1053 = vld [vmem:[%s339 + $0xae0] sm:$0xf]
      %v1054 = vld [vmem:[%s339 + $0xae4] sm:$0xf]
      %v1055 = vld [vmem:[%s339 + $0xae8] sm:$0xf]
      %v1056 = vld [vmem:[%s339 + $0xaec] sm:$0xf]
      %v1057 = vld [vmem:[%s339 + $0xaf0] sm:$0xf]
      %v1058 = vld [vmem:[%s339 + $0xaf4] sm:$0xf]
      %v1059 = vld [vmem:[%s339 + $0xaf8] sm:$0xf]
      %v1060 = vld [vmem:[%s339 + $0xafc] sm:$0xf]
      %v1061 = vld [vmem:[%s339 + $0xb00] sm:$0xf]
      %v1062 = vld [vmem:[%s339 + $0xb04] sm:$0xf]
      %v1063 = vld [vmem:[%s339 + $0xb08] sm:$0xf]
      %v1064 = vld [vmem:[%s339 + $0xb0c] sm:$0xf]
      %v1065 = vld [vmem:[%s339 + $0xb10] sm:$0xf]
      %v1066 = vld [vmem:[%s339 + $0xb14] sm:$0xf]
      %v1067 = vld [vmem:[%s339 + $0xb18] sm:$0xf]
      %v1068 = vld [vmem:[%s339 + $0xb1c] sm:$0xf]
      %v1069 = vld [vmem:[%s339 + $0xb20] sm:$0xf]
      %v1070 = vld [vmem:[%s339 + $0xb24] sm:$0xf]
      %v1071 = vld [vmem:[%s339 + $0xb28] sm:$0xf]
      %v1072 = vld [vmem:[%s339 + $0xb2c] sm:$0xf]
      %v1073 = vld [vmem:[%s339 + $0xb30] sm:$0xf]
      %v1074 = vld [vmem:[%s339 + $0xb34] sm:$0xf]
      %v1075 = vld [vmem:[%s339 + $0xb38] sm:$0xf]
      %v1076 = vld [vmem:[%s339 + $0xb3c] sm:$0xf]
      %v1077 = vld [vmem:[%s339 + $0xb40] sm:$0xf]
      %v1078 = vld [vmem:[%s339 + $0xb44] sm:$0xf]
      %v1079 = vld [vmem:[%s339 + $0xb48] sm:$0xf]
      %v1080 = vld [vmem:[%s339 + $0xb4c] sm:$0xf]
      %v1081 = vld [vmem:[%s339 + $0xb50] sm:$0xf]
      %v1082 = vld [vmem:[%s339 + $0xb54] sm:$0xf]
      %v1083 = vld [vmem:[%s339 + $0xb58] sm:$0xf]
      %v1084 = vld [vmem:[%s339 + $0xb5c] sm:$0xf]
      %v1085 = vld [vmem:[%s339 + $0xb60] sm:$0xf]
      %v1086 = vld [vmem:[%s339 + $0xb64] sm:$0xf]
      %v1087 = vld [vmem:[%s339 + $0xb68] sm:$0xf]
      %v1088 = vld [vmem:[%s339 + $0xb6c] sm:$0xf]
      %v1089 = vld [vmem:[%s339 + $0xb70] sm:$0xf]
      %v1090 = vld [vmem:[%s339 + $0xb74] sm:$0xf]
      %v1091 = vld [vmem:[%s339 + $0xb78] sm:$0xf]
      %v1092 = vld [vmem:[%s339 + $0xb7c] sm:$0xf]
      %v1093 = vld [vmem:[%s339 + $0xb80] sm:$0xf]
      %v1094 = vld [vmem:[%s339 + $0xb84] sm:$0xf]
      %v1095 = vld [vmem:[%s339 + $0xb88] sm:$0xf]
      %v1096 = vld [vmem:[%s339 + $0xb8c] sm:$0xf]
      %v1097 = vld [vmem:[%s339 + $0xb90] sm:$0xf]
      %v1098 = vld [vmem:[%s339 + $0xb94] sm:$0xf]
      %v1099 = vld [vmem:[%s339 + $0xb98] sm:$0xf]
      %v1100 = vld [vmem:[%s339 + $0xb9c] sm:$0xf]
      %v1101 = vld [vmem:[%s339 + $0xba0] sm:$0xf]
      %v1102 = vld [vmem:[%s339 + $0xba4] sm:$0xf]
      %v1103 = vld [vmem:[%s339 + $0xba8] sm:$0xf]
      %v1104 = vld [vmem:[%s339 + $0xbac] sm:$0xf]
      %v1105 = vld [vmem:[%s339 + $0xbb0] sm:$0xf]
      %v1106 = vld [vmem:[%s339 + $0xbb4] sm:$0xf]
      %v1107 = vld [vmem:[%s339 + $0xbb8] sm:$0xf]
      %v1108 = vld [vmem:[%s339 + $0xbbc] sm:$0xf]
      %v1109 = vld [vmem:[%s339 + $0xbc0] sm:$0xf]
      %v1110 = vld [vmem:[%s339 + $0xbc4] sm:$0xf]
      %v1111 = vld [vmem:[%s339 + $0xbc8] sm:$0xf]
      %v1112 = vld [vmem:[%s339 + $0xbcc] sm:$0xf]
      %v1113 = vld [vmem:[%s339 + $0xbd0] sm:$0xf]
      %v1114 = vld [vmem:[%s339 + $0xbd4] sm:$0xf]
      %v1115 = vld [vmem:[%s339 + $0xbd8] sm:$0xf]
      %v1116 = vld [vmem:[%s339 + $0xbdc] sm:$0xf]
      %v1117 = vld [vmem:[%s339 + $0xbe0] sm:$0xf]
      %v1118 = vld [vmem:[%s339 + $0xbe4] sm:$0xf]
      %v1119 = vld [vmem:[%s339 + $0xbe8] sm:$0xf]
      %v1120 = vld [vmem:[%s339 + $0xbec] sm:$0xf]
      %v1121 = vld [vmem:[%s339 + $0xbf0] sm:$0xf]
      %v1122 = vld [vmem:[%s339 + $0xbf4] sm:$0xf]
      %v1123 = vld [vmem:[%s339 + $0xbf8] sm:$0xf]
      %v1124 = vld [vmem:[%s339 + $0xbfc] sm:$0xf]
      %v1125 = vld [vmem:[%s339 + $0xc00] sm:$0xf]
      %v1126 = vld [vmem:[%s339 + $0xc04] sm:$0xf]
      %v1127 = vld [vmem:[%s339 + $0xc08] sm:$0xf]
      %v1128 = vld [vmem:[%s339 + $0xc0c] sm:$0xf]
      %v1129 = vld [vmem:[%s339 + $0xc10] sm:$0xf]
      %v1130 = vld [vmem:[%s339 + $0xc14] sm:$0xf]
      %v1131 = vld [vmem:[%s339 + $0xc18] sm:$0xf]
      %v1132 = vld [vmem:[%s339 + $0xc1c] sm:$0xf]
      %v1133 = vld [vmem:[%s339 + $0xc20] sm:$0xf]
      %v1134 = vld [vmem:[%s339 + $0xc24] sm:$0xf]
      %v1135 = vld [vmem:[%s339 + $0xc28] sm:$0xf]
      %v1136 = vld [vmem:[%s339 + $0xc2c] sm:$0xf]
      %v1137 = vld [vmem:[%s339 + $0xc30] sm:$0xf]
      %v1138 = vld [vmem:[%s339 + $0xc34] sm:$0xf]
      %v1139 = vld [vmem:[%s339 + $0xc38] sm:$0xf]
      %v1140 = vld [vmem:[%s339 + $0xc3c] sm:$0xf]
      %v1141 = vld [vmem:[%s339 + $0xc40] sm:$0xf]
      %v1142 = vld [vmem:[%s339 + $0xc44] sm:$0xf]
      %v1143 = vld [vmem:[%s339 + $0xc48] sm:$0xf]
      %v1144 = vld [vmem:[%s339 + $0xc4c] sm:$0xf]
      %v1145 = vld [vmem:[%s339 + $0xc50] sm:$0xf]
      %v1146 = vld [vmem:[%s339 + $0xc54] sm:$0xf]
      %v1147 = vld [vmem:[%s339 + $0xc58] sm:$0xf]
      %v1148 = vld [vmem:[%s339 + $0xc5c] sm:$0xf]
      %v1149 = vld [vmem:[%s339 + $0xc60] sm:$0xf]
      %v1150 = vld [vmem:[%s339 + $0xc64] sm:$0xf]
      %v1151 = vld [vmem:[%s339 + $0xc68] sm:$0xf]
      %v1152 = vld [vmem:[%s339 + $0xc6c] sm:$0xf]
      %v1153 = vld [vmem:[%s339 + $0xc70] sm:$0xf]
      %v1154 = vld [vmem:[%s339 + $0xc74] sm:$0xf]
      %v1155 = vld [vmem:[%s339 + $0xc78] sm:$0xf]
      %v1156 = vld [vmem:[%s339 + $0xc7c] sm:$0xf]
      %v1157 = vld [vmem:[%s339 + $0xc80] sm:$0xf]
      %v1158 = vld [vmem:[%s339 + $0xc84] sm:$0xf]
      %v1159 = vld [vmem:[%s339 + $0xc88] sm:$0xf]
      %v1160 = vld [vmem:[%s339 + $0xc8c] sm:$0xf]
      %v1161 = vld [vmem:[%s339 + $0xc90] sm:$0xf]
      %v1162 = vld [vmem:[%s339 + $0xc94] sm:$0xf]
      %v1163 = vld [vmem:[%s339 + $0xc98] sm:$0xf]
      %v1164 = vld [vmem:[%s339 + $0xc9c] sm:$0xf]
      %v1165 = vld [vmem:[%s339 + $0xca0] sm:$0xf]
      %v1166 = vld [vmem:[%s339 + $0xca4] sm:$0xf]
      %v1167 = vld [vmem:[%s339 + $0xca8] sm:$0xf]
      %v1168 = vld [vmem:[%s339 + $0xcac] sm:$0xf]
      %v1169 = vld [vmem:[%s339 + $0xcb0] sm:$0xf]
      %v1170 = vld [vmem:[%s339 + $0xcb4] sm:$0xf]
      %v1171 = vld [vmem:[%s339 + $0xcb8] sm:$0xf]
      %v1172 = vld [vmem:[%s339 + $0xcbc] sm:$0xf]
      %v1173 = vld [vmem:[%s339 + $0xcc0] sm:$0xf]
      %v1174 = vld [vmem:[%s339 + $0xcc4] sm:$0xf]
      %v1175 = vld [vmem:[%s339 + $0xcc8] sm:$0xf]
      %v1176 = vld [vmem:[%s339 + $0xccc] sm:$0xf]
      %v1177 = vld [vmem:[%s339 + $0xcd0] sm:$0xf]
      %v1178 = vld [vmem:[%s339 + $0xcd4] sm:$0xf]
      %v1179 = vld [vmem:[%s339 + $0xcd8] sm:$0xf]
      %v1180 = vld [vmem:[%s339 + $0xcdc] sm:$0xf]
      %v1181 = vld [vmem:[%s339 + $0xce0] sm:$0xf]
      %v1182 = vld [vmem:[%s339 + $0xce4] sm:$0xf]
      %v1183 = vld [vmem:[%s339 + $0xce8] sm:$0xf]
      %v1184 = vld [vmem:[%s339 + $0xcec] sm:$0xf]
      %v1185 = vld [vmem:[%s339 + $0xcf0] sm:$0xf]
      %v1186 = vld [vmem:[%s339 + $0xcf4] sm:$0xf]
      %v1187 = vld [vmem:[%s339 + $0xcf8] sm:$0xf]
      %v1188 = vld [vmem:[%s339 + $0xcfc] sm:$0xf]
      %v1189 = vld [vmem:[%s339 + $0xd00] sm:$0xf]
      %v1190 = vld [vmem:[%s339 + $0xd04] sm:$0xf]
      %v1191 = vld [vmem:[%s339 + $0xd08] sm:$0xf]
      %v1192 = vld [vmem:[%s339 + $0xd0c] sm:$0xf]
      %v1193 = vld [vmem:[%s339 + $0xd10] sm:$0xf]
      %v1194 = vld [vmem:[%s339 + $0xd14] sm:$0xf]
      %v1195 = vld [vmem:[%s339 + $0xd18] sm:$0xf]
      %v1196 = vld [vmem:[%s339 + $0xd1c] sm:$0xf]
      %v1197 = vld [vmem:[%s339 + $0xd20] sm:$0xf]
      %v1198 = vld [vmem:[%s339 + $0xd24] sm:$0xf]
      %v1199 = vld [vmem:[%s339 + $0xd28] sm:$0xf]
      %v1200 = vld [vmem:[%s339 + $0xd2c] sm:$0xf]
      %v1201 = vld [vmem:[%s339 + $0xd30] sm:$0xf]
      %v1202 = vld [vmem:[%s339 + $0xd34] sm:$0xf]
      %v1203 = vld [vmem:[%s339 + $0xd38] sm:$0xf]
      %v1204 = vld [vmem:[%s339 + $0xd3c] sm:$0xf]
      %v1205 = vld [vmem:[%s339 + $0xd40] sm:$0xf]
      %v1206 = vld [vmem:[%s339 + $0xd44] sm:$0xf]
      %v1207 = vld [vmem:[%s339 + $0xd48] sm:$0xf]
      %v1208 = vld [vmem:[%s339 + $0xd4c] sm:$0xf]
      %v1209 = vld [vmem:[%s339 + $0xd50] sm:$0xf]
      %v1210 = vld [vmem:[%s339 + $0xd54] sm:$0xf]
      %v1211 = vld [vmem:[%s339 + $0xd58] sm:$0xf]
      %v1212 = vld [vmem:[%s339 + $0xd5c] sm:$0xf]
      %v1213 = vld [vmem:[%s339 + $0xd60] sm:$0xf]
      %v1214 = vld [vmem:[%s339 + $0xd64] sm:$0xf]
      %v1215 = vld [vmem:[%s339 + $0xd68] sm:$0xf]
      %v1216 = vld [vmem:[%s339 + $0xd6c] sm:$0xf]
      %v1217 = vld [vmem:[%s339 + $0xd70] sm:$0xf]
      %v1218 = vld [vmem:[%s339 + $0xd74] sm:$0xf]
      %v1219 = vld [vmem:[%s339 + $0xd78] sm:$0xf]
      %v1220 = vld [vmem:[%s339 + $0xd7c] sm:$0xf]
      %v1221 = vld [vmem:[%s339 + $0xd80] sm:$0xf]
      %v1222 = vld [vmem:[%s339 + $0xd84] sm:$0xf]
      %v1223 = vld [vmem:[%s339 + $0xd88] sm:$0xf]
      %v1224 = vld [vmem:[%s339 + $0xd8c] sm:$0xf]
      %v1225 = vld [vmem:[%s339 + $0xd90] sm:$0xf]
      %v1226 = vld [vmem:[%s339 + $0xd94] sm:$0xf]
      %v1227 = vld [vmem:[%s339 + $0xd98] sm:$0xf]
      %v1228 = vld [vmem:[%s339 + $0xd9c] sm:$0xf]
      %v1229 = vld [vmem:[%s339 + $0xda0] sm:$0xf]
      %v1230 = vld [vmem:[%s339 + $0xda4] sm:$0xf]
      %v1231 = vld [vmem:[%s339 + $0xda8] sm:$0xf]
      %v1232 = vld [vmem:[%s339 + $0xdac] sm:$0xf]
      %v1233 = vld [vmem:[%s339 + $0xdb0] sm:$0xf]
      %v1234 = vld [vmem:[%s339 + $0xdb4] sm:$0xf]
      %v1235 = vld [vmem:[%s339 + $0xdb8] sm:$0xf]
      %v1236 = vld [vmem:[%s339 + $0xdbc] sm:$0xf]
      %v1237 = vld [vmem:[%s339 + $0xdc0] sm:$0xf]
      %v1238 = vld [vmem:[%s339 + $0xdc4] sm:$0xf]
      %v1239 = vld [vmem:[%s339 + $0xdc8] sm:$0xf]
      %v1240 = vld [vmem:[%s339 + $0xdcc] sm:$0xf]
      %v1241 = vld [vmem:[%s339 + $0xdd0] sm:$0xf]
      %v1242 = vld [vmem:[%s339 + $0xdd4] sm:$0xf]
      %v1243 = vld [vmem:[%s339 + $0xdd8] sm:$0xf]
      %v1244 = vld [vmem:[%s339 + $0xddc] sm:$0xf]
      %v1245 = vld [vmem:[%s339 + $0xde0] sm:$0xf]
      %v1246 = vld [vmem:[%s339 + $0xde4] sm:$0xf]
      %v1247 = vld [vmem:[%s339 + $0xde8] sm:$0xf]
      %v1248 = vld [vmem:[%s339 + $0xdec] sm:$0xf]
      %v1249 = vld [vmem:[%s339 + $0xdf0] sm:$0xf]
      %v1250 = vld [vmem:[%s339 + $0xdf4] sm:$0xf]
      %v1251 = vld [vmem:[%s339 + $0xdf8] sm:$0xf]
      %v1252 = vld [vmem:[%s339 + $0xdfc] sm:$0xf]
      %v1253 = vld [vmem:[%s339 + $0xe00] sm:$0xf]
      %v1254 = vld [vmem:[%s339 + $0xe04] sm:$0xf]
      %v1255 = vld [vmem:[%s339 + $0xe08] sm:$0xf]
      %v1256 = vld [vmem:[%s339 + $0xe0c] sm:$0xf]
      %v1257 = vld [vmem:[%s339 + $0xe10] sm:$0xf]
      %v1258 = vld [vmem:[%s339 + $0xe14] sm:$0xf]
      %v1259 = vld [vmem:[%s339 + $0xe18] sm:$0xf]
      %v1260 = vld [vmem:[%s339 + $0xe1c] sm:$0xf]
      %v1261 = vld [vmem:[%s339 + $0xe20] sm:$0xf]
      %v1262 = vld [vmem:[%s339 + $0xe24] sm:$0xf]
      %v1263 = vld [vmem:[%s339 + $0xe28] sm:$0xf]
      %v1264 = vld [vmem:[%s339 + $0xe2c] sm:$0xf]
      %v1265 = vld [vmem:[%s339 + $0xe30] sm:$0xf]
      %v1266 = vld [vmem:[%s339 + $0xe34] sm:$0xf]
      %v1267 = vld [vmem:[%s339 + $0xe38] sm:$0xf]
      %v1268 = vld [vmem:[%s339 + $0xe3c] sm:$0xf]
      %v1269 = vld [vmem:[%s339 + $0xe40] sm:$0xf]
      %v1270 = vld [vmem:[%s339 + $0xe44] sm:$0xf]
      %v1271 = vld [vmem:[%s339 + $0xe48] sm:$0xf]
      %v1272 = vld [vmem:[%s339 + $0xe4c] sm:$0xf]
      %v1273 = vld [vmem:[%s339 + $0xe50] sm:$0xf]
      %v1274 = vld [vmem:[%s339 + $0xe54] sm:$0xf]
      %v1275 = vld [vmem:[%s339 + $0xe58] sm:$0xf]
      %v1276 = vld [vmem:[%s339 + $0xe5c] sm:$0xf]
      %v1277 = vld [vmem:[%s339 + $0xe60] sm:$0xf]
      %v1278 = vld [vmem:[%s339 + $0xe64] sm:$0xf]
      %v1279 = vld [vmem:[%s339 + $0xe68] sm:$0xf]
      %v1280 = vld [vmem:[%s339 + $0xe6c] sm:$0xf]
      %v1281 = vld [vmem:[%s339 + $0xe70] sm:$0xf]
      %v1282 = vld [vmem:[%s339 + $0xe74] sm:$0xf]
      %v1283 = vld [vmem:[%s339 + $0xe78] sm:$0xf]
      %v1284 = vld [vmem:[%s339 + $0xe7c] sm:$0xf]
      %v1285 = vld [vmem:[%s339 + $0xe80] sm:$0xf]
      %v1286 = vld [vmem:[%s339 + $0xe84] sm:$0xf]
      %v1287 = vld [vmem:[%s339 + $0xe88] sm:$0xf]
      %v1288 = vld [vmem:[%s339 + $0xe8c] sm:$0xf]
      %v1289 = vld [vmem:[%s339 + $0xe90] sm:$0xf]
      %v1290 = vld [vmem:[%s339 + $0xe94] sm:$0xf]
      %v1291 = vld [vmem:[%s339 + $0xe98] sm:$0xf]
      %v1292 = vld [vmem:[%s339 + $0xe9c] sm:$0xf]
      %v1293 = vld [vmem:[%s339 + $0xea0] sm:$0xf]
      %v1294 = vld [vmem:[%s339 + $0xea4] sm:$0xf]
      %v1295 = vld [vmem:[%s339 + $0xea8] sm:$0xf]
      %v1296 = vld [vmem:[%s339 + $0xeac] sm:$0xf]
      %v1297 = vld [vmem:[%s339 + $0xeb0] sm:$0xf]
      %v1298 = vld [vmem:[%s339 + $0xeb4] sm:$0xf]
      %v1299 = vld [vmem:[%s339 + $0xeb8] sm:$0xf]
      %v1300 = vld [vmem:[%s339 + $0xebc] sm:$0xf]
      %v1301 = vld [vmem:[%s339 + $0xec0] sm:$0xf]
      %v1302 = vld [vmem:[%s339 + $0xec4] sm:$0xf]
      %v1303 = vld [vmem:[%s339 + $0xec8] sm:$0xf]
      %v1304 = vld [vmem:[%s339 + $0xecc] sm:$0xf]
      %v1305 = vld [vmem:[%s339 + $0xed0] sm:$0xf]
      %v1306 = vld [vmem:[%s339 + $0xed4] sm:$0xf]
      %v1307 = vld [vmem:[%s339 + $0xed8] sm:$0xf]
      %v1308 = vld [vmem:[%s339 + $0xedc] sm:$0xf]
      %v1309 = vld [vmem:[%s339 + $0xee0] sm:$0xf]
      %v1310 = vld [vmem:[%s339 + $0xee4] sm:$0xf]
      %v1311 = vld [vmem:[%s339 + $0xee8] sm:$0xf]
      %v1312 = vld [vmem:[%s339 + $0xeec] sm:$0xf]
      %v1313 = vld [vmem:[%s339 + $0xef0] sm:$0xf]
      %v1314 = vld [vmem:[%s339 + $0xef4] sm:$0xf]
      %v1315 = vld [vmem:[%s339 + $0xef8] sm:$0xf]
      %v1316 = vld [vmem:[%s339 + $0xefc] sm:$0xf]
      %v1317 = vld [vmem:[%s339 + $0xf00] sm:$0xf]
      %v1318 = vld [vmem:[%s339 + $0xf04] sm:$0xf]
      %v1319 = vld [vmem:[%s339 + $0xf08] sm:$0xf]
      %v1320 = vld [vmem:[%s339 + $0xf0c] sm:$0xf]
      %v1321 = vld [vmem:[%s339 + $0xf10] sm:$0xf]
      %v1322 = vld [vmem:[%s339 + $0xf14] sm:$0xf]
      %v1323 = vld [vmem:[%s339 + $0xf18] sm:$0xf]
      %v1324 = vld [vmem:[%s339 + $0xf1c] sm:$0xf]
      %v1325 = vld [vmem:[%s339 + $0xf20] sm:$0xf]
      %v1326 = vld [vmem:[%s339 + $0xf24] sm:$0xf]
      %v1327 = vld [vmem:[%s339 + $0xf28] sm:$0xf]
      %v1328 = vld [vmem:[%s339 + $0xf2c] sm:$0xf]
      %v1329 = vld [vmem:[%s339 + $0xf30] sm:$0xf]
      %v1330 = vld [vmem:[%s339 + $0xf34] sm:$0xf]
      %v1331 = vld [vmem:[%s339 + $0xf38] sm:$0xf]
      %v1332 = vld [vmem:[%s339 + $0xf3c] sm:$0xf]
      %v1333 = vld [vmem:[%s339 + $0xf40] sm:$0xf]
      %v1334 = vld [vmem:[%s339 + $0xf44] sm:$0xf]
      %v1335 = vld [vmem:[%s339 + $0xf48] sm:$0xf]
      %v1336 = vld [vmem:[%s339 + $0xf4c] sm:$0xf]
      %v1337 = vld [vmem:[%s339 + $0xf50] sm:$0xf]
      %v1338 = vld [vmem:[%s339 + $0xf54] sm:$0xf]
      %v1339 = vld [vmem:[%s339 + $0xf58] sm:$0xf]
      %v1340 = vld [vmem:[%s339 + $0xf5c] sm:$0xf]
      %v1341 = vld [vmem:[%s339 + $0xf60] sm:$0xf]
      %v1342 = vld [vmem:[%s339 + $0xf64] sm:$0xf]
      %v1343 = vld [vmem:[%s339 + $0xf68] sm:$0xf]
      %v1344 = vld [vmem:[%s339 + $0xf6c] sm:$0xf]
      %v1345 = vld [vmem:[%s339 + $0xf70] sm:$0xf]
      %v1346 = vld [vmem:[%s339 + $0xf74] sm:$0xf]
      %v1347 = vld [vmem:[%s339 + $0xf78] sm:$0xf]
      %v1348 = vld [vmem:[%s339 + $0xf7c] sm:$0xf]
      %v1349 = vld [vmem:[%s339 + $0xf80] sm:$0xf]
      %v1350 = vld [vmem:[%s339 + $0xf84] sm:$0xf]
      %v1351 = vld [vmem:[%s339 + $0xf88] sm:$0xf]
      %v1352 = vld [vmem:[%s339 + $0xf8c] sm:$0xf]
      %v1353 = vld [vmem:[%s339 + $0xf90] sm:$0xf]
      %v1354 = vld [vmem:[%s339 + $0xf94] sm:$0xf]
      %v1355 = vld [vmem:[%s339 + $0xf98] sm:$0xf]
      %v1356 = vld [vmem:[%s339 + $0xf9c] sm:$0xf]
      %v1357 = vld [vmem:[%s339 + $0xfa0] sm:$0xf]
      %v1358 = vld [vmem:[%s339 + $0xfa4] sm:$0xf]
      %v1359 = vld [vmem:[%s339 + $0xfa8] sm:$0xf]
      %v1360 = vld [vmem:[%s339 + $0xfac] sm:$0xf]
      %v1361 = vld [vmem:[%s339 + $0xfb0] sm:$0xf]
      %v1362 = vld [vmem:[%s339 + $0xfb4] sm:$0xf]
      %v1363 = vld [vmem:[%s339 + $0xfb8] sm:$0xf]
      %v1364 = vld [vmem:[%s339 + $0xfbc] sm:$0xf]
      %v1365 = vld [vmem:[%s339 + $0xfc0] sm:$0xf]
      %v1366 = vld [vmem:[%s339 + $0xfc4] sm:$0xf]
      %v1367 = vld [vmem:[%s339 + $0xfc8] sm:$0xf]
      %v1368 = vld [vmem:[%s339 + $0xfcc] sm:$0xf]
      %v1369 = vld [vmem:[%s339 + $0xfd0] sm:$0xf]
      %v1370 = vld [vmem:[%s339 + $0xfd4] sm:$0xf]
      %v1371 = vld [vmem:[%s339 + $0xfd8] sm:$0xf]
      %v1372 = vld [vmem:[%s339 + $0xfdc] sm:$0xf]
      %v1373 = vld [vmem:[%s339 + $0xfe0] sm:$0xf]
      %v1374 = vld [vmem:[%s339 + $0xfe4] sm:$0xf]
      %v1375 = vld [vmem:[%s339 + $0xfe8] sm:$0xf]
      %v1376 = vld [vmem:[%s339 + $0xfec] sm:$0xf]
      %v1377 = vld [vmem:[%s339 + $0xff0] sm:$0xf]
      %v1378 = vld [vmem:[%s339 + $0xff4] sm:$0xf]
      %v1379 = vld [vmem:[%s339 + $0xff8] sm:$0xf]
      %v1380 = vld [vmem:[%s339 + $0xffc] sm:$0xf]
      %v1389 = vcombine.high %v349, %v349
      %v1391 = vunpack.c.l.s4 1966171168
      %v1392 = vunpack.c.0.s8 %v1391
      %v1393 = vlaneseq
      %v1394 = vshrl.u32 %v1393, 7
      %v1395 = vsub.s32 %v1392, %v1394
      %v1396 = vrot.slane %v349, %v1395
      %v1398 = vunpack.c.l.s4 1966171168
      %v1399 = vunpack.c.0.s8 %v1398
      %v1400 = vlaneseq
      %v1401 = vshrl.u32 %v1400, 7
      %v1402 = vsub.s32 %v1399, %v1401
      %v1403 = vrot.slane %v1389, %v1402
      %v1404 = vcombine.high %v1396, %v1396
      %v1405 = vcombine.high %v1403, %v1403
      %v1407 = vunpack.c.l.s4 1966171168
      %v1408 = vunpack.c.0.s8 %v1407
      %v1409 = vlaneseq
      %v1410 = vshrl.u32 %v1409, 7
      %v1411 = vsub.s32 %v1408, %v1410
      %v1412 = vrot.slane %v1396, %v1411
      %v1414 = vunpack.c.l.s4 1966171168
      %v1415 = vunpack.c.0.s8 %v1414
      %v1416 = vlaneseq
      %v1417 = vshrl.u32 %v1416, 7
      %v1418 = vsub.s32 %v1415, %v1417
      %v1419 = vrot.slane %v1403, %v1418
      %v1421 = vunpack.c.l.s4 1966171168
      %v1422 = vunpack.c.0.s8 %v1421
      %v1423 = vlaneseq
      %v1424 = vshrl.u32 %v1423, 7
      %v1425 = vsub.s32 %v1422, %v1424
      %v1426 = vrot.slane %v1404, %v1425
      %v1428 = vunpack.c.l.s4 1966171168
      %v1429 = vunpack.c.0.s8 %v1428
      %v1430 = vlaneseq
      %v1431 = vshrl.u32 %v1430, 7
      %v1432 = vsub.s32 %v1429, %v1431
      %v1433 = vrot.slane %v1405, %v1432
      %v1434 = vcombine.high %v1412, %v1412
      %v1435 = vcombine.high %v1419, %v1419
      %v1436 = vcombine.high %v1426, %v1426
      %v1437 = vcombine.high %v1433, %v1433
      %v1438 = vcombine.high %v350, %v350
      %v1440 = vunpack.c.l.s4 1966171168
      %v1441 = vunpack.c.0.s8 %v1440
      %v1442 = vlaneseq
      %v1443 = vshrl.u32 %v1442, 7
      %v1444 = vsub.s32 %v1441, %v1443
      %v1445 = vrot.slane %v350, %v1444
      %v1447 = vunpack.c.l.s4 1966171168
      %v1448 = vunpack.c.0.s8 %v1447
      %v1449 = vlaneseq
      %v1450 = vshrl.u32 %v1449, 7
      %v1451 = vsub.s32 %v1448, %v1450
      %v1452 = vrot.slane %v1438, %v1451
      %v1453 = vcombine.high %v1445, %v1445
      %v1454 = vcombine.high %v1452, %v1452
      %v1456 = vunpack.c.l.s4 1966171168
      %v1457 = vunpack.c.0.s8 %v1456
      %v1458 = vlaneseq
      %v1459 = vshrl.u32 %v1458, 7
      %v1460 = vsub.s32 %v1457, %v1459
      %v1461 = vrot.slane %v1445, %v1460
      %v1463 = vunpack.c.l.s4 1966171168
      %v1464 = vunpack.c.0.s8 %v1463
      %v1465 = vlaneseq
      %v1466 = vshrl.u32 %v1465, 7
      %v1467 = vsub.s32 %v1464, %v1466
      %v1468 = vrot.slane %v1452, %v1467
      %v1470 = vunpack.c.l.s4 1966171168
      %v1471 = vunpack.c.0.s8 %v1470
      %v1472 = vlaneseq
      %v1473 = vshrl.u32 %v1472, 7
      %v1474 = vsub.s32 %v1471, %v1473
      %v1475 = vrot.slane %v1453, %v1474
      %v1477 = vunpack.c.l.s4 1966171168
      %v1478 = vunpack.c.0.s8 %v1477
      %v1479 = vlaneseq
      %v1480 = vshrl.u32 %v1479, 7
      %v1481 = vsub.s32 %v1478, %v1480
      %v1482 = vrot.slane %v1454, %v1481
      %v1483 = vcombine.high %v1461, %v1461
      %v1484 = vcombine.high %v1468, %v1468
      %v1485 = vcombine.high %v1475, %v1475
      %v1486 = vcombine.high %v1482, %v1482
      %v1487 = vcombine.high %v351, %v351
      %v1489 = vunpack.c.l.s4 1966171168
      %v1490 = vunpack.c.0.s8 %v1489
      %v1491 = vlaneseq
      %v1492 = vshrl.u32 %v1491, 7
      %v1493 = vsub.s32 %v1490, %v1492
      %v1494 = vrot.slane %v351, %v1493
      %v1496 = vunpack.c.l.s4 1966171168
      %v1497 = vunpack.c.0.s8 %v1496
      %v1498 = vlaneseq
      %v1499 = vshrl.u32 %v1498, 7
      %v1500 = vsub.s32 %v1497, %v1499
      %v1501 = vrot.slane %v1487, %v1500
      %v1502 = vcombine.high %v1494, %v1494
      %v1503 = vcombine.high %v1501, %v1501
      %v1505 = vunpack.c.l.s4 1966171168
      %v1506 = vunpack.c.0.s8 %v1505
      %v1507 = vlaneseq
      %v1508 = vshrl.u32 %v1507, 7
      %v1509 = vsub.s32 %v1506, %v1508
      %v1510 = vrot.slane %v1494, %v1509
      %v1512 = vunpack.c.l.s4 1966171168
      %v1513 = vunpack.c.0.s8 %v1512
      %v1514 = vlaneseq
      %v1515 = vshrl.u32 %v1514, 7
      %v1516 = vsub.s32 %v1513, %v1515
      %v1517 = vrot.slane %v1501, %v1516
      %v1519 = vunpack.c.l.s4 1966171168
      %v1520 = vunpack.c.0.s8 %v1519
      %v1521 = vlaneseq
      %v1522 = vshrl.u32 %v1521, 7
      %v1523 = vsub.s32 %v1520, %v1522
      %v1524 = vrot.slane %v1502, %v1523
      %v1526 = vunpack.c.l.s4 1966171168
      %v1527 = vunpack.c.0.s8 %v1526
      %v1528 = vlaneseq
      %v1529 = vshrl.u32 %v1528, 7
      %v1530 = vsub.s32 %v1527, %v1529
      %v1531 = vrot.slane %v1503, %v1530
      %v1532 = vcombine.high %v1510, %v1510
      %v1533 = vcombine.high %v1517, %v1517
      %v1534 = vcombine.high %v1524, %v1524
      %v1535 = vcombine.high %v1531, %v1531
      %v1536 = vcombine.high %v352, %v352
      %v1538 = vunpack.c.l.s4 1966171168
      %v1539 = vunpack.c.0.s8 %v1538
      %v1540 = vlaneseq
      %v1541 = vshrl.u32 %v1540, 7
      %v1542 = vsub.s32 %v1539, %v1541
      %v1543 = vrot.slane %v352, %v1542
      %v1545 = vunpack.c.l.s4 1966171168
      %v1546 = vunpack.c.0.s8 %v1545
      %v1547 = vlaneseq
      %v1548 = vshrl.u32 %v1547, 7
      %v1549 = vsub.s32 %v1546, %v1548
      %v1550 = vrot.slane %v1536, %v1549
      %v1551 = vcombine.high %v1543, %v1543
      %v1552 = vcombine.high %v1550, %v1550
      %v1554 = vunpack.c.l.s4 1966171168
      %v1555 = vunpack.c.0.s8 %v1554
      %v1556 = vlaneseq
      %v1557 = vshrl.u32 %v1556, 7
      %v1558 = vsub.s32 %v1555, %v1557
      %v1559 = vrot.slane %v1543, %v1558
      %v1561 = vunpack.c.l.s4 1966171168
      %v1562 = vunpack.c.0.s8 %v1561
      %v1563 = vlaneseq
      %v1564 = vshrl.u32 %v1563, 7
      %v1565 = vsub.s32 %v1562, %v1564
      %v1566 = vrot.slane %v1550, %v1565
      %v1568 = vunpack.c.l.s4 1966171168
      %v1569 = vunpack.c.0.s8 %v1568
      %v1570 = vlaneseq
      %v1571 = vshrl.u32 %v1570, 7
      %v1572 = vsub.s32 %v1569, %v1571
      %v1573 = vrot.slane %v1551, %v1572
      %v1575 = vunpack.c.l.s4 1966171168
      %v1576 = vunpack.c.0.s8 %v1575
      %v1577 = vlaneseq
      %v1578 = vshrl.u32 %v1577, 7
      %v1579 = vsub.s32 %v1576, %v1578
      %v1580 = vrot.slane %v1552, %v1579
      %v1581 = vcombine.high %v1559, %v1559
      %v1582 = vcombine.high %v1566, %v1566
      %v1583 = vcombine.high %v1573, %v1573
      %v1584 = vcombine.high %v1580, %v1580
      %v1585 = vcombine.high %v353, %v353
      %v1587 = vunpack.c.l.s4 1966171168
      %v1588 = vunpack.c.0.s8 %v1587
      %v1589 = vlaneseq
      %v1590 = vshrl.u32 %v1589, 7
      %v1591 = vsub.s32 %v1588, %v1590
      %v1592 = vrot.slane %v353, %v1591
      %v1594 = vunpack.c.l.s4 1966171168
      %v1595 = vunpack.c.0.s8 %v1594
      %v1596 = vlaneseq
      %v1597 = vshrl.u32 %v1596, 7
      %v1598 = vsub.s32 %v1595, %v1597
      %v1599 = vrot.slane %v1585, %v1598
      %v1600 = vcombine.high %v1592, %v1592
      %v1601 = vcombine.high %v1599, %v1599
      %v1603 = vunpack.c.l.s4 1966171168
      %v1604 = vunpack.c.0.s8 %v1603
      %v1605 = vlaneseq
      %v1606 = vshrl.u32 %v1605, 7
      %v1607 = vsub.s32 %v1604, %v1606
      %v1608 = vrot.slane %v1592, %v1607
      %v1610 = vunpack.c.l.s4 1966171168
      %v1611 = vunpack.c.0.s8 %v1610
      %v1612 = vlaneseq
      %v1613 = vshrl.u32 %v1612, 7
      %v1614 = vsub.s32 %v1611, %v1613
      %v1615 = vrot.slane %v1599, %v1614
      %v1617 = vunpack.c.l.s4 1966171168
      %v1618 = vunpack.c.0.s8 %v1617
      %v1619 = vlaneseq
      %v1620 = vshrl.u32 %v1619, 7
      %v1621 = vsub.s32 %v1618, %v1620
      %v1622 = vrot.slane %v1600, %v1621
      %v1624 = vunpack.c.l.s4 1966171168
      %v1625 = vunpack.c.0.s8 %v1624
      %v1626 = vlaneseq
      %v1627 = vshrl.u32 %v1626, 7
      %v1628 = vsub.s32 %v1625, %v1627
      %v1629 = vrot.slane %v1601, %v1628
      %v1630 = vcombine.high %v1608, %v1608
      %v1631 = vcombine.high %v1615, %v1615
      %v1632 = vcombine.high %v1622, %v1622
      %v1633 = vcombine.high %v1629, %v1629
      %v1634 = vcombine.high %v354, %v354
      %v1636 = vunpack.c.l.s4 1966171168
      %v1637 = vunpack.c.0.s8 %v1636
      %v1638 = vlaneseq
      %v1639 = vshrl.u32 %v1638, 7
      %v1640 = vsub.s32 %v1637, %v1639
      %v1641 = vrot.slane %v354, %v1640
      %v1643 = vunpack.c.l.s4 1966171168
      %v1644 = vunpack.c.0.s8 %v1643
      %v1645 = vlaneseq
      %v1646 = vshrl.u32 %v1645, 7
      %v1647 = vsub.s32 %v1644, %v1646
      %v1648 = vrot.slane %v1634, %v1647
      %v1649 = vcombine.high %v1641, %v1641
      %v1650 = vcombine.high %v1648, %v1648
      %v1652 = vunpack.c.l.s4 1966171168
      %v1653 = vunpack.c.0.s8 %v1652
      %v1654 = vlaneseq
      %v1655 = vshrl.u32 %v1654, 7
      %v1656 = vsub.s32 %v1653, %v1655
      %v1657 = vrot.slane %v1641, %v1656
      %v1659 = vunpack.c.l.s4 1966171168
      %v1660 = vunpack.c.0.s8 %v1659
      %v1661 = vlaneseq
      %v1662 = vshrl.u32 %v1661, 7
      %v1663 = vsub.s32 %v1660, %v1662
      %v1664 = vrot.slane %v1648, %v1663
      %v1666 = vunpack.c.l.s4 1966171168
      %v1667 = vunpack.c.0.s8 %v1666
      %v1668 = vlaneseq
      %v1669 = vshrl.u32 %v1668, 7
      %v1670 = vsub.s32 %v1667, %v1669
      %v1671 = vrot.slane %v1649, %v1670
      %v1673 = vunpack.c.l.s4 1966171168
      %v1674 = vunpack.c.0.s8 %v1673
      %v1675 = vlaneseq
      %v1676 = vshrl.u32 %v1675, 7
      %v1677 = vsub.s32 %v1674, %v1676
      %v1678 = vrot.slane %v1650, %v1677
      %v1679 = vcombine.high %v1657, %v1657
      %v1680 = vcombine.high %v1664, %v1664
      %v1681 = vcombine.high %v1671, %v1671
      %v1682 = vcombine.high %v1678, %v1678
      %v1683 = vcombine.high %v355, %v355
      %v1685 = vunpack.c.l.s4 1966171168
      %v1686 = vunpack.c.0.s8 %v1685
      %v1687 = vlaneseq
      %v1688 = vshrl.u32 %v1687, 7
      %v1689 = vsub.s32 %v1686, %v1688
      %v1690 = vrot.slane %v355, %v1689
      %v1692 = vunpack.c.l.s4 1966171168
      %v1693 = vunpack.c.0.s8 %v1692
      %v1694 = vlaneseq
      %v1695 = vshrl.u32 %v1694, 7
      %v1696 = vsub.s32 %v1693, %v1695
      %v1697 = vrot.slane %v1683, %v1696
      %v1698 = vcombine.high %v1690, %v1690
      %v1699 = vcombine.high %v1697, %v1697
      %v1701 = vunpack.c.l.s4 1966171168
      %v1702 = vunpack.c.0.s8 %v1701
      %v1703 = vlaneseq
      %v1704 = vshrl.u32 %v1703, 7
      %v1705 = vsub.s32 %v1702, %v1704
      %v1706 = vrot.slane %v1690, %v1705
      %v1708 = vunpack.c.l.s4 1966171168
      %v1709 = vunpack.c.0.s8 %v1708
      %v1710 = vlaneseq
      %v1711 = vshrl.u32 %v1710, 7
      %v1712 = vsub.s32 %v1709, %v1711
      %v1713 = vrot.slane %v1697, %v1712
      %v1715 = vunpack.c.l.s4 1966171168
      %v1716 = vunpack.c.0.s8 %v1715
      %v1717 = vlaneseq
      %v1718 = vshrl.u32 %v1717, 7
      %v1719 = vsub.s32 %v1716, %v1718
      %v1720 = vrot.slane %v1698, %v1719
      %v1722 = vunpack.c.l.s4 1966171168
      %v1723 = vunpack.c.0.s8 %v1722
      %v1724 = vlaneseq
      %v1725 = vshrl.u32 %v1724, 7
      %v1726 = vsub.s32 %v1723, %v1725
      %v1727 = vrot.slane %v1699, %v1726
      %v1728 = vcombine.high %v1706, %v1706
      %v1729 = vcombine.high %v1713, %v1713
      %v1730 = vcombine.high %v1720, %v1720
      %v1731 = vcombine.high %v1727, %v1727
      %v1732 = vcombine.high %v356, %v356
      %v1734 = vunpack.c.l.s4 1966171168
      %v1735 = vunpack.c.0.s8 %v1734
      %v1736 = vlaneseq
      %v1737 = vshrl.u32 %v1736, 7
      %v1738 = vsub.s32 %v1735, %v1737
      %v1739 = vrot.slane %v356, %v1738
      %v1741 = vunpack.c.l.s4 1966171168
      %v1742 = vunpack.c.0.s8 %v1741
      %v1743 = vlaneseq
      %v1744 = vshrl.u32 %v1743, 7
      %v1745 = vsub.s32 %v1742, %v1744
      %v1746 = vrot.slane %v1732, %v1745
      %v1747 = vcombine.high %v1739, %v1739
      %v1748 = vcombine.high %v1746, %v1746
      %v1750 = vunpack.c.l.s4 1966171168
      %v1751 = vunpack.c.0.s8 %v1750
      %v1752 = vlaneseq
      %v1753 = vshrl.u32 %v1752, 7
      %v1754 = vsub.s32 %v1751, %v1753
      %v1755 = vrot.slane %v1739, %v1754
      %v1757 = vunpack.c.l.s4 1966171168
      %v1758 = vunpack.c.0.s8 %v1757
      %v1759 = vlaneseq
      %v1760 = vshrl.u32 %v1759, 7
      %v1761 = vsub.s32 %v1758, %v1760
      %v1762 = vrot.slane %v1746, %v1761
      %v1764 = vunpack.c.l.s4 1966171168
      %v1765 = vunpack.c.0.s8 %v1764
      %v1766 = vlaneseq
      %v1767 = vshrl.u32 %v1766, 7
      %v1768 = vsub.s32 %v1765, %v1767
      %v1769 = vrot.slane %v1747, %v1768
      %v1771 = vunpack.c.l.s4 1966171168
      %v1772 = vunpack.c.0.s8 %v1771
      %v1773 = vlaneseq
      %v1774 = vshrl.u32 %v1773, 7
      %v1775 = vsub.s32 %v1772, %v1774
      %v1776 = vrot.slane %v1748, %v1775
      %v1777 = vcombine.high %v1755, %v1755
      %v1778 = vcombine.high %v1762, %v1762
      %v1779 = vcombine.high %v1769, %v1769
      %v1780 = vcombine.high %v1776, %v1776
      %v2869 = vunpack.c.l.b16 %v357
      %v2870 = vunpack.c.l.b16 %v358
      %v2871 = vunpack.c.l.b16 %v359
      %v2872 = vunpack.c.l.b16 %v360
      %v2873 = vunpack.c.l.b16 %v361
      %v2874 = vunpack.c.l.b16 %v362
      %v2875 = vunpack.c.l.b16 %v363
      %v2876 = vunpack.c.l.b16 %v364
      %v2877 = vunpack.c.l.b16 %v365
      %v2878 = vunpack.c.l.b16 %v366
      %v2879 = vunpack.c.l.b16 %v367
      %v2880 = vunpack.c.l.b16 %v368
      %v2881 = vunpack.c.l.b16 %v369
      %v2882 = vunpack.c.l.b16 %v370
      %v2883 = vunpack.c.l.b16 %v371
      %v2884 = vunpack.c.l.b16 %v372
      %v2885 = vunpack.c.l.b16 %v373
      %v2886 = vunpack.c.l.b16 %v374
      %v2887 = vunpack.c.l.b16 %v375
      %v2888 = vunpack.c.l.b16 %v376
      %v2889 = vunpack.c.l.b16 %v377
      %v2890 = vunpack.c.l.b16 %v378
      %v2891 = vunpack.c.l.b16 %v379
      %v2892 = vunpack.c.l.b16 %v380
      %v2893 = vunpack.c.l.b16 %v381
      %v2894 = vunpack.c.l.b16 %v382
      %v2895 = vunpack.c.l.b16 %v383
      %v2896 = vunpack.c.l.b16 %v384
      %v2897 = vunpack.c.l.b16 %v385
      %v2898 = vunpack.c.l.b16 %v386
      %v2899 = vunpack.c.l.b16 %v387
      %v2900 = vunpack.c.l.b16 %v388
      %v2901 = vunpack.c.l.b16 %v389
      %v2902 = vunpack.c.l.b16 %v390
      %v2903 = vunpack.c.l.b16 %v391
      %v2904 = vunpack.c.l.b16 %v392
      %v2905 = vunpack.c.l.b16 %v393
      %v2906 = vunpack.c.l.b16 %v394
      %v2907 = vunpack.c.l.b16 %v395
      %v2908 = vunpack.c.l.b16 %v396
      %v2909 = vunpack.c.l.b16 %v397
      %v2910 = vunpack.c.l.b16 %v398
      %v2911 = vunpack.c.l.b16 %v399
      %v2912 = vunpack.c.l.b16 %v400
      %v2913 = vunpack.c.l.b16 %v401
      %v2914 = vunpack.c.l.b16 %v402
      %v2915 = vunpack.c.l.b16 %v403
      %v2916 = vunpack.c.l.b16 %v404
      %v2917 = vunpack.c.l.b16 %v405
      %v2918 = vunpack.c.l.b16 %v406
      %v2919 = vunpack.c.l.b16 %v407
      %v2920 = vunpack.c.l.b16 %v408
      %v2921 = vunpack.c.l.b16 %v409
      %v2922 = vunpack.c.l.b16 %v410
      %v2923 = vunpack.c.l.b16 %v411
      %v2924 = vunpack.c.l.b16 %v412
      %v2925 = vunpack.c.l.b16 %v413
      %v2926 = vunpack.c.l.b16 %v414
      %v2927 = vunpack.c.l.b16 %v415
      %v2928 = vunpack.c.l.b16 %v416
      %v2929 = vunpack.c.l.b16 %v417
      %v2930 = vunpack.c.l.b16 %v418
      %v2931 = vunpack.c.l.b16 %v419
      %v2932 = vunpack.c.l.b16 %v420
      %v2933 = vunpack.c.l.b16 %v421
      %v2934 = vunpack.c.l.b16 %v422
      %v2935 = vunpack.c.l.b16 %v423
      %v2936 = vunpack.c.l.b16 %v424
      %v2937 = vunpack.c.l.b16 %v425
      %v2938 = vunpack.c.l.b16 %v426
      %v2939 = vunpack.c.l.b16 %v427
      %v2940 = vunpack.c.l.b16 %v428
      %v2941 = vunpack.c.l.b16 %v429
      %v2942 = vunpack.c.l.b16 %v430
      %v2943 = vunpack.c.l.b16 %v431
      %v2944 = vunpack.c.l.b16 %v432
      %v2945 = vunpack.c.l.b16 %v433
      %v2946 = vunpack.c.l.b16 %v434
      %v2947 = vunpack.c.l.b16 %v435
      %v2948 = vunpack.c.l.b16 %v436
      %v2949 = vunpack.c.l.b16 %v437
      %v2950 = vunpack.c.l.b16 %v438
      %v2951 = vunpack.c.l.b16 %v439
      %v2952 = vunpack.c.l.b16 %v440
      %v2953 = vunpack.c.l.b16 %v441
      %v2954 = vunpack.c.l.b16 %v442
      %v2955 = vunpack.c.l.b16 %v443
      %v2956 = vunpack.c.l.b16 %v444
      %v2957 = vunpack.c.l.b16 %v445
      %v2958 = vunpack.c.l.b16 %v446
      %v2959 = vunpack.c.l.b16 %v447
      %v2960 = vunpack.c.l.b16 %v448
      %v2961 = vunpack.c.l.b16 %v449
      %v2962 = vunpack.c.l.b16 %v450
      %v2963 = vunpack.c.l.b16 %v451
      %v2964 = vunpack.c.l.b16 %v452
      %v2965 = vunpack.c.l.b16 %v453
      %v2966 = vunpack.c.l.b16 %v454
      %v2967 = vunpack.c.l.b16 %v455
      %v2968 = vunpack.c.l.b16 %v456
      %v2969 = vunpack.c.l.b16 %v457
      %v2970 = vunpack.c.l.b16 %v458
      %v2971 = vunpack.c.l.b16 %v459
      %v2972 = vunpack.c.l.b16 %v460
      %v2973 = vunpack.c.l.b16 %v461
      %v2974 = vunpack.c.l.b16 %v462
      %v2975 = vunpack.c.l.b16 %v463
      %v2976 = vunpack.c.l.b16 %v464
      %v2977 = vunpack.c.l.b16 %v465
      %v2978 = vunpack.c.l.b16 %v466
      %v2979 = vunpack.c.l.b16 %v467
      %v2980 = vunpack.c.l.b16 %v468
      %v2981 = vunpack.c.l.b16 %v469
      %v2982 = vunpack.c.l.b16 %v470
      %v2983 = vunpack.c.l.b16 %v471
      %v2984 = vunpack.c.l.b16 %v472
      %v2985 = vunpack.c.l.b16 %v473
      %v2986 = vunpack.c.l.b16 %v474
      %v2987 = vunpack.c.l.b16 %v475
      %v2988 = vunpack.c.l.b16 %v476
      %v2989 = vunpack.c.l.b16 %v477
      %v2990 = vunpack.c.l.b16 %v478
      %v2991 = vunpack.c.l.b16 %v479
      %v2992 = vunpack.c.l.b16 %v480
      %v2993 = vunpack.c.l.b16 %v481
      %v2994 = vunpack.c.l.b16 %v482
      %v2995 = vunpack.c.l.b16 %v483
      %v2996 = vunpack.c.l.b16 %v484
      %v2997 = vunpack.c.l.b16 %v485
      %v2998 = vunpack.c.l.b16 %v486
      %v2999 = vunpack.c.l.b16 %v487
      %v3000 = vunpack.c.l.b16 %v488
      %v3001 = vunpack.c.l.b16 %v489
      %v3002 = vunpack.c.l.b16 %v490
      %v3003 = vunpack.c.l.b16 %v491
      %v3004 = vunpack.c.l.b16 %v492
      %v3005 = vunpack.c.l.b16 %v493
      %v3006 = vunpack.c.l.b16 %v494
      %v3007 = vunpack.c.l.b16 %v495
      %v3008 = vunpack.c.l.b16 %v496
      %v3009 = vunpack.c.l.b16 %v497
      %v3010 = vunpack.c.l.b16 %v498
      %v3011 = vunpack.c.l.b16 %v499
      %v3012 = vunpack.c.l.b16 %v500
      %v3013 = vunpack.c.l.b16 %v501
      %v3014 = vunpack.c.l.b16 %v502
      %v3015 = vunpack.c.l.b16 %v503
      %v3016 = vunpack.c.l.b16 %v504
      %v3017 = vunpack.c.l.b16 %v505
      %v3018 = vunpack.c.l.b16 %v506
      %v3019 = vunpack.c.l.b16 %v507
      %v3020 = vunpack.c.l.b16 %v508
      %v3021 = vunpack.c.l.b16 %v509
      %v3022 = vunpack.c.l.b16 %v510
      %v3023 = vunpack.c.l.b16 %v511
      %v3024 = vunpack.c.l.b16 %v512
      %v3025 = vunpack.c.l.b16 %v513
      %v3026 = vunpack.c.l.b16 %v514
      %v3027 = vunpack.c.l.b16 %v515
      %v3028 = vunpack.c.l.b16 %v516
      %v3029 = vunpack.c.l.b16 %v517
      %v3030 = vunpack.c.l.b16 %v518
      %v3031 = vunpack.c.l.b16 %v519
      %v3032 = vunpack.c.l.b16 %v520
      %v3033 = vunpack.c.l.b16 %v521
      %v3034 = vunpack.c.l.b16 %v522
      %v3035 = vunpack.c.l.b16 %v523
      %v3036 = vunpack.c.l.b16 %v524
      %v3037 = vunpack.c.l.b16 %v525
      %v3038 = vunpack.c.l.b16 %v526
      %v3039 = vunpack.c.l.b16 %v527
      %v3040 = vunpack.c.l.b16 %v528
      %v3041 = vunpack.c.l.b16 %v529
      %v3042 = vunpack.c.l.b16 %v530
      %v3043 = vunpack.c.l.b16 %v531
      %v3044 = vunpack.c.l.b16 %v532
      %v3045 = vunpack.c.l.b16 %v533
      %v3046 = vunpack.c.l.b16 %v534
      %v3047 = vunpack.c.l.b16 %v535
      %v3048 = vunpack.c.l.b16 %v536
      %v3049 = vunpack.c.l.b16 %v537
      %v3050 = vunpack.c.l.b16 %v538
      %v3051 = vunpack.c.l.b16 %v539
      %v3052 = vunpack.c.l.b16 %v540
      %v3053 = vunpack.c.l.b16 %v541
      %v3054 = vunpack.c.l.b16 %v542
      %v3055 = vunpack.c.l.b16 %v543
      %v3056 = vunpack.c.l.b16 %v544
      %v3057 = vunpack.c.l.b16 %v545
      %v3058 = vunpack.c.l.b16 %v546
      %v3059 = vunpack.c.l.b16 %v547
      %v3060 = vunpack.c.l.b16 %v548
      %v3061 = vunpack.c.l.b16 %v549
      %v3062 = vunpack.c.l.b16 %v550
      %v3063 = vunpack.c.l.b16 %v551
      %v3064 = vunpack.c.l.b16 %v552
      %v3065 = vunpack.c.l.b16 %v553
      %v3066 = vunpack.c.l.b16 %v554
      %v3067 = vunpack.c.l.b16 %v555
      %v3068 = vunpack.c.l.b16 %v556
      %v3069 = vunpack.c.l.b16 %v557
      %v3070 = vunpack.c.l.b16 %v558
      %v3071 = vunpack.c.l.b16 %v559
      %v3072 = vunpack.c.l.b16 %v560
      %v3073 = vunpack.c.l.b16 %v561
      %v3074 = vunpack.c.l.b16 %v562
      %v3075 = vunpack.c.l.b16 %v563
      %v3076 = vunpack.c.l.b16 %v564
      %v3077 = vunpack.c.l.b16 %v565
      %v3078 = vunpack.c.l.b16 %v566
      %v3079 = vunpack.c.l.b16 %v567
      %v3080 = vunpack.c.l.b16 %v568
      %v3081 = vunpack.c.l.b16 %v569
      %v3082 = vunpack.c.l.b16 %v570
      %v3083 = vunpack.c.l.b16 %v571
      %v3084 = vunpack.c.l.b16 %v572
      %v3085 = vunpack.c.l.b16 %v573
      %v3086 = vunpack.c.l.b16 %v574
      %v3087 = vunpack.c.l.b16 %v575
      %v3088 = vunpack.c.l.b16 %v576
      %v3089 = vunpack.c.l.b16 %v577
      %v3090 = vunpack.c.l.b16 %v578
      %v3091 = vunpack.c.l.b16 %v579
      %v3092 = vunpack.c.l.b16 %v580
      %v3093 = vunpack.c.l.b16 %v581
      %v3094 = vunpack.c.l.b16 %v582
      %v3095 = vunpack.c.l.b16 %v583
      %v3096 = vunpack.c.l.b16 %v584
      %v3097 = vunpack.c.l.b16 %v585
      %v3098 = vunpack.c.l.b16 %v586
      %v3099 = vunpack.c.l.b16 %v587
      %v3100 = vunpack.c.l.b16 %v588
      %v3101 = vunpack.c.l.b16 %v589
      %v3102 = vunpack.c.l.b16 %v590
      %v3103 = vunpack.c.l.b16 %v591
      %v3104 = vunpack.c.l.b16 %v592
      %v3105 = vunpack.c.l.b16 %v593
      %v3106 = vunpack.c.l.b16 %v594
      %v3107 = vunpack.c.l.b16 %v595
      %v3108 = vunpack.c.l.b16 %v596
      %v3109 = vunpack.c.l.b16 %v597
      %v3110 = vunpack.c.l.b16 %v598
      %v3111 = vunpack.c.l.b16 %v599
      %v3112 = vunpack.c.l.b16 %v600
      %v3113 = vunpack.c.l.b16 %v601
      %v3114 = vunpack.c.l.b16 %v602
      %v3115 = vunpack.c.l.b16 %v603
      %v3116 = vunpack.c.l.b16 %v604
      %v3117 = vunpack.c.l.b16 %v605
      %v3118 = vunpack.c.l.b16 %v606
      %v3119 = vunpack.c.l.b16 %v607
      %v3120 = vunpack.c.l.b16 %v608
      %v3121 = vunpack.c.l.b16 %v609
      %v3122 = vunpack.c.l.b16 %v610
      %v3123 = vunpack.c.l.b16 %v611
      %v3124 = vunpack.c.l.b16 %v612
      %v3125 = vunpack.c.l.b16 %v613
      %v3126 = vunpack.c.l.b16 %v614
      %v3127 = vunpack.c.l.b16 %v615
      %v3128 = vunpack.c.l.b16 %v616
      %v3129 = vunpack.c.l.b16 %v617
      %v3130 = vunpack.c.l.b16 %v618
      %v3131 = vunpack.c.l.b16 %v619
      %v3132 = vunpack.c.l.b16 %v620
      %v3133 = vunpack.c.l.b16 %v621
      %v3134 = vunpack.c.l.b16 %v622
      %v3135 = vunpack.c.l.b16 %v623
      %v3136 = vunpack.c.l.b16 %v624
      %v3137 = vunpack.c.l.b16 %v625
      %v3138 = vunpack.c.l.b16 %v626
      %v3139 = vunpack.c.l.b16 %v627
      %v3140 = vunpack.c.l.b16 %v628
      %v3141 = vunpack.c.l.b16 %v629
      %v3142 = vunpack.c.l.b16 %v630
      %v3143 = vunpack.c.l.b16 %v631
      %v3144 = vunpack.c.l.b16 %v632
      %v3145 = vunpack.c.l.b16 %v633
      %v3146 = vunpack.c.l.b16 %v634
      %v3147 = vunpack.c.l.b16 %v635
      %v3148 = vunpack.c.l.b16 %v636
      %v3149 = vunpack.c.l.b16 %v637
      %v3150 = vunpack.c.l.b16 %v638
      %v3151 = vunpack.c.l.b16 %v639
      %v3152 = vunpack.c.l.b16 %v640
      %v3153 = vunpack.c.l.b16 %v641
      %v3154 = vunpack.c.l.b16 %v642
      %v3155 = vunpack.c.l.b16 %v643
      %v3156 = vunpack.c.l.b16 %v644
      %v3157 = vunpack.c.l.b16 %v645
      %v3158 = vunpack.c.l.b16 %v646
      %v3159 = vunpack.c.l.b16 %v647
      %v3160 = vunpack.c.l.b16 %v648
      %v3161 = vunpack.c.l.b16 %v649
      %v3162 = vunpack.c.l.b16 %v650
      %v3163 = vunpack.c.l.b16 %v651
      %v3164 = vunpack.c.l.b16 %v652
      %v3165 = vunpack.c.l.b16 %v653
      %v3166 = vunpack.c.l.b16 %v654
      %v3167 = vunpack.c.l.b16 %v655
      %v3168 = vunpack.c.l.b16 %v656
      %v3169 = vunpack.c.l.b16 %v657
      %v3170 = vunpack.c.l.b16 %v658
      %v3171 = vunpack.c.l.b16 %v659
      %v3172 = vunpack.c.l.b16 %v660
      %v3173 = vunpack.c.l.b16 %v661
      %v3174 = vunpack.c.l.b16 %v662
      %v3175 = vunpack.c.l.b16 %v663
      %v3176 = vunpack.c.l.b16 %v664
      %v3177 = vunpack.c.l.b16 %v665
      %v3178 = vunpack.c.l.b16 %v666
      %v3179 = vunpack.c.l.b16 %v667
      %v3180 = vunpack.c.l.b16 %v668
      %v3181 = vunpack.c.l.b16 %v669
      %v3182 = vunpack.c.l.b16 %v670
      %v3183 = vunpack.c.l.b16 %v671
      %v3184 = vunpack.c.l.b16 %v672
      %v3185 = vunpack.c.l.b16 %v673
      %v3186 = vunpack.c.l.b16 %v674
      %v3187 = vunpack.c.l.b16 %v675
      %v3188 = vunpack.c.l.b16 %v676
      %v3189 = vunpack.c.l.b16 %v677
      %v3190 = vunpack.c.l.b16 %v678
      %v3191 = vunpack.c.l.b16 %v679
      %v3192 = vunpack.c.l.b16 %v680
      %v3193 = vunpack.c.l.b16 %v681
      %v3194 = vunpack.c.l.b16 %v682
      %v3195 = vunpack.c.l.b16 %v683
      %v3196 = vunpack.c.l.b16 %v684
      %v3197 = vunpack.c.l.b16 %v685
      %v3198 = vunpack.c.l.b16 %v686
      %v3199 = vunpack.c.l.b16 %v687
      %v3200 = vunpack.c.l.b16 %v688
      %v3201 = vunpack.c.l.b16 %v689
      %v3202 = vunpack.c.l.b16 %v690
      %v3203 = vunpack.c.l.b16 %v691
      %v3204 = vunpack.c.l.b16 %v692
      %v3205 = vunpack.c.l.b16 %v693
      %v3206 = vunpack.c.l.b16 %v694
      %v3207 = vunpack.c.l.b16 %v695
      %v3208 = vunpack.c.l.b16 %v696
      %v3209 = vunpack.c.l.b16 %v697
      %v3210 = vunpack.c.l.b16 %v698
      %v3211 = vunpack.c.l.b16 %v699
      %v3212 = vunpack.c.l.b16 %v700
      %v3213 = vunpack.c.l.b16 %v701
      %v3214 = vunpack.c.l.b16 %v702
      %v3215 = vunpack.c.l.b16 %v703
      %v3216 = vunpack.c.l.b16 %v704
      %v3217 = vunpack.c.l.b16 %v705
      %v3218 = vunpack.c.l.b16 %v706
      %v3219 = vunpack.c.l.b16 %v707
      %v3220 = vunpack.c.l.b16 %v708
      %v3221 = vunpack.c.l.b16 %v709
      %v3222 = vunpack.c.l.b16 %v710
      %v3223 = vunpack.c.l.b16 %v711
      %v3224 = vunpack.c.l.b16 %v712
      %v3225 = vunpack.c.l.b16 %v713
      %v3226 = vunpack.c.l.b16 %v714
      %v3227 = vunpack.c.l.b16 %v715
      %v3228 = vunpack.c.l.b16 %v716
      %v3229 = vunpack.c.l.b16 %v717
      %v3230 = vunpack.c.l.b16 %v718
      %v3231 = vunpack.c.l.b16 %v719
      %v3232 = vunpack.c.l.b16 %v720
      %v3233 = vunpack.c.l.b16 %v721
      %v3234 = vunpack.c.l.b16 %v722
      %v3235 = vunpack.c.l.b16 %v723
      %v3236 = vunpack.c.l.b16 %v724
      %v3237 = vunpack.c.l.b16 %v725
      %v3238 = vunpack.c.l.b16 %v726
      %v3239 = vunpack.c.l.b16 %v727
      %v3240 = vunpack.c.l.b16 %v728
      %v3241 = vunpack.c.l.b16 %v729
      %v3242 = vunpack.c.l.b16 %v730
      %v3243 = vunpack.c.l.b16 %v731
      %v3244 = vunpack.c.l.b16 %v732
      %v3245 = vunpack.c.l.b16 %v733
      %v3246 = vunpack.c.l.b16 %v734
      %v3247 = vunpack.c.l.b16 %v735
      %v3248 = vunpack.c.l.b16 %v736
      %v3249 = vunpack.c.l.b16 %v737
      %v3250 = vunpack.c.l.b16 %v738
      %v3251 = vunpack.c.l.b16 %v739
      %v3252 = vunpack.c.l.b16 %v740
      %v3253 = vunpack.c.l.b16 %v741
      %v3254 = vunpack.c.l.b16 %v742
      %v3255 = vunpack.c.l.b16 %v743
      %v3256 = vunpack.c.l.b16 %v744
      %v3257 = vunpack.c.l.b16 %v745
      %v3258 = vunpack.c.l.b16 %v746
      %v3259 = vunpack.c.l.b16 %v747
      %v3260 = vunpack.c.l.b16 %v748
      %v3261 = vunpack.c.l.b16 %v749
      %v3262 = vunpack.c.l.b16 %v750
      %v3263 = vunpack.c.l.b16 %v751
      %v3264 = vunpack.c.l.b16 %v752
      %v3265 = vunpack.c.l.b16 %v753
      %v3266 = vunpack.c.l.b16 %v754
      %v3267 = vunpack.c.l.b16 %v755
      %v3268 = vunpack.c.l.b16 %v756
      %v3269 = vunpack.c.l.b16 %v757
      %v3270 = vunpack.c.l.b16 %v758
      %v3271 = vunpack.c.l.b16 %v759
      %v3272 = vunpack.c.l.b16 %v760
      %v3273 = vunpack.c.l.b16 %v761
      %v3274 = vunpack.c.l.b16 %v762
      %v3275 = vunpack.c.l.b16 %v763
      %v3276 = vunpack.c.l.b16 %v764
      %v3277 = vunpack.c.l.b16 %v765
      %v3278 = vunpack.c.l.b16 %v766
      %v3279 = vunpack.c.l.b16 %v767
      %v3280 = vunpack.c.l.b16 %v768
      %v3281 = vunpack.c.l.b16 %v769
      %v3282 = vunpack.c.l.b16 %v770
      %v3283 = vunpack.c.l.b16 %v771
      %v3284 = vunpack.c.l.b16 %v772
      %v3285 = vunpack.c.l.b16 %v773
      %v3286 = vunpack.c.l.b16 %v774
      %v3287 = vunpack.c.l.b16 %v775
      %v3288 = vunpack.c.l.b16 %v776
      %v3289 = vunpack.c.l.b16 %v777
      %v3290 = vunpack.c.l.b16 %v778
      %v3291 = vunpack.c.l.b16 %v779
      %v3292 = vunpack.c.l.b16 %v780
      %v3293 = vunpack.c.l.b16 %v781
      %v3294 = vunpack.c.l.b16 %v782
      %v3295 = vunpack.c.l.b16 %v783
      %v3296 = vunpack.c.l.b16 %v784
      %v3297 = vunpack.c.l.b16 %v785
      %v3298 = vunpack.c.l.b16 %v786
      %v3299 = vunpack.c.l.b16 %v787
      %v3300 = vunpack.c.l.b16 %v788
      %v3301 = vunpack.c.l.b16 %v789
      %v3302 = vunpack.c.l.b16 %v790
      %v3303 = vunpack.c.l.b16 %v791
      %v3304 = vunpack.c.l.b16 %v792
      %v3305 = vunpack.c.l.b16 %v793
      %v3306 = vunpack.c.l.b16 %v794
      %v3307 = vunpack.c.l.b16 %v795
      %v3308 = vunpack.c.l.b16 %v796
      %v3309 = vunpack.c.l.b16 %v797
      %v3310 = vunpack.c.l.b16 %v798
      %v3311 = vunpack.c.l.b16 %v799
      %v3312 = vunpack.c.l.b16 %v800
      %v3313 = vunpack.c.l.b16 %v801
      %v3314 = vunpack.c.l.b16 %v802
      %v3315 = vunpack.c.l.b16 %v803
      %v3316 = vunpack.c.l.b16 %v804
      %v3317 = vunpack.c.l.b16 %v805
      %v3318 = vunpack.c.l.b16 %v806
      %v3319 = vunpack.c.l.b16 %v807
      %v3320 = vunpack.c.l.b16 %v808
      %v3321 = vunpack.c.l.b16 %v809
      %v3322 = vunpack.c.l.b16 %v810
      %v3323 = vunpack.c.l.b16 %v811
      %v3324 = vunpack.c.l.b16 %v812
      %v3325 = vunpack.c.l.b16 %v813
      %v3326 = vunpack.c.l.b16 %v814
      %v3327 = vunpack.c.l.b16 %v815
      %v3328 = vunpack.c.l.b16 %v816
      %v3329 = vunpack.c.l.b16 %v817
      %v3330 = vunpack.c.l.b16 %v818
      %v3331 = vunpack.c.l.b16 %v819
      %v3332 = vunpack.c.l.b16 %v820
      %v3333 = vunpack.c.l.b16 %v821
      %v3334 = vunpack.c.l.b16 %v822
      %v3335 = vunpack.c.l.b16 %v823
      %v3336 = vunpack.c.l.b16 %v824
      %v3337 = vunpack.c.l.b16 %v825
      %v3338 = vunpack.c.l.b16 %v826
      %v3339 = vunpack.c.l.b16 %v827
      %v3340 = vunpack.c.l.b16 %v828
      %v3341 = vunpack.c.l.b16 %v829
      %v3342 = vunpack.c.l.b16 %v830
      %v3343 = vunpack.c.l.b16 %v831
      %v3344 = vunpack.c.l.b16 %v832
      %v3345 = vunpack.c.l.b16 %v833
      %v3346 = vunpack.c.l.b16 %v834
      %v3347 = vunpack.c.l.b16 %v835
      %v3348 = vunpack.c.l.b16 %v836
      %v3349 = vunpack.c.l.b16 %v837
      %v3350 = vunpack.c.l.b16 %v838
      %v3351 = vunpack.c.l.b16 %v839
      %v3352 = vunpack.c.l.b16 %v840
      %v3353 = vunpack.c.l.b16 %v841
      %v3354 = vunpack.c.l.b16 %v842
      %v3355 = vunpack.c.l.b16 %v843
      %v3356 = vunpack.c.l.b16 %v844
      %v3357 = vunpack.c.l.b16 %v845
      %v3358 = vunpack.c.l.b16 %v846
      %v3359 = vunpack.c.l.b16 %v847
      %v3360 = vunpack.c.l.b16 %v848
      %v3361 = vunpack.c.l.b16 %v849
      %v3362 = vunpack.c.l.b16 %v850
      %v3363 = vunpack.c.l.b16 %v851
      %v3364 = vunpack.c.l.b16 %v852
      %v3365 = vunpack.c.l.b16 %v853
      %v3366 = vunpack.c.l.b16 %v854
      %v3367 = vunpack.c.l.b16 %v855
      %v3368 = vunpack.c.l.b16 %v856
      %v3369 = vunpack.c.l.b16 %v857
      %v3370 = vunpack.c.l.b16 %v858
      %v3371 = vunpack.c.l.b16 %v859
      %v3372 = vunpack.c.l.b16 %v860
      %v3373 = vunpack.c.l.b16 %v861
      %v3374 = vunpack.c.l.b16 %v862
      %v3375 = vunpack.c.l.b16 %v863
      %v3376 = vunpack.c.l.b16 %v864
      %v3377 = vunpack.c.l.b16 %v865
      %v3378 = vunpack.c.l.b16 %v866
      %v3379 = vunpack.c.l.b16 %v867
      %v3380 = vunpack.c.l.b16 %v868
      %v3381 = vunpack.c.l.b16 %v869
      %v3382 = vunpack.c.l.b16 %v870
      %v3383 = vunpack.c.l.b16 %v871
      %v3384 = vunpack.c.l.b16 %v872
      %v3385 = vunpack.c.l.b16 %v873
      %v3386 = vunpack.c.l.b16 %v874
      %v3387 = vunpack.c.l.b16 %v875
      %v3388 = vunpack.c.l.b16 %v876
      %v3389 = vunpack.c.l.b16 %v877
      %v3390 = vunpack.c.l.b16 %v878
      %v3391 = vunpack.c.l.b16 %v879
      %v3392 = vunpack.c.l.b16 %v880
      %v3393 = vunpack.c.l.b16 %v881
      %v3394 = vunpack.c.l.b16 %v882
      %v3395 = vunpack.c.l.b16 %v883
      %v3396 = vunpack.c.l.b16 %v884
      %v3397 = vunpack.c.l.b16 %v885
      %v3398 = vunpack.c.l.b16 %v886
      %v3399 = vunpack.c.l.b16 %v887
      %v3400 = vunpack.c.l.b16 %v888
      %v3401 = vunpack.c.l.b16 %v889
      %v3402 = vunpack.c.l.b16 %v890
      %v3403 = vunpack.c.l.b16 %v891
      %v3404 = vunpack.c.l.b16 %v892
      %v3405 = vunpack.c.l.b16 %v893
      %v3406 = vunpack.c.l.b16 %v894
      %v3407 = vunpack.c.l.b16 %v895
      %v3408 = vunpack.c.l.b16 %v896
      %v3409 = vunpack.c.l.b16 %v897
      %v3410 = vunpack.c.l.b16 %v898
      %v3411 = vunpack.c.l.b16 %v899
      %v3412 = vunpack.c.l.b16 %v900
      %v3413 = vunpack.c.l.b16 %v901
      %v3414 = vunpack.c.l.b16 %v902
      %v3415 = vunpack.c.l.b16 %v903
      %v3416 = vunpack.c.l.b16 %v904
      %v3417 = vunpack.c.l.b16 %v905
      %v3418 = vunpack.c.l.b16 %v906
      %v3419 = vunpack.c.l.b16 %v907
      %v3420 = vunpack.c.l.b16 %v908
      %v3421 = vunpack.c.l.b16 %v909
      %v3422 = vunpack.c.l.b16 %v910
      %v3423 = vunpack.c.l.b16 %v911
      %v3424 = vunpack.c.l.b16 %v912
      %v3425 = vunpack.c.l.b16 %v913
      %v3426 = vunpack.c.l.b16 %v914
      %v3427 = vunpack.c.l.b16 %v915
      %v3428 = vunpack.c.l.b16 %v916
      %v3429 = vunpack.c.l.b16 %v917
      %v3430 = vunpack.c.l.b16 %v918
      %v3431 = vunpack.c.l.b16 %v919
      %v3432 = vunpack.c.l.b16 %v920
      %v3433 = vunpack.c.l.b16 %v921
      %v3434 = vunpack.c.l.b16 %v922
      %v3435 = vunpack.c.l.b16 %v923
      %v3436 = vunpack.c.l.b16 %v924
      %v3437 = vunpack.c.l.b16 %v925
      %v3438 = vunpack.c.l.b16 %v926
      %v3439 = vunpack.c.l.b16 %v927
      %v3440 = vunpack.c.l.b16 %v928
      %v3441 = vunpack.c.l.b16 %v929
      %v3442 = vunpack.c.l.b16 %v930
      %v3443 = vunpack.c.l.b16 %v931
      %v3444 = vunpack.c.l.b16 %v932
      %v3445 = vunpack.c.l.b16 %v933
      %v3446 = vunpack.c.l.b16 %v934
      %v3447 = vunpack.c.l.b16 %v935
      %v3448 = vunpack.c.l.b16 %v936
      %v3449 = vunpack.c.l.b16 %v937
      %v3450 = vunpack.c.l.b16 %v938
      %v3451 = vunpack.c.l.b16 %v939
      %v3452 = vunpack.c.l.b16 %v940
      %v3453 = vunpack.c.l.b16 %v941
      %v3454 = vunpack.c.l.b16 %v942
      %v3455 = vunpack.c.l.b16 %v943
      %v3456 = vunpack.c.l.b16 %v944
      %v3457 = vunpack.c.l.b16 %v945
      %v3458 = vunpack.c.l.b16 %v946
      %v3459 = vunpack.c.l.b16 %v947
      %v3460 = vunpack.c.l.b16 %v948
      %v3461 = vunpack.c.l.b16 %v949
      %v3462 = vunpack.c.l.b16 %v950
      %v3463 = vunpack.c.l.b16 %v951
      %v3464 = vunpack.c.l.b16 %v952
      %v3465 = vunpack.c.l.b16 %v953
      %v3466 = vunpack.c.l.b16 %v954
      %v3467 = vunpack.c.l.b16 %v955
      %v3468 = vunpack.c.l.b16 %v956
      %v3469 = vunpack.c.l.b16 %v957
      %v3470 = vunpack.c.l.b16 %v958
      %v3471 = vunpack.c.l.b16 %v959
      %v3472 = vunpack.c.l.b16 %v960
      %v3473 = vunpack.c.l.b16 %v961
      %v3474 = vunpack.c.l.b16 %v962
      %v3475 = vunpack.c.l.b16 %v963
      %v3476 = vunpack.c.l.b16 %v964
      %v3477 = vunpack.c.l.b16 %v965
      %v3478 = vunpack.c.l.b16 %v966
      %v3479 = vunpack.c.l.b16 %v967
      %v3480 = vunpack.c.l.b16 %v968
      %v3481 = vunpack.c.l.b16 %v969
      %v3482 = vunpack.c.l.b16 %v970
      %v3483 = vunpack.c.l.b16 %v971
      %v3484 = vunpack.c.l.b16 %v972
      %v3485 = vunpack.c.l.b16 %v973
      %v3486 = vunpack.c.l.b16 %v974
      %v3487 = vunpack.c.l.b16 %v975
      %v3488 = vunpack.c.l.b16 %v976
      %v3489 = vunpack.c.l.b16 %v977
      %v3490 = vunpack.c.l.b16 %v978
      %v3491 = vunpack.c.l.b16 %v979
      %v3492 = vunpack.c.l.b16 %v980
      %v3493 = vunpack.c.l.b16 %v981
      %v3494 = vunpack.c.l.b16 %v982
      %v3495 = vunpack.c.l.b16 %v983
      %v3496 = vunpack.c.l.b16 %v984
      %v3497 = vunpack.c.l.b16 %v985
      %v3498 = vunpack.c.l.b16 %v986
      %v3499 = vunpack.c.l.b16 %v987
      %v3500 = vunpack.c.l.b16 %v988
      %v3501 = vunpack.c.l.b16 %v989
      %v3502 = vunpack.c.l.b16 %v990
      %v3503 = vunpack.c.l.b16 %v991
      %v3504 = vunpack.c.l.b16 %v992
      %v3505 = vunpack.c.l.b16 %v993
      %v3506 = vunpack.c.l.b16 %v994
      %v3507 = vunpack.c.l.b16 %v995
      %v3508 = vunpack.c.l.b16 %v996
      %v3509 = vunpack.c.l.b16 %v997
      %v3510 = vunpack.c.l.b16 %v998
      %v3511 = vunpack.c.l.b16 %v999
      %v3512 = vunpack.c.l.b16 %v1000
      %v3513 = vunpack.c.l.b16 %v1001
      %v3514 = vunpack.c.l.b16 %v1002
      %v3515 = vunpack.c.l.b16 %v1003
      %v3516 = vunpack.c.l.b16 %v1004
      %v3517 = vunpack.c.l.b16 %v1005
      %v3518 = vunpack.c.l.b16 %v1006
      %v3519 = vunpack.c.l.b16 %v1007
      %v3520 = vunpack.c.l.b16 %v1008
      %v3521 = vunpack.c.l.b16 %v1009
      %v3522 = vunpack.c.l.b16 %v1010
      %v3523 = vunpack.c.l.b16 %v1011
      %v3524 = vunpack.c.l.b16 %v1012
      %v3525 = vunpack.c.l.b16 %v1013
      %v3526 = vunpack.c.l.b16 %v1014
      %v3527 = vunpack.c.l.b16 %v1015
      %v3528 = vunpack.c.l.b16 %v1016
      %v3529 = vunpack.c.l.b16 %v1017
      %v3530 = vunpack.c.l.b16 %v1018
      %v3531 = vunpack.c.l.b16 %v1019
      %v3532 = vunpack.c.l.b16 %v1020
      %v3533 = vunpack.c.l.b16 %v1021
      %v3534 = vunpack.c.l.b16 %v1022
      %v3535 = vunpack.c.l.b16 %v1023
      %v3536 = vunpack.c.l.b16 %v1024
      %v3537 = vunpack.c.l.b16 %v1025
      %v3538 = vunpack.c.l.b16 %v1026
      %v3539 = vunpack.c.l.b16 %v1027
      %v3540 = vunpack.c.l.b16 %v1028
      %v3541 = vunpack.c.l.b16 %v1029
      %v3542 = vunpack.c.l.b16 %v1030
      %v3543 = vunpack.c.l.b16 %v1031
      %v3544 = vunpack.c.l.b16 %v1032
      %v3545 = vunpack.c.l.b16 %v1033
      %v3546 = vunpack.c.l.b16 %v1034
      %v3547 = vunpack.c.l.b16 %v1035
      %v3548 = vunpack.c.l.b16 %v1036
      %v3549 = vunpack.c.l.b16 %v1037
      %v3550 = vunpack.c.l.b16 %v1038
      %v3551 = vunpack.c.l.b16 %v1039
      %v3552 = vunpack.c.l.b16 %v1040
      %v3553 = vunpack.c.l.b16 %v1041
      %v3554 = vunpack.c.l.b16 %v1042
      %v3555 = vunpack.c.l.b16 %v1043
      %v3556 = vunpack.c.l.b16 %v1044
      %v3557 = vunpack.c.l.b16 %v1045
      %v3558 = vunpack.c.l.b16 %v1046
      %v3559 = vunpack.c.l.b16 %v1047
      %v3560 = vunpack.c.l.b16 %v1048
      %v3561 = vunpack.c.l.b16 %v1049
      %v3562 = vunpack.c.l.b16 %v1050
      %v3563 = vunpack.c.l.b16 %v1051
      %v3564 = vunpack.c.l.b16 %v1052
      %v3565 = vunpack.c.l.b16 %v1053
      %v3566 = vunpack.c.l.b16 %v1054
      %v3567 = vunpack.c.l.b16 %v1055
      %v3568 = vunpack.c.l.b16 %v1056
      %v3569 = vunpack.c.l.b16 %v1057
      %v3570 = vunpack.c.l.b16 %v1058
      %v3571 = vunpack.c.l.b16 %v1059
      %v3572 = vunpack.c.l.b16 %v1060
      %v3573 = vunpack.c.l.b16 %v1061
      %v3574 = vunpack.c.l.b16 %v1062
      %v3575 = vunpack.c.l.b16 %v1063
      %v3576 = vunpack.c.l.b16 %v1064
      %v3577 = vunpack.c.l.b16 %v1065
      %v3578 = vunpack.c.l.b16 %v1066
      %v3579 = vunpack.c.l.b16 %v1067
      %v3580 = vunpack.c.l.b16 %v1068
      %v3581 = vunpack.c.l.b16 %v1069
      %v3582 = vunpack.c.l.b16 %v1070
      %v3583 = vunpack.c.l.b16 %v1071
      %v3584 = vunpack.c.l.b16 %v1072
      %v3585 = vunpack.c.l.b16 %v1073
      %v3586 = vunpack.c.l.b16 %v1074
      %v3587 = vunpack.c.l.b16 %v1075
      %v3588 = vunpack.c.l.b16 %v1076
      %v3589 = vunpack.c.l.b16 %v1077
      %v3590 = vunpack.c.l.b16 %v1078
      %v3591 = vunpack.c.l.b16 %v1079
      %v3592 = vunpack.c.l.b16 %v1080
      %v3593 = vunpack.c.l.b16 %v1081
      %v3594 = vunpack.c.l.b16 %v1082
      %v3595 = vunpack.c.l.b16 %v1083
      %v3596 = vunpack.c.l.b16 %v1084
      %v3597 = vunpack.c.l.b16 %v1085
      %v3598 = vunpack.c.l.b16 %v1086
      %v3599 = vunpack.c.l.b16 %v1087
      %v3600 = vunpack.c.l.b16 %v1088
      %v3601 = vunpack.c.l.b16 %v1089
      %v3602 = vunpack.c.l.b16 %v1090
      %v3603 = vunpack.c.l.b16 %v1091
      %v3604 = vunpack.c.l.b16 %v1092
      %v3605 = vunpack.c.l.b16 %v1093
      %v3606 = vunpack.c.l.b16 %v1094
      %v3607 = vunpack.c.l.b16 %v1095
      %v3608 = vunpack.c.l.b16 %v1096
      %v3609 = vunpack.c.l.b16 %v1097
      %v3610 = vunpack.c.l.b16 %v1098
      %v3611 = vunpack.c.l.b16 %v1099
      %v3612 = vunpack.c.l.b16 %v1100
      %v3613 = vunpack.c.l.b16 %v1101
      %v3614 = vunpack.c.l.b16 %v1102
      %v3615 = vunpack.c.l.b16 %v1103
      %v3616 = vunpack.c.l.b16 %v1104
      %v3617 = vunpack.c.l.b16 %v1105
      %v3618 = vunpack.c.l.b16 %v1106
      %v3619 = vunpack.c.l.b16 %v1107
      %v3620 = vunpack.c.l.b16 %v1108
      %v3621 = vunpack.c.l.b16 %v1109
      %v3622 = vunpack.c.l.b16 %v1110
      %v3623 = vunpack.c.l.b16 %v1111
      %v3624 = vunpack.c.l.b16 %v1112
      %v3625 = vunpack.c.l.b16 %v1113
      %v3626 = vunpack.c.l.b16 %v1114
      %v3627 = vunpack.c.l.b16 %v1115
      %v3628 = vunpack.c.l.b16 %v1116
      %v3629 = vunpack.c.l.b16 %v1117
      %v3630 = vunpack.c.l.b16 %v1118
      %v3631 = vunpack.c.l.b16 %v1119
      %v3632 = vunpack.c.l.b16 %v1120
      %v3633 = vunpack.c.l.b16 %v1121
      %v3634 = vunpack.c.l.b16 %v1122
      %v3635 = vunpack.c.l.b16 %v1123
      %v3636 = vunpack.c.l.b16 %v1124
      %v3637 = vunpack.c.l.b16 %v1125
      %v3638 = vunpack.c.l.b16 %v1126
      %v3639 = vunpack.c.l.b16 %v1127
      %v3640 = vunpack.c.l.b16 %v1128
      %v3641 = vunpack.c.l.b16 %v1129
      %v3642 = vunpack.c.l.b16 %v1130
      %v3643 = vunpack.c.l.b16 %v1131
      %v3644 = vunpack.c.l.b16 %v1132
      %v3645 = vunpack.c.l.b16 %v1133
      %v3646 = vunpack.c.l.b16 %v1134
      %v3647 = vunpack.c.l.b16 %v1135
      %v3648 = vunpack.c.l.b16 %v1136
      %v3649 = vunpack.c.l.b16 %v1137
      %v3650 = vunpack.c.l.b16 %v1138
      %v3651 = vunpack.c.l.b16 %v1139
      %v3652 = vunpack.c.l.b16 %v1140
      %v3653 = vunpack.c.l.b16 %v1141
      %v3654 = vunpack.c.l.b16 %v1142
      %v3655 = vunpack.c.l.b16 %v1143
      %v3656 = vunpack.c.l.b16 %v1144
      %v3657 = vunpack.c.l.b16 %v1145
      %v3658 = vunpack.c.l.b16 %v1146
      %v3659 = vunpack.c.l.b16 %v1147
      %v3660 = vunpack.c.l.b16 %v1148
      %v3661 = vunpack.c.l.b16 %v1149
      %v3662 = vunpack.c.l.b16 %v1150
      %v3663 = vunpack.c.l.b16 %v1151
      %v3664 = vunpack.c.l.b16 %v1152
      %v3665 = vunpack.c.l.b16 %v1153
      %v3666 = vunpack.c.l.b16 %v1154
      %v3667 = vunpack.c.l.b16 %v1155
      %v3668 = vunpack.c.l.b16 %v1156
      %v3669 = vunpack.c.l.b16 %v1157
      %v3670 = vunpack.c.l.b16 %v1158
      %v3671 = vunpack.c.l.b16 %v1159
      %v3672 = vunpack.c.l.b16 %v1160
      %v3673 = vunpack.c.l.b16 %v1161
      %v3674 = vunpack.c.l.b16 %v1162
      %v3675 = vunpack.c.l.b16 %v1163
      %v3676 = vunpack.c.l.b16 %v1164
      %v3677 = vunpack.c.l.b16 %v1165
      %v3678 = vunpack.c.l.b16 %v1166
      %v3679 = vunpack.c.l.b16 %v1167
      %v3680 = vunpack.c.l.b16 %v1168
      %v3681 = vunpack.c.l.b16 %v1169
      %v3682 = vunpack.c.l.b16 %v1170
      %v3683 = vunpack.c.l.b16 %v1171
      %v3684 = vunpack.c.l.b16 %v1172
      %v3685 = vunpack.c.l.b16 %v1173
      %v3686 = vunpack.c.l.b16 %v1174
      %v3687 = vunpack.c.l.b16 %v1175
      %v3688 = vunpack.c.l.b16 %v1176
      %v3689 = vunpack.c.l.b16 %v1177
      %v3690 = vunpack.c.l.b16 %v1178
      %v3691 = vunpack.c.l.b16 %v1179
      %v3692 = vunpack.c.l.b16 %v1180
      %v3693 = vunpack.c.l.b16 %v1181
      %v3694 = vunpack.c.l.b16 %v1182
      %v3695 = vunpack.c.l.b16 %v1183
      %v3696 = vunpack.c.l.b16 %v1184
      %v3697 = vunpack.c.l.b16 %v1185
      %v3698 = vunpack.c.l.b16 %v1186
      %v3699 = vunpack.c.l.b16 %v1187
      %v3700 = vunpack.c.l.b16 %v1188
      %v3701 = vunpack.c.l.b16 %v1189
      %v3702 = vunpack.c.l.b16 %v1190
      %v3703 = vunpack.c.l.b16 %v1191
      %v3704 = vunpack.c.l.b16 %v1192
      %v3705 = vunpack.c.l.b16 %v1193
      %v3706 = vunpack.c.l.b16 %v1194
      %v3707 = vunpack.c.l.b16 %v1195
      %v3708 = vunpack.c.l.b16 %v1196
      %v3709 = vunpack.c.l.b16 %v1197
      %v3710 = vunpack.c.l.b16 %v1198
      %v3711 = vunpack.c.l.b16 %v1199
      %v3712 = vunpack.c.l.b16 %v1200
      %v3713 = vunpack.c.l.b16 %v1201
      %v3714 = vunpack.c.l.b16 %v1202
      %v3715 = vunpack.c.l.b16 %v1203
      %v3716 = vunpack.c.l.b16 %v1204
      %v3717 = vunpack.c.l.b16 %v1205
      %v3718 = vunpack.c.l.b16 %v1206
      %v3719 = vunpack.c.l.b16 %v1207
      %v3720 = vunpack.c.l.b16 %v1208
      %v3721 = vunpack.c.l.b16 %v1209
      %v3722 = vunpack.c.l.b16 %v1210
      %v3723 = vunpack.c.l.b16 %v1211
      %v3724 = vunpack.c.l.b16 %v1212
      %v3725 = vunpack.c.l.b16 %v1213
      %v3726 = vunpack.c.l.b16 %v1214
      %v3727 = vunpack.c.l.b16 %v1215
      %v3728 = vunpack.c.l.b16 %v1216
      %v3729 = vunpack.c.l.b16 %v1217
      %v3730 = vunpack.c.l.b16 %v1218
      %v3731 = vunpack.c.l.b16 %v1219
      %v3732 = vunpack.c.l.b16 %v1220
      %v3733 = vunpack.c.l.b16 %v1221
      %v3734 = vunpack.c.l.b16 %v1222
      %v3735 = vunpack.c.l.b16 %v1223
      %v3736 = vunpack.c.l.b16 %v1224
      %v3737 = vunpack.c.l.b16 %v1225
      %v3738 = vunpack.c.l.b16 %v1226
      %v3739 = vunpack.c.l.b16 %v1227
      %v3740 = vunpack.c.l.b16 %v1228
      %v3741 = vunpack.c.l.b16 %v1229
      %v3742 = vunpack.c.l.b16 %v1230
      %v3743 = vunpack.c.l.b16 %v1231
      %v3744 = vunpack.c.l.b16 %v1232
      %v3745 = vunpack.c.l.b16 %v1233
      %v3746 = vunpack.c.l.b16 %v1234
      %v3747 = vunpack.c.l.b16 %v1235
      %v3748 = vunpack.c.l.b16 %v1236
      %v3749 = vunpack.c.l.b16 %v1237
      %v3750 = vunpack.c.l.b16 %v1238
      %v3751 = vunpack.c.l.b16 %v1239
      %v3752 = vunpack.c.l.b16 %v1240
      %v3753 = vunpack.c.l.b16 %v1241
      %v3754 = vunpack.c.l.b16 %v1242
      %v3755 = vunpack.c.l.b16 %v1243
      %v3756 = vunpack.c.l.b16 %v1244
      %v3757 = vunpack.c.l.b16 %v1245
      %v3758 = vunpack.c.l.b16 %v1246
      %v3759 = vunpack.c.l.b16 %v1247
      %v3760 = vunpack.c.l.b16 %v1248
      %v3761 = vunpack.c.l.b16 %v1249
      %v3762 = vunpack.c.l.b16 %v1250
      %v3763 = vunpack.c.l.b16 %v1251
      %v3764 = vunpack.c.l.b16 %v1252
      %v3765 = vunpack.c.l.b16 %v1253
      %v3766 = vunpack.c.l.b16 %v1254
      %v3767 = vunpack.c.l.b16 %v1255
      %v3768 = vunpack.c.l.b16 %v1256
      %v3769 = vunpack.c.l.b16 %v1257
      %v3770 = vunpack.c.l.b16 %v1258
      %v3771 = vunpack.c.l.b16 %v1259
      %v3772 = vunpack.c.l.b16 %v1260
      %v3773 = vunpack.c.l.b16 %v1261
      %v3774 = vunpack.c.l.b16 %v1262
      %v3775 = vunpack.c.l.b16 %v1263
      %v3776 = vunpack.c.l.b16 %v1264
      %v3777 = vunpack.c.l.b16 %v1265
      %v3778 = vunpack.c.l.b16 %v1266
      %v3779 = vunpack.c.l.b16 %v1267
      %v3780 = vunpack.c.l.b16 %v1268
      %v3781 = vunpack.c.l.b16 %v1269
      %v3782 = vunpack.c.l.b16 %v1270
      %v3783 = vunpack.c.l.b16 %v1271
      %v3784 = vunpack.c.l.b16 %v1272
      %v3785 = vunpack.c.l.b16 %v1273
      %v3786 = vunpack.c.l.b16 %v1274
      %v3787 = vunpack.c.l.b16 %v1275
      %v3788 = vunpack.c.l.b16 %v1276
      %v3789 = vunpack.c.l.b16 %v1277
      %v3790 = vunpack.c.l.b16 %v1278
      %v3791 = vunpack.c.l.b16 %v1279
      %v3792 = vunpack.c.l.b16 %v1280
      %v3793 = vunpack.c.l.b16 %v1281
      %v3794 = vunpack.c.l.b16 %v1282
      %v3795 = vunpack.c.l.b16 %v1283
      %v3796 = vunpack.c.l.b16 %v1284
      %v3797 = vunpack.c.l.b16 %v1285
      %v3798 = vunpack.c.l.b16 %v1286
      %v3799 = vunpack.c.l.b16 %v1287
      %v3800 = vunpack.c.l.b16 %v1288
      %v3801 = vunpack.c.l.b16 %v1289
      %v3802 = vunpack.c.l.b16 %v1290
      %v3803 = vunpack.c.l.b16 %v1291
      %v3804 = vunpack.c.l.b16 %v1292
      %v3805 = vunpack.c.l.b16 %v1293
      %v3806 = vunpack.c.l.b16 %v1294
      %v3807 = vunpack.c.l.b16 %v1295
      %v3808 = vunpack.c.l.b16 %v1296
      %v3809 = vunpack.c.l.b16 %v1297
      %v3810 = vunpack.c.l.b16 %v1298
      %v3811 = vunpack.c.l.b16 %v1299
      %v3812 = vunpack.c.l.b16 %v1300
      %v3813 = vunpack.c.l.b16 %v1301
      %v3814 = vunpack.c.l.b16 %v1302
      %v3815 = vunpack.c.l.b16 %v1303
      %v3816 = vunpack.c.l.b16 %v1304
      %v3817 = vunpack.c.l.b16 %v1305
      %v3818 = vunpack.c.l.b16 %v1306
      %v3819 = vunpack.c.l.b16 %v1307
      %v3820 = vunpack.c.l.b16 %v1308
      %v3821 = vunpack.c.l.b16 %v1309
      %v3822 = vunpack.c.l.b16 %v1310
      %v3823 = vunpack.c.l.b16 %v1311
      %v3824 = vunpack.c.l.b16 %v1312
      %v3825 = vunpack.c.l.b16 %v1313
      %v3826 = vunpack.c.l.b16 %v1314
      %v3827 = vunpack.c.l.b16 %v1315
      %v3828 = vunpack.c.l.b16 %v1316
      %v3829 = vunpack.c.l.b16 %v1317
      %v3830 = vunpack.c.l.b16 %v1318
      %v3831 = vunpack.c.l.b16 %v1319
      %v3832 = vunpack.c.l.b16 %v1320
      %v3833 = vunpack.c.l.b16 %v1321
      %v3834 = vunpack.c.l.b16 %v1322
      %v3835 = vunpack.c.l.b16 %v1323
      %v3836 = vunpack.c.l.b16 %v1324
      %v3837 = vunpack.c.l.b16 %v1325
      %v3838 = vunpack.c.l.b16 %v1326
      %v3839 = vunpack.c.l.b16 %v1327
      %v3840 = vunpack.c.l.b16 %v1328
      %v3841 = vunpack.c.l.b16 %v1329
      %v3842 = vunpack.c.l.b16 %v1330
      %v3843 = vunpack.c.l.b16 %v1331
      %v3844 = vunpack.c.l.b16 %v1332
      %v3845 = vunpack.c.l.b16 %v1333
      %v3846 = vunpack.c.l.b16 %v1334
      %v3847 = vunpack.c.l.b16 %v1335
      %v3848 = vunpack.c.l.b16 %v1336
      %v3849 = vunpack.c.l.b16 %v1337
      %v3850 = vunpack.c.l.b16 %v1338
      %v3851 = vunpack.c.l.b16 %v1339
      %v3852 = vunpack.c.l.b16 %v1340
      %v3853 = vunpack.c.l.b16 %v1341
      %v3854 = vunpack.c.l.b16 %v1342
      %v3855 = vunpack.c.l.b16 %v1343
      %v3856 = vunpack.c.l.b16 %v1344
      %v3857 = vunpack.c.l.b16 %v1345
      %v3858 = vunpack.c.l.b16 %v1346
      %v3859 = vunpack.c.l.b16 %v1347
      %v3860 = vunpack.c.l.b16 %v1348
      %v3861 = vunpack.c.l.b16 %v1349
      %v3862 = vunpack.c.l.b16 %v1350
      %v3863 = vunpack.c.l.b16 %v1351
      %v3864 = vunpack.c.l.b16 %v1352
      %v3865 = vunpack.c.l.b16 %v1353
      %v3866 = vunpack.c.l.b16 %v1354
      %v3867 = vunpack.c.l.b16 %v1355
      %v3868 = vunpack.c.l.b16 %v1356
      %v3869 = vunpack.c.l.b16 %v1357
      %v3870 = vunpack.c.l.b16 %v1358
      %v3871 = vunpack.c.l.b16 %v1359
      %v3872 = vunpack.c.l.b16 %v1360
      %v3873 = vunpack.c.l.b16 %v1361
      %v3874 = vunpack.c.l.b16 %v1362
      %v3875 = vunpack.c.l.b16 %v1363
      %v3876 = vunpack.c.l.b16 %v1364
      %v3877 = vunpack.c.l.b16 %v1365
      %v3878 = vunpack.c.l.b16 %v1366
      %v3879 = vunpack.c.l.b16 %v1367
      %v3880 = vunpack.c.l.b16 %v1368
      %v3881 = vunpack.c.l.b16 %v1369
      %v3882 = vunpack.c.l.b16 %v1370
      %v3883 = vunpack.c.l.b16 %v1371
      %v3884 = vunpack.c.l.b16 %v1372
      %v3885 = vunpack.c.l.b16 %v1373
      %v3886 = vunpack.c.l.b16 %v1374
      %v3887 = vunpack.c.l.b16 %v1375
      %v3888 = vunpack.c.l.b16 %v1376
      %v3889 = vunpack.c.l.b16 %v1377
      %v3890 = vunpack.c.l.b16 %v1378
      %v3891 = vunpack.c.l.b16 %v1379
      %v3892 = vunpack.c.l.b16 %v1380
      %v3893 = vpack.c.b16 %v2870, %v2869
      %v3894 = vpack.c.b16 %v2872, %v2871
      %v3895 = vpack.c.b16 %v2874, %v2873
      %v3896 = vpack.c.b16 %v2876, %v2875
      %v3897 = vpack.c.b16 %v2878, %v2877
      %v3898 = vpack.c.b16 %v2880, %v2879
      %v3899 = vpack.c.b16 %v2882, %v2881
      %v3900 = vpack.c.b16 %v2884, %v2883
      %v3901 = vpack.c.b16 %v2886, %v2885
      %v3902 = vpack.c.b16 %v2888, %v2887
      %v3903 = vpack.c.b16 %v2890, %v2889
      %v3904 = vpack.c.b16 %v2892, %v2891
      %v3905 = vpack.c.b16 %v2894, %v2893
      %v3906 = vpack.c.b16 %v2896, %v2895
      %v3907 = vpack.c.b16 %v2898, %v2897
      %v3908 = vpack.c.b16 %v2900, %v2899
      %v3909 = vpack.c.b16 %v2902, %v2901
      %v3910 = vpack.c.b16 %v2904, %v2903
      %v3911 = vpack.c.b16 %v2906, %v2905
      %v3912 = vpack.c.b16 %v2908, %v2907
      %v3913 = vpack.c.b16 %v2910, %v2909
      %v3914 = vpack.c.b16 %v2912, %v2911
      %v3915 = vpack.c.b16 %v2914, %v2913
      %v3916 = vpack.c.b16 %v2916, %v2915
      %v3917 = vpack.c.b16 %v2918, %v2917
      %v3918 = vpack.c.b16 %v2920, %v2919
      %v3919 = vpack.c.b16 %v2922, %v2921
      %v3920 = vpack.c.b16 %v2924, %v2923
      %v3921 = vpack.c.b16 %v2926, %v2925
      %v3922 = vpack.c.b16 %v2928, %v2927
      %v3923 = vpack.c.b16 %v2930, %v2929
      %v3924 = vpack.c.b16 %v2932, %v2931
      %v3925 = vpack.c.b16 %v2934, %v2933
      %v3926 = vpack.c.b16 %v2936, %v2935
      %v3927 = vpack.c.b16 %v2938, %v2937
      %v3928 = vpack.c.b16 %v2940, %v2939
      %v3929 = vpack.c.b16 %v2942, %v2941
      %v3930 = vpack.c.b16 %v2944, %v2943
      %v3931 = vpack.c.b16 %v2946, %v2945
      %v3932 = vpack.c.b16 %v2948, %v2947
      %v3933 = vpack.c.b16 %v2950, %v2949
      %v3934 = vpack.c.b16 %v2952, %v2951
      %v3935 = vpack.c.b16 %v2954, %v2953
      %v3936 = vpack.c.b16 %v2956, %v2955
      %v3937 = vpack.c.b16 %v2958, %v2957
      %v3938 = vpack.c.b16 %v2960, %v2959
      %v3939 = vpack.c.b16 %v2962, %v2961
      %v3940 = vpack.c.b16 %v2964, %v2963
      %v3941 = vpack.c.b16 %v2966, %v2965
      %v3942 = vpack.c.b16 %v2968, %v2967
      %v3943 = vpack.c.b16 %v2970, %v2969
      %v3944 = vpack.c.b16 %v2972, %v2971
      %v3945 = vpack.c.b16 %v2974, %v2973
      %v3946 = vpack.c.b16 %v2976, %v2975
      %v3947 = vpack.c.b16 %v2978, %v2977
      %v3948 = vpack.c.b16 %v2980, %v2979
      %v3949 = vpack.c.b16 %v2982, %v2981
      %v3950 = vpack.c.b16 %v2984, %v2983
      %v3951 = vpack.c.b16 %v2986, %v2985
      %v3952 = vpack.c.b16 %v2988, %v2987
      %v3953 = vpack.c.b16 %v2990, %v2989
      %v3954 = vpack.c.b16 %v2992, %v2991
      %v3955 = vpack.c.b16 %v2994, %v2993
      %v3956 = vpack.c.b16 %v2996, %v2995
      %v3957 = vpack.c.b16 %v2998, %v2997
      %v3958 = vpack.c.b16 %v3000, %v2999
      %v3959 = vpack.c.b16 %v3002, %v3001
      %v3960 = vpack.c.b16 %v3004, %v3003
      %v3961 = vpack.c.b16 %v3006, %v3005
      %v3962 = vpack.c.b16 %v3008, %v3007
      %v3963 = vpack.c.b16 %v3010, %v3009
      %v3964 = vpack.c.b16 %v3012, %v3011
      %v3965 = vpack.c.b16 %v3014, %v3013
      %v3966 = vpack.c.b16 %v3016, %v3015
      %v3967 = vpack.c.b16 %v3018, %v3017
      %v3968 = vpack.c.b16 %v3020, %v3019
      %v3969 = vpack.c.b16 %v3022, %v3021
      %v3970 = vpack.c.b16 %v3024, %v3023
      %v3971 = vpack.c.b16 %v3026, %v3025
      %v3972 = vpack.c.b16 %v3028, %v3027
      %v3973 = vpack.c.b16 %v3030, %v3029
      %v3974 = vpack.c.b16 %v3032, %v3031
      %v3975 = vpack.c.b16 %v3034, %v3033
      %v3976 = vpack.c.b16 %v3036, %v3035
      %v3977 = vpack.c.b16 %v3038, %v3037
      %v3978 = vpack.c.b16 %v3040, %v3039
      %v3979 = vpack.c.b16 %v3042, %v3041
      %v3980 = vpack.c.b16 %v3044, %v3043
      %v3981 = vpack.c.b16 %v3046, %v3045
      %v3982 = vpack.c.b16 %v3048, %v3047
      %v3983 = vpack.c.b16 %v3050, %v3049
      %v3984 = vpack.c.b16 %v3052, %v3051
      %v3985 = vpack.c.b16 %v3054, %v3053
      %v3986 = vpack.c.b16 %v3056, %v3055
      %v3987 = vpack.c.b16 %v3058, %v3057
      %v3988 = vpack.c.b16 %v3060, %v3059
      %v3989 = vpack.c.b16 %v3062, %v3061
      %v3990 = vpack.c.b16 %v3064, %v3063
      %v3991 = vpack.c.b16 %v3066, %v3065
      %v3992 = vpack.c.b16 %v3068, %v3067
      %v3993 = vpack.c.b16 %v3070, %v3069
      %v3994 = vpack.c.b16 %v3072, %v3071
      %v3995 = vpack.c.b16 %v3074, %v3073
      %v3996 = vpack.c.b16 %v3076, %v3075
      %v3997 = vpack.c.b16 %v3078, %v3077
      %v3998 = vpack.c.b16 %v3080, %v3079
      %v3999 = vpack.c.b16 %v3082, %v3081
      %v4000 = vpack.c.b16 %v3084, %v3083
      %v4001 = vpack.c.b16 %v3086, %v3085
      %v4002 = vpack.c.b16 %v3088, %v3087
      %v4003 = vpack.c.b16 %v3090, %v3089
      %v4004 = vpack.c.b16 %v3092, %v3091
      %v4005 = vpack.c.b16 %v3094, %v3093
      %v4006 = vpack.c.b16 %v3096, %v3095
      %v4007 = vpack.c.b16 %v3098, %v3097
      %v4008 = vpack.c.b16 %v3100, %v3099
      %v4009 = vpack.c.b16 %v3102, %v3101
      %v4010 = vpack.c.b16 %v3104, %v3103
      %v4011 = vpack.c.b16 %v3106, %v3105
      %v4012 = vpack.c.b16 %v3108, %v3107
      %v4013 = vpack.c.b16 %v3110, %v3109
      %v4014 = vpack.c.b16 %v3112, %v3111
      %v4015 = vpack.c.b16 %v3114, %v3113
      %v4016 = vpack.c.b16 %v3116, %v3115
      %v4017 = vpack.c.b16 %v3118, %v3117
      %v4018 = vpack.c.b16 %v3120, %v3119
      %v4019 = vpack.c.b16 %v3122, %v3121
      %v4020 = vpack.c.b16 %v3124, %v3123
      %v4021 = vpack.c.b16 %v3126, %v3125
      %v4022 = vpack.c.b16 %v3128, %v3127
      %v4023 = vpack.c.b16 %v3130, %v3129
      %v4024 = vpack.c.b16 %v3132, %v3131
      %v4025 = vpack.c.b16 %v3134, %v3133
      %v4026 = vpack.c.b16 %v3136, %v3135
      %v4027 = vpack.c.b16 %v3138, %v3137
      %v4028 = vpack.c.b16 %v3140, %v3139
      %v4029 = vpack.c.b16 %v3142, %v3141
      %v4030 = vpack.c.b16 %v3144, %v3143
      %v4031 = vpack.c.b16 %v3146, %v3145
      %v4032 = vpack.c.b16 %v3148, %v3147
      %v4033 = vpack.c.b16 %v3150, %v3149
      %v4034 = vpack.c.b16 %v3152, %v3151
      %v4035 = vpack.c.b16 %v3154, %v3153
      %v4036 = vpack.c.b16 %v3156, %v3155
      %v4037 = vpack.c.b16 %v3158, %v3157
      %v4038 = vpack.c.b16 %v3160, %v3159
      %v4039 = vpack.c.b16 %v3162, %v3161
      %v4040 = vpack.c.b16 %v3164, %v3163
      %v4041 = vpack.c.b16 %v3166, %v3165
      %v4042 = vpack.c.b16 %v3168, %v3167
      %v4043 = vpack.c.b16 %v3170, %v3169
      %v4044 = vpack.c.b16 %v3172, %v3171
      %v4045 = vpack.c.b16 %v3174, %v3173
      %v4046 = vpack.c.b16 %v3176, %v3175
      %v4047 = vpack.c.b16 %v3178, %v3177
      %v4048 = vpack.c.b16 %v3180, %v3179
      %v4049 = vpack.c.b16 %v3182, %v3181
      %v4050 = vpack.c.b16 %v3184, %v3183
      %v4051 = vpack.c.b16 %v3186, %v3185
      %v4052 = vpack.c.b16 %v3188, %v3187
      %v4053 = vpack.c.b16 %v3190, %v3189
      %v4054 = vpack.c.b16 %v3192, %v3191
      %v4055 = vpack.c.b16 %v3194, %v3193
      %v4056 = vpack.c.b16 %v3196, %v3195
      %v4057 = vpack.c.b16 %v3198, %v3197
      %v4058 = vpack.c.b16 %v3200, %v3199
      %v4059 = vpack.c.b16 %v3202, %v3201
      %v4060 = vpack.c.b16 %v3204, %v3203
      %v4061 = vpack.c.b16 %v3206, %v3205
      %v4062 = vpack.c.b16 %v3208, %v3207
      %v4063 = vpack.c.b16 %v3210, %v3209
      %v4064 = vpack.c.b16 %v3212, %v3211
      %v4065 = vpack.c.b16 %v3214, %v3213
      %v4066 = vpack.c.b16 %v3216, %v3215
      %v4067 = vpack.c.b16 %v3218, %v3217
      %v4068 = vpack.c.b16 %v3220, %v3219
      %v4069 = vpack.c.b16 %v3222, %v3221
      %v4070 = vpack.c.b16 %v3224, %v3223
      %v4071 = vpack.c.b16 %v3226, %v3225
      %v4072 = vpack.c.b16 %v3228, %v3227
      %v4073 = vpack.c.b16 %v3230, %v3229
      %v4074 = vpack.c.b16 %v3232, %v3231
      %v4075 = vpack.c.b16 %v3234, %v3233
      %v4076 = vpack.c.b16 %v3236, %v3235
      %v4077 = vpack.c.b16 %v3238, %v3237
      %v4078 = vpack.c.b16 %v3240, %v3239
      %v4079 = vpack.c.b16 %v3242, %v3241
      %v4080 = vpack.c.b16 %v3244, %v3243
      %v4081 = vpack.c.b16 %v3246, %v3245
      %v4082 = vpack.c.b16 %v3248, %v3247
      %v4083 = vpack.c.b16 %v3250, %v3249
      %v4084 = vpack.c.b16 %v3252, %v3251
      %v4085 = vpack.c.b16 %v3254, %v3253
      %v4086 = vpack.c.b16 %v3256, %v3255
      %v4087 = vpack.c.b16 %v3258, %v3257
      %v4088 = vpack.c.b16 %v3260, %v3259
      %v4089 = vpack.c.b16 %v3262, %v3261
      %v4090 = vpack.c.b16 %v3264, %v3263
      %v4091 = vpack.c.b16 %v3266, %v3265
      %v4092 = vpack.c.b16 %v3268, %v3267
      %v4093 = vpack.c.b16 %v3270, %v3269
      %v4094 = vpack.c.b16 %v3272, %v3271
      %v4095 = vpack.c.b16 %v3274, %v3273
      %v4096 = vpack.c.b16 %v3276, %v3275
      %v4097 = vpack.c.b16 %v3278, %v3277
      %v4098 = vpack.c.b16 %v3280, %v3279
      %v4099 = vpack.c.b16 %v3282, %v3281
      %v4100 = vpack.c.b16 %v3284, %v3283
      %v4101 = vpack.c.b16 %v3286, %v3285
      %v4102 = vpack.c.b16 %v3288, %v3287
      %v4103 = vpack.c.b16 %v3290, %v3289
      %v4104 = vpack.c.b16 %v3292, %v3291
      %v4105 = vpack.c.b16 %v3294, %v3293
      %v4106 = vpack.c.b16 %v3296, %v3295
      %v4107 = vpack.c.b16 %v3298, %v3297
      %v4108 = vpack.c.b16 %v3300, %v3299
      %v4109 = vpack.c.b16 %v3302, %v3301
      %v4110 = vpack.c.b16 %v3304, %v3303
      %v4111 = vpack.c.b16 %v3306, %v3305
      %v4112 = vpack.c.b16 %v3308, %v3307
      %v4113 = vpack.c.b16 %v3310, %v3309
      %v4114 = vpack.c.b16 %v3312, %v3311
      %v4115 = vpack.c.b16 %v3314, %v3313
      %v4116 = vpack.c.b16 %v3316, %v3315
      %v4117 = vpack.c.b16 %v3318, %v3317
      %v4118 = vpack.c.b16 %v3320, %v3319
      %v4119 = vpack.c.b16 %v3322, %v3321
      %v4120 = vpack.c.b16 %v3324, %v3323
      %v4121 = vpack.c.b16 %v3326, %v3325
      %v4122 = vpack.c.b16 %v3328, %v3327
      %v4123 = vpack.c.b16 %v3330, %v3329
      %v4124 = vpack.c.b16 %v3332, %v3331
      %v4125 = vpack.c.b16 %v3334, %v3333
      %v4126 = vpack.c.b16 %v3336, %v3335
      %v4127 = vpack.c.b16 %v3338, %v3337
      %v4128 = vpack.c.b16 %v3340, %v3339
      %v4129 = vpack.c.b16 %v3342, %v3341
      %v4130 = vpack.c.b16 %v3344, %v3343
      %v4131 = vpack.c.b16 %v3346, %v3345
      %v4132 = vpack.c.b16 %v3348, %v3347
      %v4133 = vpack.c.b16 %v3350, %v3349
      %v4134 = vpack.c.b16 %v3352, %v3351
      %v4135 = vpack.c.b16 %v3354, %v3353
      %v4136 = vpack.c.b16 %v3356, %v3355
      %v4137 = vpack.c.b16 %v3358, %v3357
      %v4138 = vpack.c.b16 %v3360, %v3359
      %v4139 = vpack.c.b16 %v3362, %v3361
      %v4140 = vpack.c.b16 %v3364, %v3363
      %v4141 = vpack.c.b16 %v3366, %v3365
      %v4142 = vpack.c.b16 %v3368, %v3367
      %v4143 = vpack.c.b16 %v3370, %v3369
      %v4144 = vpack.c.b16 %v3372, %v3371
      %v4145 = vpack.c.b16 %v3374, %v3373
      %v4146 = vpack.c.b16 %v3376, %v3375
      %v4147 = vpack.c.b16 %v3378, %v3377
      %v4148 = vpack.c.b16 %v3380, %v3379
      %v4149 = vpack.c.b16 %v3382, %v3381
      %v4150 = vpack.c.b16 %v3384, %v3383
      %v4151 = vpack.c.b16 %v3386, %v3385
      %v4152 = vpack.c.b16 %v3388, %v3387
      %v4153 = vpack.c.b16 %v3390, %v3389
      %v4154 = vpack.c.b16 %v3392, %v3391
      %v4155 = vpack.c.b16 %v3394, %v3393
      %v4156 = vpack.c.b16 %v3396, %v3395
      %v4157 = vpack.c.b16 %v3398, %v3397
      %v4158 = vpack.c.b16 %v3400, %v3399
      %v4159 = vpack.c.b16 %v3402, %v3401
      %v4160 = vpack.c.b16 %v3404, %v3403
      %v4161 = vpack.c.b16 %v3406, %v3405
      %v4162 = vpack.c.b16 %v3408, %v3407
      %v4163 = vpack.c.b16 %v3410, %v3409
      %v4164 = vpack.c.b16 %v3412, %v3411
      %v4165 = vpack.c.b16 %v3414, %v3413
      %v4166 = vpack.c.b16 %v3416, %v3415
      %v4167 = vpack.c.b16 %v3418, %v3417
      %v4168 = vpack.c.b16 %v3420, %v3419
      %v4169 = vpack.c.b16 %v3422, %v3421
      %v4170 = vpack.c.b16 %v3424, %v3423
      %v4171 = vpack.c.b16 %v3426, %v3425
      %v4172 = vpack.c.b16 %v3428, %v3427
      %v4173 = vpack.c.b16 %v3430, %v3429
      %v4174 = vpack.c.b16 %v3432, %v3431
      %v4175 = vpack.c.b16 %v3434, %v3433
      %v4176 = vpack.c.b16 %v3436, %v3435
      %v4177 = vpack.c.b16 %v3438, %v3437
      %v4178 = vpack.c.b16 %v3440, %v3439
      %v4179 = vpack.c.b16 %v3442, %v3441
      %v4180 = vpack.c.b16 %v3444, %v3443
      %v4181 = vpack.c.b16 %v3446, %v3445
      %v4182 = vpack.c.b16 %v3448, %v3447
      %v4183 = vpack.c.b16 %v3450, %v3449
      %v4184 = vpack.c.b16 %v3452, %v3451
      %v4185 = vpack.c.b16 %v3454, %v3453
      %v4186 = vpack.c.b16 %v3456, %v3455
      %v4187 = vpack.c.b16 %v3458, %v3457
      %v4188 = vpack.c.b16 %v3460, %v3459
      %v4189 = vpack.c.b16 %v3462, %v3461
      %v4190 = vpack.c.b16 %v3464, %v3463
      %v4191 = vpack.c.b16 %v3466, %v3465
      %v4192 = vpack.c.b16 %v3468, %v3467
      %v4193 = vpack.c.b16 %v3470, %v3469
      %v4194 = vpack.c.b16 %v3472, %v3471
      %v4195 = vpack.c.b16 %v3474, %v3473
      %v4196 = vpack.c.b16 %v3476, %v3475
      %v4197 = vpack.c.b16 %v3478, %v3477
      %v4198 = vpack.c.b16 %v3480, %v3479
      %v4199 = vpack.c.b16 %v3482, %v3481
      %v4200 = vpack.c.b16 %v3484, %v3483
      %v4201 = vpack.c.b16 %v3486, %v3485
      %v4202 = vpack.c.b16 %v3488, %v3487
      %v4203 = vpack.c.b16 %v3490, %v3489
      %v4204 = vpack.c.b16 %v3492, %v3491
      %v4205 = vpack.c.b16 %v3494, %v3493
      %v4206 = vpack.c.b16 %v3496, %v3495
      %v4207 = vpack.c.b16 %v3498, %v3497
      %v4208 = vpack.c.b16 %v3500, %v3499
      %v4209 = vpack.c.b16 %v3502, %v3501
      %v4210 = vpack.c.b16 %v3504, %v3503
      %v4211 = vpack.c.b16 %v3506, %v3505
      %v4212 = vpack.c.b16 %v3508, %v3507
      %v4213 = vpack.c.b16 %v3510, %v3509
      %v4214 = vpack.c.b16 %v3512, %v3511
      %v4215 = vpack.c.b16 %v3514, %v3513
      %v4216 = vpack.c.b16 %v3516, %v3515
      %v4217 = vpack.c.b16 %v3518, %v3517
      %v4218 = vpack.c.b16 %v3520, %v3519
      %v4219 = vpack.c.b16 %v3522, %v3521
      %v4220 = vpack.c.b16 %v3524, %v3523
      %v4221 = vpack.c.b16 %v3526, %v3525
      %v4222 = vpack.c.b16 %v3528, %v3527
      %v4223 = vpack.c.b16 %v3530, %v3529
      %v4224 = vpack.c.b16 %v3532, %v3531
      %v4225 = vpack.c.b16 %v3534, %v3533
      %v4226 = vpack.c.b16 %v3536, %v3535
      %v4227 = vpack.c.b16 %v3538, %v3537
      %v4228 = vpack.c.b16 %v3540, %v3539
      %v4229 = vpack.c.b16 %v3542, %v3541
      %v4230 = vpack.c.b16 %v3544, %v3543
      %v4231 = vpack.c.b16 %v3546, %v3545
      %v4232 = vpack.c.b16 %v3548, %v3547
      %v4233 = vpack.c.b16 %v3550, %v3549
      %v4234 = vpack.c.b16 %v3552, %v3551
      %v4235 = vpack.c.b16 %v3554, %v3553
      %v4236 = vpack.c.b16 %v3556, %v3555
      %v4237 = vpack.c.b16 %v3558, %v3557
      %v4238 = vpack.c.b16 %v3560, %v3559
      %v4239 = vpack.c.b16 %v3562, %v3561
      %v4240 = vpack.c.b16 %v3564, %v3563
      %v4241 = vpack.c.b16 %v3566, %v3565
      %v4242 = vpack.c.b16 %v3568, %v3567
      %v4243 = vpack.c.b16 %v3570, %v3569
      %v4244 = vpack.c.b16 %v3572, %v3571
      %v4245 = vpack.c.b16 %v3574, %v3573
      %v4246 = vpack.c.b16 %v3576, %v3575
      %v4247 = vpack.c.b16 %v3578, %v3577
      %v4248 = vpack.c.b16 %v3580, %v3579
      %v4249 = vpack.c.b16 %v3582, %v3581
      %v4250 = vpack.c.b16 %v3584, %v3583
      %v4251 = vpack.c.b16 %v3586, %v3585
      %v4252 = vpack.c.b16 %v3588, %v3587
      %v4253 = vpack.c.b16 %v3590, %v3589
      %v4254 = vpack.c.b16 %v3592, %v3591
      %v4255 = vpack.c.b16 %v3594, %v3593
      %v4256 = vpack.c.b16 %v3596, %v3595
      %v4257 = vpack.c.b16 %v3598, %v3597
      %v4258 = vpack.c.b16 %v3600, %v3599
      %v4259 = vpack.c.b16 %v3602, %v3601
      %v4260 = vpack.c.b16 %v3604, %v3603
      %v4261 = vpack.c.b16 %v3606, %v3605
      %v4262 = vpack.c.b16 %v3608, %v3607
      %v4263 = vpack.c.b16 %v3610, %v3609
      %v4264 = vpack.c.b16 %v3612, %v3611
      %v4265 = vpack.c.b16 %v3614, %v3613
      %v4266 = vpack.c.b16 %v3616, %v3615
      %v4267 = vpack.c.b16 %v3618, %v3617
      %v4268 = vpack.c.b16 %v3620, %v3619
      %v4269 = vpack.c.b16 %v3622, %v3621
      %v4270 = vpack.c.b16 %v3624, %v3623
      %v4271 = vpack.c.b16 %v3626, %v3625
      %v4272 = vpack.c.b16 %v3628, %v3627
      %v4273 = vpack.c.b16 %v3630, %v3629
      %v4274 = vpack.c.b16 %v3632, %v3631
      %v4275 = vpack.c.b16 %v3634, %v3633
      %v4276 = vpack.c.b16 %v3636, %v3635
      %v4277 = vpack.c.b16 %v3638, %v3637
      %v4278 = vpack.c.b16 %v3640, %v3639
      %v4279 = vpack.c.b16 %v3642, %v3641
      %v4280 = vpack.c.b16 %v3644, %v3643
      %v4281 = vpack.c.b16 %v3646, %v3645
      %v4282 = vpack.c.b16 %v3648, %v3647
      %v4283 = vpack.c.b16 %v3650, %v3649
      %v4284 = vpack.c.b16 %v3652, %v3651
      %v4285 = vpack.c.b16 %v3654, %v3653
      %v4286 = vpack.c.b16 %v3656, %v3655
      %v4287 = vpack.c.b16 %v3658, %v3657
      %v4288 = vpack.c.b16 %v3660, %v3659
      %v4289 = vpack.c.b16 %v3662, %v3661
      %v4290 = vpack.c.b16 %v3664, %v3663
      %v4291 = vpack.c.b16 %v3666, %v3665
      %v4292 = vpack.c.b16 %v3668, %v3667
      %v4293 = vpack.c.b16 %v3670, %v3669
      %v4294 = vpack.c.b16 %v3672, %v3671
      %v4295 = vpack.c.b16 %v3674, %v3673
      %v4296 = vpack.c.b16 %v3676, %v3675
      %v4297 = vpack.c.b16 %v3678, %v3677
      %v4298 = vpack.c.b16 %v3680, %v3679
      %v4299 = vpack.c.b16 %v3682, %v3681
      %v4300 = vpack.c.b16 %v3684, %v3683
      %v4301 = vpack.c.b16 %v3686, %v3685
      %v4302 = vpack.c.b16 %v3688, %v3687
      %v4303 = vpack.c.b16 %v3690, %v3689
      %v4304 = vpack.c.b16 %v3692, %v3691
      %v4305 = vpack.c.b16 %v3694, %v3693
      %v4306 = vpack.c.b16 %v3696, %v3695
      %v4307 = vpack.c.b16 %v3698, %v3697
      %v4308 = vpack.c.b16 %v3700, %v3699
      %v4309 = vpack.c.b16 %v3702, %v3701
      %v4310 = vpack.c.b16 %v3704, %v3703
      %v4311 = vpack.c.b16 %v3706, %v3705
      %v4312 = vpack.c.b16 %v3708, %v3707
      %v4313 = vpack.c.b16 %v3710, %v3709
      %v4314 = vpack.c.b16 %v3712, %v3711
      %v4315 = vpack.c.b16 %v3714, %v3713
      %v4316 = vpack.c.b16 %v3716, %v3715
      %v4317 = vpack.c.b16 %v3718, %v3717
      %v4318 = vpack.c.b16 %v3720, %v3719
      %v4319 = vpack.c.b16 %v3722, %v3721
      %v4320 = vpack.c.b16 %v3724, %v3723
      %v4321 = vpack.c.b16 %v3726, %v3725
      %v4322 = vpack.c.b16 %v3728, %v3727
      %v4323 = vpack.c.b16 %v3730, %v3729
      %v4324 = vpack.c.b16 %v3732, %v3731
      %v4325 = vpack.c.b16 %v3734, %v3733
      %v4326 = vpack.c.b16 %v3736, %v3735
      %v4327 = vpack.c.b16 %v3738, %v3737
      %v4328 = vpack.c.b16 %v3740, %v3739
      %v4329 = vpack.c.b16 %v3742, %v3741
      %v4330 = vpack.c.b16 %v3744, %v3743
      %v4331 = vpack.c.b16 %v3746, %v3745
      %v4332 = vpack.c.b16 %v3748, %v3747
      %v4333 = vpack.c.b16 %v3750, %v3749
      %v4334 = vpack.c.b16 %v3752, %v3751
      %v4335 = vpack.c.b16 %v3754, %v3753
      %v4336 = vpack.c.b16 %v3756, %v3755
      %v4337 = vpack.c.b16 %v3758, %v3757
      %v4338 = vpack.c.b16 %v3760, %v3759
      %v4339 = vpack.c.b16 %v3762, %v3761
      %v4340 = vpack.c.b16 %v3764, %v3763
      %v4341 = vpack.c.b16 %v3766, %v3765
      %v4342 = vpack.c.b16 %v3768, %v3767
      %v4343 = vpack.c.b16 %v3770, %v3769
      %v4344 = vpack.c.b16 %v3772, %v3771
      %v4345 = vpack.c.b16 %v3774, %v3773
      %v4346 = vpack.c.b16 %v3776, %v3775
      %v4347 = vpack.c.b16 %v3778, %v3777
      %v4348 = vpack.c.b16 %v3780, %v3779
      %v4349 = vpack.c.b16 %v3782, %v3781
      %v4350 = vpack.c.b16 %v3784, %v3783
      %v4351 = vpack.c.b16 %v3786, %v3785
      %v4352 = vpack.c.b16 %v3788, %v3787
      %v4353 = vpack.c.b16 %v3790, %v3789
      %v4354 = vpack.c.b16 %v3792, %v3791
      %v4355 = vpack.c.b16 %v3794, %v3793
      %v4356 = vpack.c.b16 %v3796, %v3795
      %v4357 = vpack.c.b16 %v3798, %v3797
      %v4358 = vpack.c.b16 %v3800, %v3799
      %v4359 = vpack.c.b16 %v3802, %v3801
      %v4360 = vpack.c.b16 %v3804, %v3803
      %v4361 = vpack.c.b16 %v3806, %v3805
      %v4362 = vpack.c.b16 %v3808, %v3807
      %v4363 = vpack.c.b16 %v3810, %v3809
      %v4364 = vpack.c.b16 %v3812, %v3811
      %v4365 = vpack.c.b16 %v3814, %v3813
      %v4366 = vpack.c.b16 %v3816, %v3815
      %v4367 = vpack.c.b16 %v3818, %v3817
      %v4368 = vpack.c.b16 %v3820, %v3819
      %v4369 = vpack.c.b16 %v3822, %v3821
      %v4370 = vpack.c.b16 %v3824, %v3823
      %v4371 = vpack.c.b16 %v3826, %v3825
      %v4372 = vpack.c.b16 %v3828, %v3827
      %v4373 = vpack.c.b16 %v3830, %v3829
      %v4374 = vpack.c.b16 %v3832, %v3831
      %v4375 = vpack.c.b16 %v3834, %v3833
      %v4376 = vpack.c.b16 %v3836, %v3835
      %v4377 = vpack.c.b16 %v3838, %v3837
      %v4378 = vpack.c.b16 %v3840, %v3839
      %v4379 = vpack.c.b16 %v3842, %v3841
      %v4380 = vpack.c.b16 %v3844, %v3843
      %v4381 = vpack.c.b16 %v3846, %v3845
      %v4382 = vpack.c.b16 %v3848, %v3847
      %v4383 = vpack.c.b16 %v3850, %v3849
      %v4384 = vpack.c.b16 %v3852, %v3851
      %v4385 = vpack.c.b16 %v3854, %v3853
      %v4386 = vpack.c.b16 %v3856, %v3855
      %v4387 = vpack.c.b16 %v3858, %v3857
      %v4388 = vpack.c.b16 %v3860, %v3859
      %v4389 = vpack.c.b16 %v3862, %v3861
      %v4390 = vpack.c.b16 %v3864, %v3863
      %v4391 = vpack.c.b16 %v3866, %v3865
      %v4392 = vpack.c.b16 %v3868, %v3867
      %v4393 = vpack.c.b16 %v3870, %v3869
      %v4394 = vpack.c.b16 %v3872, %v3871
      %v4395 = vpack.c.b16 %v3874, %v3873
      %v4396 = vpack.c.b16 %v3876, %v3875
      %v4397 = vpack.c.b16 %v3878, %v3877
      %v4398 = vpack.c.b16 %v3880, %v3879
      %v4399 = vpack.c.b16 %v3882, %v3881
      %v4400 = vpack.c.b16 %v3884, %v3883
      %v4401 = vpack.c.b16 %v3886, %v3885
      %v4402 = vpack.c.b16 %v3888, %v3887
      %v4403 = vpack.c.b16 %v3890, %v3889
      %v4404 = vpack.c.b16 %v3892, %v3891
      %4917 = vmatprep.subr.bf16.mxu0 0
      %4918 = vmatpush1.bf16.msra.mxu0 %v3893
      %4919 = vmatprep.subr.bf16.mxu0 0
      %4920 = vmatpush1.bf16.msra.mxu0 %v3894
      %4921 = vmatprep.subr.bf16.mxu0 0
      %4922 = vmatpush1.bf16.msra.mxu0 %v3895
      %4923 = vmatprep.subr.bf16.mxu0 0
      %4924 = vmatpush1.bf16.msra.mxu0 %v3896
      %4925 = vmatprep.subr.bf16.mxu0 0
      %4926 = vmatpush1.bf16.msra.mxu0 %v3897
      %4927 = vmatprep.subr.bf16.mxu0 0
      %4928 = vmatpush1.bf16.msra.mxu0 %v3898
      %4929 = vmatprep.subr.bf16.mxu0 0
      %4930 = vmatpush1.bf16.msra.mxu0 %v3899
      %4931 = vmatprep.subr.bf16.mxu0 0
      %4932 = vmatpush1.bf16.msra.mxu0 %v3900
      %4933 = vmatprep.subr.bf16.mxu0 0
      %4934 = vmatpush1.bf16.msra.mxu0 %v3901
      %4935 = vmatprep.subr.bf16.mxu0 0
      %4936 = vmatpush1.bf16.msra.mxu0 %v3902
      %4937 = vmatprep.subr.bf16.mxu0 0
      %4938 = vmatpush1.bf16.msra.mxu0 %v3903
      %4939 = vmatprep.subr.bf16.mxu0 0
      %4940 = vmatpush1.bf16.msra.mxu0 %v3904
      %4941 = vmatprep.subr.bf16.mxu0 0
      %4942 = vmatpush1.bf16.msra.mxu0 %v3905
      %4943 = vmatprep.subr.bf16.mxu0 0
      %4944 = vmatpush1.bf16.msra.mxu0 %v3906
      %4945 = vmatprep.subr.bf16.mxu0 0
      %4946 = vmatpush1.bf16.msra.mxu0 %v3907
      %4947 = vmatprep.subr.bf16.mxu0 0
      %4948 = vmatpush1.bf16.msra.mxu0 %v3908
      %4949 = vmatprep.mubr.bf16.mxu0 %v1426
      %4950 = vmatmul.mubr.bf16.gmra.mrb[0].mxu0 %v1412
      %v4951 = vpop.f32.mrb[0].mxu0
      %v4952 = vadd.f32 0.0, %v4951
      %v4953 = vpop.f32.mrb[0].mxu0
      %v4954 = vpop.f32.mrb[0].mxu0
      %v4955 = vpop.f32.mrb[0].mxu0
      %4956 = vdwg.mxu0
      %4957 = vmatprep.subr.bf16.mxu0 0
      %4958 = vmatpush1.bf16.msra.mxu0 %v3909
      %4959 = vmatprep.subr.bf16.mxu0 0
      %4960 = vmatpush1.bf16.msra.mxu0 %v3910
      %4961 = vmatprep.subr.bf16.mxu0 0
      %4962 = vmatpush1.bf16.msra.mxu0 %v3911
      %4963 = vmatprep.subr.bf16.mxu0 0
      %4964 = vmatpush1.bf16.msra.mxu0 %v3912
      %4965 = vmatprep.subr.bf16.mxu0 0
      %4966 = vmatpush1.bf16.msra.mxu0 %v3913
      %4967 = vmatprep.subr.bf16.mxu0 0
      %4968 = vmatpush1.bf16.msra.mxu0 %v3914
      %4969 = vmatprep.subr.bf16.mxu0 0
      %4970 = vmatpush1.bf16.msra.mxu0 %v3915
      %4971 = vmatprep.subr.bf16.mxu0 0
      %4972 = vmatpush1.bf16.msra.mxu0 %v3916
      %4973 = vmatprep.subr.bf16.mxu0 0
      %4974 = vmatpush1.bf16.msra.mxu0 %v3917
      %4975 = vmatprep.subr.bf16.mxu0 0
      %4976 = vmatpush1.bf16.msra.mxu0 %v3918
      %4977 = vmatprep.subr.bf16.mxu0 0
      %4978 = vmatpush1.bf16.msra.mxu0 %v3919
      %4979 = vmatprep.subr.bf16.mxu0 0
      %4980 = vmatpush1.bf16.msra.mxu0 %v3920
      %4981 = vmatprep.subr.bf16.mxu0 0
      %4982 = vmatpush1.bf16.msra.mxu0 %v3921
      %4983 = vmatprep.subr.bf16.mxu0 0
      %4984 = vmatpush1.bf16.msra.mxu0 %v3922
      %4985 = vmatprep.subr.bf16.mxu0 0
      %4986 = vmatpush1.bf16.msra.mxu0 %v3923
      %4987 = vmatprep.subr.bf16.mxu0 0
      %4988 = vmatpush1.bf16.msra.mxu0 %v3924
      %4989 = vmatprep.mubr.bf16.mxu0 %v1436
      %4990 = vmatmul.mubr.bf16.gmra.mrb[0].mxu0 %v1434
      %v4991 = vpop.f32.mrb[0].mxu0
      %v4992 = vadd.f32 %v4952, %v4991
      %v4993 = vpop.f32.mrb[0].mxu0
      %v4994 = vpop.f32.mrb[0].mxu0
      %v4995 = vpop.f32.mrb[0].mxu0
      %4996 = vdwg.mxu0
      %4997 = vmatprep.subr.bf16.mxu0 0
      %4998 = vmatpush1.bf16.msra.mxu0 %v3925
      %4999 = vmatprep.subr.bf16.mxu0 0
      %5000 = vmatpush1.bf16.msra.mxu0 %v3926
      %5001 = vmatprep.subr.bf16.mxu0 0
      %5002 = vmatpush1.bf16.msra.mxu0 %v3927
      %5003 = vmatprep.subr.bf16.mxu0 0
      %5004 = vmatpush1.bf16.msra.mxu0 %v3928
      %5005 = vmatprep.subr.bf16.mxu0 0
      %5006 = vmatpush1.bf16.msra.mxu0 %v3929
      %5007 = vmatprep.subr.bf16.mxu0 0
      %5008 = vmatpush1.bf16.msra.mxu0 %v3930
      %5009 = vmatprep.subr.bf16.mxu0 0
      %5010 = vmatpush1.bf16.msra.mxu0 %v3931
      %5011 = vmatprep.subr.bf16.mxu0 0
      %5012 = vmatpush1.bf16.msra.mxu0 %v3932
      %5013 = vmatprep.subr.bf16.mxu0 0
      %5014 = vmatpush1.bf16.msra.mxu0 %v3933
      %5015 = vmatprep.subr.bf16.mxu0 0
      %5016 = vmatpush1.bf16.msra.mxu0 %v3934
      %5017 = vmatprep.subr.bf16.mxu0 0
      %5018 = vmatpush1.bf16.msra.mxu0 %v3935
      %5019 = vmatprep.subr.bf16.mxu0 0
      %5020 = vmatpush1.bf16.msra.mxu0 %v3936
      %5021 = vmatprep.subr.bf16.mxu0 0
      %5022 = vmatpush1.bf16.msra.mxu0 %v3937
      %5023 = vmatprep.subr.bf16.mxu0 0
      %5024 = vmatpush1.bf16.msra.mxu0 %v3938
      %5025 = vmatprep.subr.bf16.mxu0 0
      %5026 = vmatpush1.bf16.msra.mxu0 %v3939
      %5027 = vmatprep.subr.bf16.mxu0 0
      %5028 = vmatpush1.bf16.msra.mxu0 %v3940
      %5029 = vmatprep.mubr.bf16.mxu0 %v1433
      %5030 = vmatmul.mubr.bf16.gmra.mrb[0].mxu0 %v1419
      %v5031 = vpop.f32.mrb[0].mxu0
      %v5032 = vadd.f32 %v4992, %v5031
      %v5033 = vpop.f32.mrb[0].mxu0
      %v5034 = vpop.f32.mrb[0].mxu0
      %v5035 = vpop.f32.mrb[0].mxu0
      %5036 = vdwg.mxu0
      %5037 = vmatprep.subr.bf16.mxu0 0
      %5038 = vmatpush1.bf16.msra.mxu0 %v3941
      %5039 = vmatprep.subr.bf16.mxu0 0
      %5040 = vmatpush1.bf16.msra.mxu0 %v3942
      %5041 = vmatprep.subr.bf16.mxu0 0
      %5042 = vmatpush1.bf16.msra.mxu0 %v3943
      %5043 = vmatprep.subr.bf16.mxu0 0
      %5044 = vmatpush1.bf16.msra.mxu0 %v3944
      %5045 = vmatprep.subr.bf16.mxu0 0
      %5046 = vmatpush1.bf16.msra.mxu0 %v3945
      %5047 = vmatprep.subr.bf16.mxu0 0
      %5048 = vmatpush1.bf16.msra.mxu0 %v3946
      %5049 = vmatprep.subr.bf16.mxu0 0
      %5050 = vmatpush1.bf16.msra.mxu0 %v3947
      %5051 = vmatprep.subr.bf16.mxu0 0
      %5052 = vmatpush1.bf16.msra.mxu0 %v3948
      %5053 = vmatprep.subr.bf16.mxu0 0
      %5054 = vmatpush1.bf16.msra.mxu0 %v3949
      %5055 = vmatprep.subr.bf16.mxu0 0
      %5056 = vmatpush1.bf16.msra.mxu0 %v3950
      %5057 = vmatprep.subr.bf16.mxu0 0
      %5058 = vmatpush1.bf16.msra.mxu0 %v3951
      %5059 = vmatprep.subr.bf16.mxu0 0
      %5060 = vmatpush1.bf16.msra.mxu0 %v3952
      %5061 = vmatprep.subr.bf16.mxu0 0
      %5062 = vmatpush1.bf16.msra.mxu0 %v3953
      %5063 = vmatprep.subr.bf16.mxu0 0
      %5064 = vmatpush1.bf16.msra.mxu0 %v3954
      %5065 = vmatprep.subr.bf16.mxu0 0
      %5066 = vmatpush1.bf16.msra.mxu0 %v3955
      %5067 = vmatprep.subr.bf16.mxu0 0
      %5068 = vmatpush1.bf16.msra.mxu0 %v3956
      %5069 = vmatprep.mubr.bf16.mxu0 %v1437
      %5070 = vmatmul.mubr.bf16.gmra.mrb[0].mxu0 %v1435
      %v5071 = vpop.f32.mrb[0].mxu0
      %v5072 = vadd.f32 %v5032, %v5071
      %v5073 = vpop.f32.mrb[0].mxu0
      %v5074 = vpop.f32.mrb[0].mxu0
      %v5075 = vpop.f32.mrb[0].mxu0
      %5076 = vdwg.mxu0
      %5077 = vmatprep.subr.bf16.mxu0 0
      %5078 = vmatpush1.bf16.msra.mxu0 %v3957
      %5079 = vmatprep.subr.bf16.mxu0 0
      %5080 = vmatpush1.bf16.msra.mxu0 %v3958
      %5081 = vmatprep.subr.bf16.mxu0 0
      %5082 = vmatpush1.bf16.msra.mxu0 %v3959
      %5083 = vmatprep.subr.bf16.mxu0 0
      %5084 = vmatpush1.bf16.msra.mxu0 %v3960
      %5085 = vmatprep.subr.bf16.mxu0 0
      %5086 = vmatpush1.bf16.msra.mxu0 %v3961
      %5087 = vmatprep.subr.bf16.mxu0 0
      %5088 = vmatpush1.bf16.msra.mxu0 %v3962
      %5089 = vmatprep.subr.bf16.mxu0 0
      %5090 = vmatpush1.bf16.msra.mxu0 %v3963
      %5091 = vmatprep.subr.bf16.mxu0 0
      %5092 = vmatpush1.bf16.msra.mxu0 %v3964
      %5093 = vmatprep.subr.bf16.mxu0 0
      %5094 = vmatpush1.bf16.msra.mxu0 %v3965
      %5095 = vmatprep.subr.bf16.mxu0 0
      %5096 = vmatpush1.bf16.msra.mxu0 %v3966
      %5097 = vmatprep.subr.bf16.mxu0 0
      %5098 = vmatpush1.bf16.msra.mxu0 %v3967
      %5099 = vmatprep.subr.bf16.mxu0 0
      %5100 = vmatpush1.bf16.msra.mxu0 %v3968
      %5101 = vmatprep.subr.bf16.mxu0 0
      %5102 = vmatpush1.bf16.msra.mxu0 %v3969
      %5103 = vmatprep.subr.bf16.mxu0 0
      %5104 = vmatpush1.bf16.msra.mxu0 %v3970
      %5105 = vmatprep.subr.bf16.mxu0 0
      %5106 = vmatpush1.bf16.msra.mxu0 %v3971
      %5107 = vmatprep.subr.bf16.mxu0 0
      %5108 = vmatpush1.bf16.msra.mxu0 %v3972
      %5109 = vmatprep.mubr.bf16.mxu0 %v1475
      %5110 = vmatmul.mubr.bf16.gmra.mrb[0].mxu0 %v1461
      %v5111 = vpop.f32.mrb[0].mxu0
      %v5112 = vadd.f32 %v5072, %v5111
      %v5113 = vpop.f32.mrb[0].mxu0
      %v5114 = vpop.f32.mrb[0].mxu0
      %v5115 = vpop.f32.mrb[0].mxu0
      %5116 = vdwg.mxu0
      %5117 = vmatprep.subr.bf16.mxu0 0
      %5118 = vmatpush1.bf16.msra.mxu0 %v3973
      %5119 = vmatprep.subr.bf16.mxu0 0
      %5120 = vmatpush1.bf16.msra.mxu0 %v3974
      %5121 = vmatprep.subr.bf16.mxu0 0
      %5122 = vmatpush1.bf16.msra.mxu0 %v3975
      %5123 = vmatprep.subr.bf16.mxu0 0
      %5124 = vmatpush1.bf16.msra.mxu0 %v3976
      %5125 = vmatprep.subr.bf16.mxu0 0
      %5126 = vmatpush1.bf16.msra.mxu0 %v3977
      %5127 = vmatprep.subr.bf16.mxu0 0
      %5128 = vmatpush1.bf16.msra.mxu0 %v3978
      %5129 = vmatprep.subr.bf16.mxu0 0
      %5130 = vmatpush1.bf16.msra.mxu0 %v3979
      %5131 = vmatprep.subr.bf16.mxu0 0
      %5132 = vmatpush1.bf16.msra.mxu0 %v3980
      %5133 = vmatprep.subr.bf16.mxu0 0
      %5134 = vmatpush1.bf16.msra.mxu0 %v3981
      %5135 = vmatprep.subr.bf16.mxu0 0
      %5136 = vmatpush1.bf16.msra.mxu0 %v3982
      %5137 = vmatprep.subr.bf16.mxu0 0
      %5138 = vmatpush1.bf16.msra.mxu0 %v3983
      %5139 = vmatprep.subr.bf16.mxu0 0
      %5140 = vmatpush1.bf16.msra.mxu0 %v3984
      %5141 = vmatprep.subr.bf16.mxu0 0
      %5142 = vmatpush1.bf16.msra.mxu0 %v3985
      %5143 = vmatprep.subr.bf16.mxu0 0
      %5144 = vmatpush1.bf16.msra.mxu0 %v3986
      %5145 = vmatprep.subr.bf16.mxu0 0
      %5146 = vmatpush1.bf16.msra.mxu0 %v3987
      %5147 = vmatprep.subr.bf16.mxu0 0
      %5148 = vmatpush1.bf16.msra.mxu0 %v3988
      %5149 = vmatprep.mubr.bf16.mxu0 %v1485
      %5150 = vmatmul.mubr.bf16.gmra.mrb[0].mxu0 %v1483
      %v5151 = vpop.f32.mrb[0].mxu0
      %v5152 = vadd.f32 %v5112, %v5151
      %v5153 = vpop.f32.mrb[0].mxu0
      %v5154 = vpop.f32.mrb[0].mxu0
      %v5155 = vpop.f32.mrb[0].mxu0
      %5156 = vdwg.mxu0
      %5157 = vmatprep.subr.bf16.mxu0 0
      %5158 = vmatpush1.bf16.msra.mxu0 %v3989
      %5159 = vmatprep.subr.bf16.mxu0 0
      %5160 = vmatpush1.bf16.msra.mxu0 %v3990
      %5161 = vmatprep.subr.bf16.mxu0 0
      %5162 = vmatpush1.bf16.msra.mxu0 %v3991
      %5163 = vmatprep.subr.bf16.mxu0 0
      %5164 = vmatpush1.bf16.msra.mxu0 %v3992
      %5165 = vmatprep.subr.bf16.mxu0 0
      %5166 = vmatpush1.bf16.msra.mxu0 %v3993
      %5167 = vmatprep.subr.bf16.mxu0 0
      %5168 = vmatpush1.bf16.msra.mxu0 %v3994
      %5169 = vmatprep.subr.bf16.mxu0 0
      %5170 = vmatpush1.bf16.msra.mxu0 %v3995
      %5171 = vmatprep.subr.bf16.mxu0 0
      %5172 = vmatpush1.bf16.msra.mxu0 %v3996
      %5173 = vmatprep.subr.bf16.mxu0 0
      %5174 = vmatpush1.bf16.msra.mxu0 %v3997
      %5175 = vmatprep.subr.bf16.mxu0 0
      %5176 = vmatpush1.bf16.msra.mxu0 %v3998
      %5177 = vmatprep.subr.bf16.mxu0 0
      %5178 = vmatpush1.bf16.msra.mxu0 %v3999
      %5179 = vmatprep.subr.bf16.mxu0 0
      %5180 = vmatpush1.bf16.msra.mxu0 %v4000
      %5181 = vmatprep.subr.bf16.mxu0 0
      %5182 = vmatpush1.bf16.msra.mxu0 %v4001
      %5183 = vmatprep.subr.bf16.mxu0 0
      %5184 = vmatpush1.bf16.msra.mxu0 %v4002
      %5185 = vmatprep.subr.bf16.mxu0 0
      %5186 = vmatpush1.bf16.msra.mxu0 %v4003
      %5187 = vmatprep.subr.bf16.mxu0 0
      %5188 = vmatpush1.bf16.msra.mxu0 %v4004
      %5189 = vmatprep.mubr.bf16.mxu0 %v1482
      %5190 = vmatmul.mubr.bf16.gmra.mrb[0].mxu0 %v1468
      %v5191 = vpop.f32.mrb[0].mxu0
      %v5192 = vadd.f32 %v5152, %v5191
      %v5193 = vpop.f32.mrb[0].mxu0
      %v5194 = vpop.f32.mrb[0].mxu0
      %v5195 = vpop.f32.mrb[0].mxu0
      %5196 = vdwg.mxu0
      %5197 = vmatprep.subr.bf16.mxu0 0
      %5198 = vmatpush1.bf16.msra.mxu0 %v4005
      %5199 = vmatprep.subr.bf16.mxu0 0
      %5200 = vmatpush1.bf16.msra.mxu0 %v4006
      %5201 = vmatprep.subr.bf16.mxu0 0
      %5202 = vmatpush1.bf16.msra.mxu0 %v4007
      %5203 = vmatprep.subr.bf16.mxu0 0
      %5204 = vmatpush1.bf16.msra.mxu0 %v4008
      %5205 = vmatprep.subr.bf16.mxu0 0
      %5206 = vmatpush1.bf16.msra.mxu0 %v4009
      %5207 = vmatprep.subr.bf16.mxu0 0
      %5208 = vmatpush1.bf16.msra.mxu0 %v4010
      %5209 = vmatprep.subr.bf16.mxu0 0
      %5210 = vmatpush1.bf16.msra.mxu0 %v4011
      %5211 = vmatprep.subr.bf16.mxu0 0
      %5212 = vmatpush1.bf16.msra.mxu0 %v4012
      %5213 = vmatprep.subr.bf16.mxu0 0
      %5214 = vmatpush1.bf16.msra.mxu0 %v4013
      %5215 = vmatprep.subr.bf16.mxu0 0
      %5216 = vmatpush1.bf16.msra.mxu0 %v4014
      %5217 = vmatprep.subr.bf16.mxu0 0
      %5218 = vmatpush1.bf16.msra.mxu0 %v4015
      %5219 = vmatprep.subr.bf16.mxu0 0
      %5220 = vmatpush1.bf16.msra.mxu0 %v4016
      %5221 = vmatprep.subr.bf16.mxu0 0
      %5222 = vmatpush1.bf16.msra.mxu0 %v4017
      %5223 = vmatprep.subr.bf16.mxu0 0
      %5224 = vmatpush1.bf16.msra.mxu0 %v4018
      %5225 = vmatprep.subr.bf16.mxu0 0
      %5226 = vmatpush1.bf16.msra.mxu0 %v4019
      %5227 = vmatprep.subr.bf16.mxu0 0
      %5228 = vmatpush1.bf16.msra.mxu0 %v4020
      %5229 = vmatprep.mubr.bf16.mxu0 %v1486
      %5230 = vmatmul.mubr.bf16.gmra.mrb[0].mxu0 %v1484
      %v5231 = vpop.f32.mrb[0].mxu0
      %v5232 = vadd.f32 %v5192, %v5231
      %v5233 = vpop.f32.mrb[0].mxu0
      %v5234 = vpop.f32.mrb[0].mxu0
      %v5235 = vpop.f32.mrb[0].mxu0
      %5236 = vdwg.mxu0
      %5237 = vmatprep.subr.bf16.mxu0 0
      %5238 = vmatpush1.bf16.msra.mxu0 %v4021
      %5239 = vmatprep.subr.bf16.mxu0 0
      %5240 = vmatpush1.bf16.msra.mxu0 %v4022
      %5241 = vmatprep.subr.bf16.mxu0 0
      %5242 = vmatpush1.bf16.msra.mxu0 %v4023
      %5243 = vmatprep.subr.bf16.mxu0 0
      %5244 = vmatpush1.bf16.msra.mxu0 %v4024
      %5245 = vmatprep.subr.bf16.mxu0 0
      %5246 = vmatpush1.bf16.msra.mxu0 %v4025
      %5247 = vmatprep.subr.bf16.mxu0 0
      %5248 = vmatpush1.bf16.msra.mxu0 %v4026
      %5249 = vmatprep.subr.bf16.mxu0 0
      %5250 = vmatpush1.bf16.msra.mxu0 %v4027
      %5251 = vmatprep.subr.bf16.mxu0 0
      %5252 = vmatpush1.bf16.msra.mxu0 %v4028
      %5253 = vmatprep.subr.bf16.mxu0 0
      %5254 = vmatpush1.bf16.msra.mxu0 %v4029
      %5255 = vmatprep.subr.bf16.mxu0 0
      %5256 = vmatpush1.bf16.msra.mxu0 %v4030
      %5257 = vmatprep.subr.bf16.mxu0 0
      %5258 = vmatpush1.bf16.msra.mxu0 %v4031
      %5259 = vmatprep.subr.bf16.mxu0 0
      %5260 = vmatpush1.bf16.msra.mxu0 %v4032
      %5261 = vmatprep.subr.bf16.mxu0 0
      %5262 = vmatpush1.bf16.msra.mxu0 %v4033
      %5263 = vmatprep.subr.bf16.mxu0 0
      %5264 = vmatpush1.bf16.msra.mxu0 %v4034
      %5265 = vmatprep.subr.bf16.mxu0 0
      %5266 = vmatpush1.bf16.msra.mxu0 %v4035
      %5267 = vmatprep.subr.bf16.mxu0 0
      %5268 = vmatpush1.bf16.msra.mxu0 %v4036
      %5269 = vmatprep.mubr.bf16.mxu0 %v1524
      %5270 = vmatmul.mubr.bf16.gmra.mrb[0].mxu0 %v1510
      %v5271 = vpop.f32.mrb[0].mxu0
      %v5272 = vadd.f32 %v5232, %v5271
      %v5273 = vpop.f32.mrb[0].mxu0
      %v5274 = vpop.f32.mrb[0].mxu0
      %v5275 = vpop.f32.mrb[0].mxu0
      %5276 = vdwg.mxu0
      %5277 = vmatprep.subr.bf16.mxu0 0
      %5278 = vmatpush1.bf16.msra.mxu0 %v4037
      %5279 = vmatprep.subr.bf16.mxu0 0
      %5280 = vmatpush1.bf16.msra.mxu0 %v4038
      %5281 = vmatprep.subr.bf16.mxu0 0
      %5282 = vmatpush1.bf16.msra.mxu0 %v4039
      %5283 = vmatprep.subr.bf16.mxu0 0
      %5284 = vmatpush1.bf16.msra.mxu0 %v4040
      %5285 = vmatprep.subr.bf16.mxu0 0
      %5286 = vmatpush1.bf16.msra.mxu0 %v4041
      %5287 = vmatprep.subr.bf16.mxu0 0
      %5288 = vmatpush1.bf16.msra.mxu0 %v4042
      %5289 = vmatprep.subr.bf16.mxu0 0
      %5290 = vmatpush1.bf16.msra.mxu0 %v4043
      %5291 = vmatprep.subr.bf16.mxu0 0
      %5292 = vmatpush1.bf16.msra.mxu0 %v4044
      %5293 = vmatprep.subr.bf16.mxu0 0
      %5294 = vmatpush1.bf16.msra.mxu0 %v4045
      %5295 = vmatprep.subr.bf16.mxu0 0
      %5296 = vmatpush1.bf16.msra.mxu0 %v4046
      %5297 = vmatprep.subr.bf16.mxu0 0
      %5298 = vmatpush1.bf16.msra.mxu0 %v4047
      %5299 = vmatprep.subr.bf16.mxu0 0
      %5300 = vmatpush1.bf16.msra.mxu0 %v4048
      %5301 = vmatprep.subr.bf16.mxu0 0
      %5302 = vmatpush1.bf16.msra.mxu0 %v4049
      %5303 = vmatprep.subr.bf16.mxu0 0
      %5304 = vmatpush1.bf16.msra.mxu0 %v4050
      %5305 = vmatprep.subr.bf16.mxu0 0
      %5306 = vmatpush1.bf16.msra.mxu0 %v4051
      %5307 = vmatprep.subr.bf16.mxu0 0
      %5308 = vmatpush1.bf16.msra.mxu0 %v4052
      %5309 = vmatprep.mubr.bf16.mxu0 %v1534
      %5310 = vmatmul.mubr.bf16.gmra.mrb[0].mxu0 %v1532
      %v5311 = vpop.f32.mrb[0].mxu0
      %v5312 = vadd.f32 %v5272, %v5311
      %v5313 = vpop.f32.mrb[0].mxu0
      %v5314 = vpop.f32.mrb[0].mxu0
      %v5315 = vpop.f32.mrb[0].mxu0
      %5316 = vdwg.mxu0
      %5317 = vmatprep.subr.bf16.mxu0 0
      %5318 = vmatpush1.bf16.msra.mxu0 %v4053
      %5319 = vmatprep.subr.bf16.mxu0 0
      %5320 = vmatpush1.bf16.msra.mxu0 %v4054
      %5321 = vmatprep.subr.bf16.mxu0 0
      %5322 = vmatpush1.bf16.msra.mxu0 %v4055
      %5323 = vmatprep.subr.bf16.mxu0 0
      %5324 = vmatpush1.bf16.msra.mxu0 %v4056
      %5325 = vmatprep.subr.bf16.mxu0 0
      %5326 = vmatpush1.bf16.msra.mxu0 %v4057
      %5327 = vmatprep.subr.bf16.mxu0 0
      %5328 = vmatpush1.bf16.msra.mxu0 %v4058
      %5329 = vmatprep.subr.bf16.mxu0 0
      %5330 = vmatpush1.bf16.msra.mxu0 %v4059
      %5331 = vmatprep.subr.bf16.mxu0 0
      %5332 = vmatpush1.bf16.msra.mxu0 %v4060
      %5333 = vmatprep.subr.bf16.mxu0 0
      %5334 = vmatpush1.bf16.msra.mxu0 %v4061
      %5335 = vmatprep.subr.bf16.mxu0 0
      %5336 = vmatpush1.bf16.msra.mxu0 %v4062
      %5337 = vmatprep.subr.bf16.mxu0 0
      %5338 = vmatpush1.bf16.msra.mxu0 %v4063
      %5339 = vmatprep.subr.bf16.mxu0 0
      %5340 = vmatpush1.bf16.msra.mxu0 %v4064
      %5341 = vmatprep.subr.bf16.mxu0 0
      %5342 = vmatpush1.bf16.msra.mxu0 %v4065
      %5343 = vmatprep.subr.bf16.mxu0 0
      %5344 = vmatpush1.bf16.msra.mxu0 %v4066
      %5345 = vmatprep.subr.bf16.mxu0 0
      %5346 = vmatpush1.bf16.msra.mxu0 %v4067
      %5347 = vmatprep.subr.bf16.mxu0 0
      %5348 = vmatpush1.bf16.msra.mxu0 %v4068
      %5349 = vmatprep.mubr.bf16.mxu0 %v1531
      %5350 = vmatmul.mubr.bf16.gmra.mrb[0].mxu0 %v1517
      %v5351 = vpop.f32.mrb[0].mxu0
      %v5352 = vadd.f32 %v5312, %v5351
      %v5353 = vpop.f32.mrb[0].mxu0
      %v5354 = vpop.f32.mrb[0].mxu0
      %v5355 = vpop.f32.mrb[0].mxu0
      %5356 = vdwg.mxu0
      %5357 = vmatprep.subr.bf16.mxu0 0
      %5358 = vmatpush1.bf16.msra.mxu0 %v4069
      %5359 = vmatprep.subr.bf16.mxu0 0
      %5360 = vmatpush1.bf16.msra.mxu0 %v4070
      %5361 = vmatprep.subr.bf16.mxu0 0
      %5362 = vmatpush1.bf16.msra.mxu0 %v4071
      %5363 = vmatprep.subr.bf16.mxu0 0
      %5364 = vmatpush1.bf16.msra.mxu0 %v4072
      %5365 = vmatprep.subr.bf16.mxu0 0
      %5366 = vmatpush1.bf16.msra.mxu0 %v4073
      %5367 = vmatprep.subr.bf16.mxu0 0
      %5368 = vmatpush1.bf16.msra.mxu0 %v4074
      %5369 = vmatprep.subr.bf16.mxu0 0
      %5370 = vmatpush1.bf16.msra.mxu0 %v4075
      %5371 = vmatprep.subr.bf16.mxu0 0
      %5372 = vmatpush1.bf16.msra.mxu0 %v4076
      %5373 = vmatprep.subr.bf16.mxu0 0
      %5374 = vmatpush1.bf16.msra.mxu0 %v4077
      %5375 = vmatprep.subr.bf16.mxu0 0
      %5376 = vmatpush1.bf16.msra.mxu0 %v4078
      %5377 = vmatprep.subr.bf16.mxu0 0
      %5378 = vmatpush1.bf16.msra.mxu0 %v4079
      %5379 = vmatprep.subr.bf16.mxu0 0
      %5380 = vmatpush1.bf16.msra.mxu0 %v4080
      %5381 = vmatprep.subr.bf16.mxu0 0
      %5382 = vmatpush1.bf16.msra.mxu0 %v4081
      %5383 = vmatprep.subr.bf16.mxu0 0
      %5384 = vmatpush1.bf16.msra.mxu0 %v4082
      %5385 = vmatprep.subr.bf16.mxu0 0
      %5386 = vmatpush1.bf16.msra.mxu0 %v4083
      %5387 = vmatprep.subr.bf16.mxu0 0
      %5388 = vmatpush1.bf16.msra.mxu0 %v4084
      %5389 = vmatprep.mubr.bf16.mxu0 %v1535
      %5390 = vmatmul.mubr.bf16.gmra.mrb[0].mxu0 %v1533
      %v5391 = vpop.f32.mrb[0].mxu0
      %v5392 = vadd.f32 %v5352, %v5391
      %v5393 = vpop.f32.mrb[0].mxu0
      %v5394 = vpop.f32.mrb[0].mxu0
      %v5395 = vpop.f32.mrb[0].mxu0
      %5396 = vdwg.mxu0
      %5397 = vmatprep.subr.bf16.mxu0 0
      %5398 = vmatpush1.bf16.msra.mxu0 %v4085
      %5399 = vmatprep.subr.bf16.mxu0 0
      %5400 = vmatpush1.bf16.msra.mxu0 %v4086
      %5401 = vmatprep.subr.bf16.mxu0 0
      %5402 = vmatpush1.bf16.msra.mxu0 %v4087
      %5403 = vmatprep.subr.bf16.mxu0 0
      %5404 = vmatpush1.bf16.msra.mxu0 %v4088
      %5405 = vmatprep.subr.bf16.mxu0 0
      %5406 = vmatpush1.bf16.msra.mxu0 %v4089
      %5407 = vmatprep.subr.bf16.mxu0 0
      %5408 = vmatpush1.bf16.msra.mxu0 %v4090
      %5409 = vmatprep.subr.bf16.mxu0 0
      %5410 = vmatpush1.bf16.msra.mxu0 %v4091
      %5411 = vmatprep.subr.bf16.mxu0 0
      %5412 = vmatpush1.bf16.msra.mxu0 %v4092
      %5413 = vmatprep.subr.bf16.mxu0 0
      %5414 = vmatpush1.bf16.msra.mxu0 %v4093
      %5415 = vmatprep.subr.bf16.mxu0 0
      %5416 = vmatpush1.bf16.msra.mxu0 %v4094
      %5417 = vmatprep.subr.bf16.mxu0 0
      %5418 = vmatpush1.bf16.msra.mxu0 %v4095
      %5419 = vmatprep.subr.bf16.mxu0 0
      %5420 = vmatpush1.bf16.msra.mxu0 %v4096
      %5421 = vmatprep.subr.bf16.mxu0 0
      %5422 = vmatpush1.bf16.msra.mxu0 %v4097
      %5423 = vmatprep.subr.bf16.mxu0 0
      %5424 = vmatpush1.bf16.msra.mxu0 %v4098
      %5425 = vmatprep.subr.bf16.mxu0 0
      %5426 = vmatpush1.bf16.msra.mxu0 %v4099
      %5427 = vmatprep.subr.bf16.mxu0 0
      %5428 = vmatpush1.bf16.msra.mxu0 %v4100
      %5429 = vmatprep.mubr.bf16.mxu0 %v1573
      %5430 = vmatmul.mubr.bf16.gmra.mrb[0].mxu0 %v1559
      %v5431 = vpop.f32.mrb[0].mxu0
      %v5432 = vadd.f32 %v5392, %v5431
      %v5433 = vpop.f32.mrb[0].mxu0
      %v5434 = vpop.f32.mrb[0].mxu0
      %v5435 = vpop.f32.mrb[0].mxu0
      %5436 = vdwg.mxu0
      %5437 = vmatprep.subr.bf16.mxu0 0
      %5438 = vmatpush1.bf16.msra.mxu0 %v4101
      %5439 = vmatprep.subr.bf16.mxu0 0
      %5440 = vmatpush1.bf16.msra.mxu0 %v4102
      %5441 = vmatprep.subr.bf16.mxu0 0
      %5442 = vmatpush1.bf16.msra.mxu0 %v4103
      %5443 = vmatprep.subr.bf16.mxu0 0
      %5444 = vmatpush1.bf16.msra.mxu0 %v4104
      %5445 = vmatprep.subr.bf16.mxu0 0
      %5446 = vmatpush1.bf16.msra.mxu0 %v4105
      %5447 = vmatprep.subr.bf16.mxu0 0
      %5448 = vmatpush1.bf16.msra.mxu0 %v4106
      %5449 = vmatprep.subr.bf16.mxu0 0
      %5450 = vmatpush1.bf16.msra.mxu0 %v4107
      %5451 = vmatprep.subr.bf16.mxu0 0
      %5452 = vmatpush1.bf16.msra.mxu0 %v4108
      %5453 = vmatprep.subr.bf16.mxu0 0
      %5454 = vmatpush1.bf16.msra.mxu0 %v4109
      %5455 = vmatprep.subr.bf16.mxu0 0
      %5456 = vmatpush1.bf16.msra.mxu0 %v4110
      %5457 = vmatprep.subr.bf16.mxu0 0
      %5458 = vmatpush1.bf16.msra.mxu0 %v4111
      %5459 = vmatprep.subr.bf16.mxu0 0
      %5460 = vmatpush1.bf16.msra.mxu0 %v4112
      %5461 = vmatprep.subr.bf16.mxu0 0
      %5462 = vmatpush1.bf16.msra.mxu0 %v4113
      %5463 = vmatprep.subr.bf16.mxu0 0
      %5464 = vmatpush1.bf16.msra.mxu0 %v4114
      %5465 = vmatprep.subr.bf16.mxu0 0
      %5466 = vmatpush1.bf16.msra.mxu0 %v4115
      %5467 = vmatprep.subr.bf16.mxu0 0
      %5468 = vmatpush1.bf16.msra.mxu0 %v4116
      %5469 = vmatprep.mubr.bf16.mxu0 %v1583
      %5470 = vmatmul.mubr.bf16.gmra.mrb[0].mxu0 %v1581
      %v5471 = vpop.f32.mrb[0].mxu0
      %v5472 = vadd.f32 %v5432, %v5471
      %v5473 = vpop.f32.mrb[0].mxu0
      %v5474 = vpop.f32.mrb[0].mxu0
      %v5475 = vpop.f32.mrb[0].mxu0
      %5476 = vdwg.mxu0
      %5477 = vmatprep.subr.bf16.mxu0 0
      %5478 = vmatpush1.bf16.msra.mxu0 %v4117
      %5479 = vmatprep.subr.bf16.mxu0 0
      %5480 = vmatpush1.bf16.msra.mxu0 %v4118
      %5481 = vmatprep.subr.bf16.mxu0 0
      %5482 = vmatpush1.bf16.msra.mxu0 %v4119
      %5483 = vmatprep.subr.bf16.mxu0 0
      %5484 = vmatpush1.bf16.msra.mxu0 %v4120
      %5485 = vmatprep.subr.bf16.mxu0 0
      %5486 = vmatpush1.bf16.msra.mxu0 %v4121
      %5487 = vmatprep.subr.bf16.mxu0 0
      %5488 = vmatpush1.bf16.msra.mxu0 %v4122
      %5489 = vmatprep.subr.bf16.mxu0 0
      %5490 = vmatpush1.bf16.msra.mxu0 %v4123
      %5491 = vmatprep.subr.bf16.mxu0 0
      %5492 = vmatpush1.bf16.msra.mxu0 %v4124
      %5493 = vmatprep.subr.bf16.mxu0 0
      %5494 = vmatpush1.bf16.msra.mxu0 %v4125
      %5495 = vmatprep.subr.bf16.mxu0 0
      %5496 = vmatpush1.bf16.msra.mxu0 %v4126
      %5497 = vmatprep.subr.bf16.mxu0 0
      %5498 = vmatpush1.bf16.msra.mxu0 %v4127
      %5499 = vmatprep.subr.bf16.mxu0 0
      %5500 = vmatpush1.bf16.msra.mxu0 %v4128
      %5501 = vmatprep.subr.bf16.mxu0 0
      %5502 = vmatpush1.bf16.msra.mxu0 %v4129
      %5503 = vmatprep.subr.bf16.mxu0 0
      %5504 = vmatpush1.bf16.msra.mxu0 %v4130
      %5505 = vmatprep.subr.bf16.mxu0 0
      %5506 = vmatpush1.bf16.msra.mxu0 %v4131
      %5507 = vmatprep.subr.bf16.mxu0 0
      %5508 = vmatpush1.bf16.msra.mxu0 %v4132
      %5509 = vmatprep.mubr.bf16.mxu0 %v1580
      %5510 = vmatmul.mubr.bf16.gmra.mrb[0].mxu0 %v1566
      %v5511 = vpop.f32.mrb[0].mxu0
      %v5512 = vadd.f32 %v5472, %v5511
      %v5513 = vpop.f32.mrb[0].mxu0
      %v5514 = vpop.f32.mrb[0].mxu0
      %v5515 = vpop.f32.mrb[0].mxu0
      %5516 = vdwg.mxu0
      %5517 = vmatprep.subr.bf16.mxu0 0
      %5518 = vmatpush1.bf16.msra.mxu0 %v4133
      %5519 = vmatprep.subr.bf16.mxu0 0
      %5520 = vmatpush1.bf16.msra.mxu0 %v4134
      %5521 = vmatprep.subr.bf16.mxu0 0
      %5522 = vmatpush1.bf16.msra.mxu0 %v4135
      %5523 = vmatprep.subr.bf16.mxu0 0
      %5524 = vmatpush1.bf16.msra.mxu0 %v4136
      %5525 = vmatprep.subr.bf16.mxu0 0
      %5526 = vmatpush1.bf16.msra.mxu0 %v4137
      %5527 = vmatprep.subr.bf16.mxu0 0
      %5528 = vmatpush1.bf16.msra.mxu0 %v4138
      %5529 = vmatprep.subr.bf16.mxu0 0
      %5530 = vmatpush1.bf16.msra.mxu0 %v4139
      %5531 = vmatprep.subr.bf16.mxu0 0
      %5532 = vmatpush1.bf16.msra.mxu0 %v4140
      %5533 = vmatprep.subr.bf16.mxu0 0
      %5534 = vmatpush1.bf16.msra.mxu0 %v4141
      %5535 = vmatprep.subr.bf16.mxu0 0
      %5536 = vmatpush1.bf16.msra.mxu0 %v4142
      %5537 = vmatprep.subr.bf16.mxu0 0
      %5538 = vmatpush1.bf16.msra.mxu0 %v4143
      %5539 = vmatprep.subr.bf16.mxu0 0
      %5540 = vmatpush1.bf16.msra.mxu0 %v4144
      %5541 = vmatprep.subr.bf16.mxu0 0
      %5542 = vmatpush1.bf16.msra.mxu0 %v4145
      %5543 = vmatprep.subr.bf16.mxu0 0
      %5544 = vmatpush1.bf16.msra.mxu0 %v4146
      %5545 = vmatprep.subr.bf16.mxu0 0
      %5546 = vmatpush1.bf16.msra.mxu0 %v4147
      %5547 = vmatprep.subr.bf16.mxu0 0
      %5548 = vmatpush1.bf16.msra.mxu0 %v4148
      %5549 = vmatprep.mubr.bf16.mxu0 %v1584
      %5550 = vmatmul.mubr.bf16.gmra.mrb[0].mxu0 %v1582
      %v5551 = vpop.f32.mrb[0].mxu0
      %v5552 = vadd.f32 %v5512, %v5551
      %v5553 = vpop.f32.mrb[0].mxu0
      %v5554 = vpop.f32.mrb[0].mxu0
      %v5555 = vpop.f32.mrb[0].mxu0
      %5556 = vdwg.mxu0
      %5557 = vmatprep.subr.bf16.mxu0 0
      %5558 = vmatpush1.bf16.msra.mxu0 %v4149
      %5559 = vmatprep.subr.bf16.mxu0 0
      %5560 = vmatpush1.bf16.msra.mxu0 %v4150
      %5561 = vmatprep.subr.bf16.mxu0 0
      %5562 = vmatpush1.bf16.msra.mxu0 %v4151
      %5563 = vmatprep.subr.bf16.mxu0 0
      %5564 = vmatpush1.bf16.msra.mxu0 %v4152
      %5565 = vmatprep.subr.bf16.mxu0 0
      %5566 = vmatpush1.bf16.msra.mxu0 %v4153
      %5567 = vmatprep.subr.bf16.mxu0 0
      %5568 = vmatpush1.bf16.msra.mxu0 %v4154
      %5569 = vmatprep.subr.bf16.mxu0 0
      %5570 = vmatpush1.bf16.msra.mxu0 %v4155
      %5571 = vmatprep.subr.bf16.mxu0 0
      %5572 = vmatpush1.bf16.msra.mxu0 %v4156
      %5573 = vmatprep.subr.bf16.mxu0 0
      %5574 = vmatpush1.bf16.msra.mxu0 %v4157
      %5575 = vmatprep.subr.bf16.mxu0 0
      %5576 = vmatpush1.bf16.msra.mxu0 %v4158
      %5577 = vmatprep.subr.bf16.mxu0 0
      %5578 = vmatpush1.bf16.msra.mxu0 %v4159
      %5579 = vmatprep.subr.bf16.mxu0 0
      %5580 = vmatpush1.bf16.msra.mxu0 %v4160
      %5581 = vmatprep.subr.bf16.mxu0 0
      %5582 = vmatpush1.bf16.msra.mxu0 %v4161
      %5583 = vmatprep.subr.bf16.mxu0 0
      %5584 = vmatpush1.bf16.msra.mxu0 %v4162
      %5585 = vmatprep.subr.bf16.mxu0 0
      %5586 = vmatpush1.bf16.msra.mxu0 %v4163
      %5587 = vmatprep.subr.bf16.mxu0 0
      %5588 = vmatpush1.bf16.msra.mxu0 %v4164
      %5589 = vmatprep.mubr.bf16.mxu0 %v1622
      %5590 = vmatmul.mubr.bf16.gmra.mrb[0].mxu0 %v1608
      %v5591 = vpop.f32.mrb[0].mxu0
      %v5592 = vadd.f32 %v5552, %v5591
      %v5593 = vpop.f32.mrb[0].mxu0
      %v5594 = vpop.f32.mrb[0].mxu0
      %v5595 = vpop.f32.mrb[0].mxu0
      %5596 = vdwg.mxu0
      %5597 = vmatprep.subr.bf16.mxu0 0
      %5598 = vmatpush1.bf16.msra.mxu0 %v4165
      %5599 = vmatprep.subr.bf16.mxu0 0
      %5600 = vmatpush1.bf16.msra.mxu0 %v4166
      %5601 = vmatprep.subr.bf16.mxu0 0
      %5602 = vmatpush1.bf16.msra.mxu0 %v4167
      %5603 = vmatprep.subr.bf16.mxu0 0
      %5604 = vmatpush1.bf16.msra.mxu0 %v4168
      %5605 = vmatprep.subr.bf16.mxu0 0
      %5606 = vmatpush1.bf16.msra.mxu0 %v4169
      %5607 = vmatprep.subr.bf16.mxu0 0
      %5608 = vmatpush1.bf16.msra.mxu0 %v4170
      %5609 = vmatprep.subr.bf16.mxu0 0
      %5610 = vmatpush1.bf16.msra.mxu0 %v4171
      %5611 = vmatprep.subr.bf16.mxu0 0
      %5612 = vmatpush1.bf16.msra.mxu0 %v4172
      %5613 = vmatprep.subr.bf16.mxu0 0
      %5614 = vmatpush1.bf16.msra.mxu0 %v4173
      %5615 = vmatprep.subr.bf16.mxu0 0
      %5616 = vmatpush1.bf16.msra.mxu0 %v4174
      %5617 = vmatprep.subr.bf16.mxu0 0
      %5618 = vmatpush1.bf16.msra.mxu0 %v4175
      %5619 = vmatprep.subr.bf16.mxu0 0
      %5620 = vmatpush1.bf16.msra.mxu0 %v4176
      %5621 = vmatprep.subr.bf16.mxu0 0
      %5622 = vmatpush1.bf16.msra.mxu0 %v4177
      %5623 = vmatprep.subr.bf16.mxu0 0
      %5624 = vmatpush1.bf16.msra.mxu0 %v4178
      %5625 = vmatprep.subr.bf16.mxu0 0
      %5626 = vmatpush1.bf16.msra.mxu0 %v4179
      %5627 = vmatprep.subr.bf16.mxu0 0
      %5628 = vmatpush1.bf16.msra.mxu0 %v4180
      %5629 = vmatprep.mubr.bf16.mxu0 %v1632
      %5630 = vmatmul.mubr.bf16.gmra.mrb[0].mxu0 %v1630
      %v5631 = vpop.f32.mrb[0].mxu0
      %v5632 = vadd.f32 %v5592, %v5631
      %v5633 = vpop.f32.mrb[0].mxu0
      %v5634 = vpop.f32.mrb[0].mxu0
      %v5635 = vpop.f32.mrb[0].mxu0
      %5636 = vdwg.mxu0
      %5637 = vmatprep.subr.bf16.mxu0 0
      %5638 = vmatpush1.bf16.msra.mxu0 %v4181
      %5639 = vmatprep.subr.bf16.mxu0 0
      %5640 = vmatpush1.bf16.msra.mxu0 %v4182
      %5641 = vmatprep.subr.bf16.mxu0 0
      %5642 = vmatpush1.bf16.msra.mxu0 %v4183
      %5643 = vmatprep.subr.bf16.mxu0 0
      %5644 = vmatpush1.bf16.msra.mxu0 %v4184
      %5645 = vmatprep.subr.bf16.mxu0 0
      %5646 = vmatpush1.bf16.msra.mxu0 %v4185
      %5647 = vmatprep.subr.bf16.mxu0 0
      %5648 = vmatpush1.bf16.msra.mxu0 %v4186
      %5649 = vmatprep.subr.bf16.mxu0 0
      %5650 = vmatpush1.bf16.msra.mxu0 %v4187
      %5651 = vmatprep.subr.bf16.mxu0 0
      %5652 = vmatpush1.bf16.msra.mxu0 %v4188
      %5653 = vmatprep.subr.bf16.mxu0 0
      %5654 = vmatpush1.bf16.msra.mxu0 %v4189
      %5655 = vmatprep.subr.bf16.mxu0 0
      %5656 = vmatpush1.bf16.msra.mxu0 %v4190
      %5657 = vmatprep.subr.bf16.mxu0 0
      %5658 = vmatpush1.bf16.msra.mxu0 %v4191
      %5659 = vmatprep.subr.bf16.mxu0 0
      %5660 = vmatpush1.bf16.msra.mxu0 %v4192
      %5661 = vmatprep.subr.bf16.mxu0 0
      %5662 = vmatpush1.bf16.msra.mxu0 %v4193
      %5663 = vmatprep.subr.bf16.mxu0 0
      %5664 = vmatpush1.bf16.msra.mxu0 %v4194
      %5665 = vmatprep.subr.bf16.mxu0 0
      %5666 = vmatpush1.bf16.msra.mxu0 %v4195
      %5667 = vmatprep.subr.bf16.mxu0 0
      %5668 = vmatpush1.bf16.msra.mxu0 %v4196
      %5669 = vmatprep.mubr.bf16.mxu0 %v1629
      %5670 = vmatmul.mubr.bf16.gmra.mrb[0].mxu0 %v1615
      %v5671 = vpop.f32.mrb[0].mxu0
      %v5672 = vadd.f32 %v5632, %v5671
      %v5673 = vpop.f32.mrb[0].mxu0
      %v5674 = vpop.f32.mrb[0].mxu0
      %v5675 = vpop.f32.mrb[0].mxu0
      %5676 = vdwg.mxu0
      %5677 = vmatprep.subr.bf16.mxu0 0
      %5678 = vmatpush1.bf16.msra.mxu0 %v4197
      %5679 = vmatprep.subr.bf16.mxu0 0
      %5680 = vmatpush1.bf16.msra.mxu0 %v4198
      %5681 = vmatprep.subr.bf16.mxu0 0
      %5682 = vmatpush1.bf16.msra.mxu0 %v4199
      %5683 = vmatprep.subr.bf16.mxu0 0
      %5684 = vmatpush1.bf16.msra.mxu0 %v4200
      %5685 = vmatprep.subr.bf16.mxu0 0
      %5686 = vmatpush1.bf16.msra.mxu0 %v4201
      %5687 = vmatprep.subr.bf16.mxu0 0
      %5688 = vmatpush1.bf16.msra.mxu0 %v4202
      %5689 = vmatprep.subr.bf16.mxu0 0
      %5690 = vmatpush1.bf16.msra.mxu0 %v4203
      %5691 = vmatprep.subr.bf16.mxu0 0
      %5692 = vmatpush1.bf16.msra.mxu0 %v4204
      %5693 = vmatprep.subr.bf16.mxu0 0
      %5694 = vmatpush1.bf16.msra.mxu0 %v4205
      %5695 = vmatprep.subr.bf16.mxu0 0
      %5696 = vmatpush1.bf16.msra.mxu0 %v4206
      %5697 = vmatprep.subr.bf16.mxu0 0
      %5698 = vmatpush1.bf16.msra.mxu0 %v4207
      %5699 = vmatprep.subr.bf16.mxu0 0
      %5700 = vmatpush1.bf16.msra.mxu0 %v4208
      %5701 = vmatprep.subr.bf16.mxu0 0
      %5702 = vmatpush1.bf16.msra.mxu0 %v4209
      %5703 = vmatprep.subr.bf16.mxu0 0
      %5704 = vmatpush1.bf16.msra.mxu0 %v4210
      %5705 = vmatprep.subr.bf16.mxu0 0
      %5706 = vmatpush1.bf16.msra.mxu0 %v4211
      %5707 = vmatprep.subr.bf16.mxu0 0
      %5708 = vmatpush1.bf16.msra.mxu0 %v4212
      %5709 = vmatprep.mubr.bf16.mxu0 %v1633
      %5710 = vmatmul.mubr.bf16.gmra.mrb[0].mxu0 %v1631
      %v5711 = vpop.f32.mrb[0].mxu0
      %v5712 = vadd.f32 %v5672, %v5711
      %v5713 = vpop.f32.mrb[0].mxu0
      %v5714 = vpop.f32.mrb[0].mxu0
      %v5715 = vpop.f32.mrb[0].mxu0
      %5716 = vdwg.mxu0
      %5717 = vmatprep.subr.bf16.mxu0 0
      %5718 = vmatpush1.bf16.msra.mxu0 %v4213
      %5719 = vmatprep.subr.bf16.mxu0 0
      %5720 = vmatpush1.bf16.msra.mxu0 %v4214
      %5721 = vmatprep.subr.bf16.mxu0 0
      %5722 = vmatpush1.bf16.msra.mxu0 %v4215
      %5723 = vmatprep.subr.bf16.mxu0 0
      %5724 = vmatpush1.bf16.msra.mxu0 %v4216
      %5725 = vmatprep.subr.bf16.mxu0 0
      %5726 = vmatpush1.bf16.msra.mxu0 %v4217
      %5727 = vmatprep.subr.bf16.mxu0 0
      %5728 = vmatpush1.bf16.msra.mxu0 %v4218
      %5729 = vmatprep.subr.bf16.mxu0 0
      %5730 = vmatpush1.bf16.msra.mxu0 %v4219
      %5731 = vmatprep.subr.bf16.mxu0 0
      %5732 = vmatpush1.bf16.msra.mxu0 %v4220
      %5733 = vmatprep.subr.bf16.mxu0 0
      %5734 = vmatpush1.bf16.msra.mxu0 %v4221
      %5735 = vmatprep.subr.bf16.mxu0 0
      %5736 = vmatpush1.bf16.msra.mxu0 %v4222
      %5737 = vmatprep.subr.bf16.mxu0 0
      %5738 = vmatpush1.bf16.msra.mxu0 %v4223
      %5739 = vmatprep.subr.bf16.mxu0 0
      %5740 = vmatpush1.bf16.msra.mxu0 %v4224
      %5741 = vmatprep.subr.bf16.mxu0 0
      %5742 = vmatpush1.bf16.msra.mxu0 %v4225
      %5743 = vmatprep.subr.bf16.mxu0 0
      %5744 = vmatpush1.bf16.msra.mxu0 %v4226
      %5745 = vmatprep.subr.bf16.mxu0 0
      %5746 = vmatpush1.bf16.msra.mxu0 %v4227
      %5747 = vmatprep.subr.bf16.mxu0 0
      %5748 = vmatpush1.bf16.msra.mxu0 %v4228
      %5749 = vmatprep.mubr.bf16.mxu0 %v1671
      %5750 = vmatmul.mubr.bf16.gmra.mrb[0].mxu0 %v1657
      %v5751 = vpop.f32.mrb[0].mxu0
      %v5752 = vadd.f32 %v5712, %v5751
      %v5753 = vpop.f32.mrb[0].mxu0
      %v5754 = vpop.f32.mrb[0].mxu0
      %v5755 = vpop.f32.mrb[0].mxu0
      %5756 = vdwg.mxu0
      %5757 = vmatprep.subr.bf16.mxu0 0
      %5758 = vmatpush1.bf16.msra.mxu0 %v4229
      %5759 = vmatprep.subr.bf16.mxu0 0
      %5760 = vmatpush1.bf16.msra.mxu0 %v4230
      %5761 = vmatprep.subr.bf16.mxu0 0
      %5762 = vmatpush1.bf16.msra.mxu0 %v4231
      %5763 = vmatprep.subr.bf16.mxu0 0
      %5764 = vmatpush1.bf16.msra.mxu0 %v4232
      %5765 = vmatprep.subr.bf16.mxu0 0
      %5766 = vmatpush1.bf16.msra.mxu0 %v4233
      %5767 = vmatprep.subr.bf16.mxu0 0
      %5768 = vmatpush1.bf16.msra.mxu0 %v4234
      %5769 = vmatprep.subr.bf16.mxu0 0
      %5770 = vmatpush1.bf16.msra.mxu0 %v4235
      %5771 = vmatprep.subr.bf16.mxu0 0
      %5772 = vmatpush1.bf16.msra.mxu0 %v4236
      %5773 = vmatprep.subr.bf16.mxu0 0
      %5774 = vmatpush1.bf16.msra.mxu0 %v4237
      %5775 = vmatprep.subr.bf16.mxu0 0
      %5776 = vmatpush1.bf16.msra.mxu0 %v4238
      %5777 = vmatprep.subr.bf16.mxu0 0
      %5778 = vmatpush1.bf16.msra.mxu0 %v4239
      %5779 = vmatprep.subr.bf16.mxu0 0
      %5780 = vmatpush1.bf16.msra.mxu0 %v4240
      %5781 = vmatprep.subr.bf16.mxu0 0
      %5782 = vmatpush1.bf16.msra.mxu0 %v4241
      %5783 = vmatprep.subr.bf16.mxu0 0
      %5784 = vmatpush1.bf16.msra.mxu0 %v4242
      %5785 = vmatprep.subr.bf16.mxu0 0
      %5786 = vmatpush1.bf16.msra.mxu0 %v4243
      %5787 = vmatprep.subr.bf16.mxu0 0
      %5788 = vmatpush1.bf16.msra.mxu0 %v4244
      %5789 = vmatprep.mubr.bf16.mxu0 %v1681
      %5790 = vmatmul.mubr.bf16.gmra.mrb[0].mxu0 %v1679
      %v5791 = vpop.f32.mrb[0].mxu0
      %v5792 = vadd.f32 %v5752, %v5791
      %v5793 = vpop.f32.mrb[0].mxu0
      %v5794 = vpop.f32.mrb[0].mxu0
      %v5795 = vpop.f32.mrb[0].mxu0
      %5796 = vdwg.mxu0
      %5797 = vmatprep.subr.bf16.mxu0 0
      %5798 = vmatpush1.bf16.msra.mxu0 %v4245
      %5799 = vmatprep.subr.bf16.mxu0 0
      %5800 = vmatpush1.bf16.msra.mxu0 %v4246
      %5801 = vmatprep.subr.bf16.mxu0 0
      %5802 = vmatpush1.bf16.msra.mxu0 %v4247
      %5803 = vmatprep.subr.bf16.mxu0 0
      %5804 = vmatpush1.bf16.msra.mxu0 %v4248
      %5805 = vmatprep.subr.bf16.mxu0 0
      %5806 = vmatpush1.bf16.msra.mxu0 %v4249
      %5807 = vmatprep.subr.bf16.mxu0 0
      %5808 = vmatpush1.bf16.msra.mxu0 %v4250
      %5809 = vmatprep.subr.bf16.mxu0 0
      %5810 = vmatpush1.bf16.msra.mxu0 %v4251
      %5811 = vmatprep.subr.bf16.mxu0 0
      %5812 = vmatpush1.bf16.msra.mxu0 %v4252
      %5813 = vmatprep.subr.bf16.mxu0 0
      %5814 = vmatpush1.bf16.msra.mxu0 %v4253
      %5815 = vmatprep.subr.bf16.mxu0 0
      %5816 = vmatpush1.bf16.msra.mxu0 %v4254
      %5817 = vmatprep.subr.bf16.mxu0 0
      %5818 = vmatpush1.bf16.msra.mxu0 %v4255
      %5819 = vmatprep.subr.bf16.mxu0 0
      %5820 = vmatpush1.bf16.msra.mxu0 %v4256
      %5821 = vmatprep.subr.bf16.mxu0 0
      %5822 = vmatpush1.bf16.msra.mxu0 %v4257
      %5823 = vmatprep.subr.bf16.mxu0 0
      %5824 = vmatpush1.bf16.msra.mxu0 %v4258
      %5825 = vmatprep.subr.bf16.mxu0 0
      %5826 = vmatpush1.bf16.msra.mxu0 %v4259
      %5827 = vmatprep.subr.bf16.mxu0 0
      %5828 = vmatpush1.bf16.msra.mxu0 %v4260
      %5829 = vmatprep.mubr.bf16.mxu0 %v1678
      %5830 = vmatmul.mubr.bf16.gmra.mrb[0].mxu0 %v1664
      %v5831 = vpop.f32.mrb[0].mxu0
      %v5832 = vadd.f32 %v5792, %v5831
      %v5833 = vpop.f32.mrb[0].mxu0
      %v5834 = vpop.f32.mrb[0].mxu0
      %v5835 = vpop.f32.mrb[0].mxu0
      %5836 = vdwg.mxu0
      %5837 = vmatprep.subr.bf16.mxu0 0
      %5838 = vmatpush1.bf16.msra.mxu0 %v4261
      %5839 = vmatprep.subr.bf16.mxu0 0
      %5840 = vmatpush1.bf16.msra.mxu0 %v4262
      %5841 = vmatprep.subr.bf16.mxu0 0
      %5842 = vmatpush1.bf16.msra.mxu0 %v4263
      %5843 = vmatprep.subr.bf16.mxu0 0
      %5844 = vmatpush1.bf16.msra.mxu0 %v4264
      %5845 = vmatprep.subr.bf16.mxu0 0
      %5846 = vmatpush1.bf16.msra.mxu0 %v4265
      %5847 = vmatprep.subr.bf16.mxu0 0
      %5848 = vmatpush1.bf16.msra.mxu0 %v4266
      %5849 = vmatprep.subr.bf16.mxu0 0
      %5850 = vmatpush1.bf16.msra.mxu0 %v4267
      %5851 = vmatprep.subr.bf16.mxu0 0
      %5852 = vmatpush1.bf16.msra.mxu0 %v4268
      %5853 = vmatprep.subr.bf16.mxu0 0
      %5854 = vmatpush1.bf16.msra.mxu0 %v4269
      %5855 = vmatprep.subr.bf16.mxu0 0
      %5856 = vmatpush1.bf16.msra.mxu0 %v4270
      %5857 = vmatprep.subr.bf16.mxu0 0
      %5858 = vmatpush1.bf16.msra.mxu0 %v4271
      %5859 = vmatprep.subr.bf16.mxu0 0
      %5860 = vmatpush1.bf16.msra.mxu0 %v4272
      %5861 = vmatprep.subr.bf16.mxu0 0
      %5862 = vmatpush1.bf16.msra.mxu0 %v4273
      %5863 = vmatprep.subr.bf16.mxu0 0
      %5864 = vmatpush1.bf16.msra.mxu0 %v4274
      %5865 = vmatprep.subr.bf16.mxu0 0
      %5866 = vmatpush1.bf16.msra.mxu0 %v4275
      %5867 = vmatprep.subr.bf16.mxu0 0
      %5868 = vmatpush1.bf16.msra.mxu0 %v4276
      %5869 = vmatprep.mubr.bf16.mxu0 %v1682
      %5870 = vmatmul.mubr.bf16.gmra.mrb[0].mxu0 %v1680
      %v5871 = vpop.f32.mrb[0].mxu0
      %v5872 = vadd.f32 %v5832, %v5871
      %v5873 = vpop.f32.mrb[0].mxu0
      %v5874 = vpop.f32.mrb[0].mxu0
      %v5875 = vpop.f32.mrb[0].mxu0
      %5876 = vdwg.mxu0
      %5877 = vmatprep.subr.bf16.mxu0 0
      %5878 = vmatpush1.bf16.msra.mxu0 %v4277
      %5879 = vmatprep.subr.bf16.mxu0 0
      %5880 = vmatpush1.bf16.msra.mxu0 %v4278
      %5881 = vmatprep.subr.bf16.mxu0 0
      %5882 = vmatpush1.bf16.msra.mxu0 %v4279
      %5883 = vmatprep.subr.bf16.mxu0 0
      %5884 = vmatpush1.bf16.msra.mxu0 %v4280
      %5885 = vmatprep.subr.bf16.mxu0 0
      %5886 = vmatpush1.bf16.msra.mxu0 %v4281
      %5887 = vmatprep.subr.bf16.mxu0 0
      %5888 = vmatpush1.bf16.msra.mxu0 %v4282
      %5889 = vmatprep.subr.bf16.mxu0 0
      %5890 = vmatpush1.bf16.msra.mxu0 %v4283
      %5891 = vmatprep.subr.bf16.mxu0 0
      %5892 = vmatpush1.bf16.msra.mxu0 %v4284
      %5893 = vmatprep.subr.bf16.mxu0 0
      %5894 = vmatpush1.bf16.msra.mxu0 %v4285
      %5895 = vmatprep.subr.bf16.mxu0 0
      %5896 = vmatpush1.bf16.msra.mxu0 %v4286
      %5897 = vmatprep.subr.bf16.mxu0 0
      %5898 = vmatpush1.bf16.msra.mxu0 %v4287
      %5899 = vmatprep.subr.bf16.mxu0 0
      %5900 = vmatpush1.bf16.msra.mxu0 %v4288
      %5901 = vmatprep.subr.bf16.mxu0 0
      %5902 = vmatpush1.bf16.msra.mxu0 %v4289
      %5903 = vmatprep.subr.bf16.mxu0 0
      %5904 = vmatpush1.bf16.msra.mxu0 %v4290
      %5905 = vmatprep.subr.bf16.mxu0 0
      %5906 = vmatpush1.bf16.msra.mxu0 %v4291
      %5907 = vmatprep.subr.bf16.mxu0 0
      %5908 = vmatpush1.bf16.msra.mxu0 %v4292
      %5909 = vmatprep.mubr.bf16.mxu0 %v1720
      %5910 = vmatmul.mubr.bf16.gmra.mrb[0].mxu0 %v1706
      %v5911 = vpop.f32.mrb[0].mxu0
      %v5912 = vadd.f32 %v5872, %v5911
      %v5913 = vpop.f32.mrb[0].mxu0
      %v5914 = vpop.f32.mrb[0].mxu0
      %v5915 = vpop.f32.mrb[0].mxu0
      %5916 = vdwg.mxu0
      %5917 = vmatprep.subr.bf16.mxu0 0
      %5918 = vmatpush1.bf16.msra.mxu0 %v4293
      %5919 = vmatprep.subr.bf16.mxu0 0
      %5920 = vmatpush1.bf16.msra.mxu0 %v4294
      %5921 = vmatprep.subr.bf16.mxu0 0
      %5922 = vmatpush1.bf16.msra.mxu0 %v4295
      %5923 = vmatprep.subr.bf16.mxu0 0
      %5924 = vmatpush1.bf16.msra.mxu0 %v4296
      %5925 = vmatprep.subr.bf16.mxu0 0
      %5926 = vmatpush1.bf16.msra.mxu0 %v4297
      %5927 = vmatprep.subr.bf16.mxu0 0
      %5928 = vmatpush1.bf16.msra.mxu0 %v4298
      %5929 = vmatprep.subr.bf16.mxu0 0
      %5930 = vmatpush1.bf16.msra.mxu0 %v4299
      %5931 = vmatprep.subr.bf16.mxu0 0
      %5932 = vmatpush1.bf16.msra.mxu0 %v4300
      %5933 = vmatprep.subr.bf16.mxu0 0
      %5934 = vmatpush1.bf16.msra.mxu0 %v4301
      %5935 = vmatprep.subr.bf16.mxu0 0
      %5936 = vmatpush1.bf16.msra.mxu0 %v4302
      %5937 = vmatprep.subr.bf16.mxu0 0
      %5938 = vmatpush1.bf16.msra.mxu0 %v4303
      %5939 = vmatprep.subr.bf16.mxu0 0
      %5940 = vmatpush1.bf16.msra.mxu0 %v4304
      %5941 = vmatprep.subr.bf16.mxu0 0
      %5942 = vmatpush1.bf16.msra.mxu0 %v4305
      %5943 = vmatprep.subr.bf16.mxu0 0
      %5944 = vmatpush1.bf16.msra.mxu0 %v4306
      %5945 = vmatprep.subr.bf16.mxu0 0
      %5946 = vmatpush1.bf16.msra.mxu0 %v4307
      %5947 = vmatprep.subr.bf16.mxu0 0
      %5948 = vmatpush1.bf16.msra.mxu0 %v4308
      %5949 = vmatprep.mubr.bf16.mxu0 %v1730
      %5950 = vmatmul.mubr.bf16.gmra.mrb[0].mxu0 %v1728
      %v5951 = vpop.f32.mrb[0].mxu0
      %v5952 = vadd.f32 %v5912, %v5951
      %v5953 = vpop.f32.mrb[0].mxu0
      %v5954 = vpop.f32.mrb[0].mxu0
      %v5955 = vpop.f32.mrb[0].mxu0
      %5956 = vdwg.mxu0
      %5957 = vmatprep.subr.bf16.mxu0 0
      %5958 = vmatpush1.bf16.msra.mxu0 %v4309
      %5959 = vmatprep.subr.bf16.mxu0 0
      %5960 = vmatpush1.bf16.msra.mxu0 %v4310
      %5961 = vmatprep.subr.bf16.mxu0 0
      %5962 = vmatpush1.bf16.msra.mxu0 %v4311
      %5963 = vmatprep.subr.bf16.mxu0 0
      %5964 = vmatpush1.bf16.msra.mxu0 %v4312
      %5965 = vmatprep.subr.bf16.mxu0 0
      %5966 = vmatpush1.bf16.msra.mxu0 %v4313
      %5967 = vmatprep.subr.bf16.mxu0 0
      %5968 = vmatpush1.bf16.msra.mxu0 %v4314
      %5969 = vmatprep.subr.bf16.mxu0 0
      %5970 = vmatpush1.bf16.msra.mxu0 %v4315
      %5971 = vmatprep.subr.bf16.mxu0 0
      %5972 = vmatpush1.bf16.msra.mxu0 %v4316
      %5973 = vmatprep.subr.bf16.mxu0 0
      %5974 = vmatpush1.bf16.msra.mxu0 %v4317
      %5975 = vmatprep.subr.bf16.mxu0 0
      %5976 = vmatpush1.bf16.msra.mxu0 %v4318
      %5977 = vmatprep.subr.bf16.mxu0 0
      %5978 = vmatpush1.bf16.msra.mxu0 %v4319
      %5979 = vmatprep.subr.bf16.mxu0 0
      %5980 = vmatpush1.bf16.msra.mxu0 %v4320
      %5981 = vmatprep.subr.bf16.mxu0 0
      %5982 = vmatpush1.bf16.msra.mxu0 %v4321
      %5983 = vmatprep.subr.bf16.mxu0 0
      %5984 = vmatpush1.bf16.msra.mxu0 %v4322
      %5985 = vmatprep.subr.bf16.mxu0 0
      %5986 = vmatpush1.bf16.msra.mxu0 %v4323
      %5987 = vmatprep.subr.bf16.mxu0 0
      %5988 = vmatpush1.bf16.msra.mxu0 %v4324
      %5989 = vmatprep.mubr.bf16.mxu0 %v1727
      %5990 = vmatmul.mubr.bf16.gmra.mrb[0].mxu0 %v1713
      %v5991 = vpop.f32.mrb[0].mxu0
      %v5992 = vadd.f32 %v5952, %v5991
      %v5993 = vpop.f32.mrb[0].mxu0
      %v5994 = vpop.f32.mrb[0].mxu0
      %v5995 = vpop.f32.mrb[0].mxu0
      %5996 = vdwg.mxu0
      %5997 = vmatprep.subr.bf16.mxu0 0
      %5998 = vmatpush1.bf16.msra.mxu0 %v4325
      %5999 = vmatprep.subr.bf16.mxu0 0
      %6000 = vmatpush1.bf16.msra.mxu0 %v4326
      %6001 = vmatprep.subr.bf16.mxu0 0
      %6002 = vmatpush1.bf16.msra.mxu0 %v4327
      %6003 = vmatprep.subr.bf16.mxu0 0
      %6004 = vmatpush1.bf16.msra.mxu0 %v4328
      %6005 = vmatprep.subr.bf16.mxu0 0
      %6006 = vmatpush1.bf16.msra.mxu0 %v4329
      %6007 = vmatprep.subr.bf16.mxu0 0
      %6008 = vmatpush1.bf16.msra.mxu0 %v4330
      %6009 = vmatprep.subr.bf16.mxu0 0
      %6010 = vmatpush1.bf16.msra.mxu0 %v4331
      %6011 = vmatprep.subr.bf16.mxu0 0
      %6012 = vmatpush1.bf16.msra.mxu0 %v4332
      %6013 = vmatprep.subr.bf16.mxu0 0
      %6014 = vmatpush1.bf16.msra.mxu0 %v4333
      %6015 = vmatprep.subr.bf16.mxu0 0
      %6016 = vmatpush1.bf16.msra.mxu0 %v4334
      %6017 = vmatprep.subr.bf16.mxu0 0
      %6018 = vmatpush1.bf16.msra.mxu0 %v4335
      %6019 = vmatprep.subr.bf16.mxu0 0
      %6020 = vmatpush1.bf16.msra.mxu0 %v4336
      %6021 = vmatprep.subr.bf16.mxu0 0
      %6022 = vmatpush1.bf16.msra.mxu0 %v4337
      %6023 = vmatprep.subr.bf16.mxu0 0
      %6024 = vmatpush1.bf16.msra.mxu0 %v4338
      %6025 = vmatprep.subr.bf16.mxu0 0
      %6026 = vmatpush1.bf16.msra.mxu0 %v4339
      %6027 = vmatprep.subr.bf16.mxu0 0
      %6028 = vmatpush1.bf16.msra.mxu0 %v4340
      %6029 = vmatprep.mubr.bf16.mxu0 %v1731
      %6030 = vmatmul.mubr.bf16.gmra.mrb[0].mxu0 %v1729
      %v6031 = vpop.f32.mrb[0].mxu0
      %v6032 = vadd.f32 %v5992, %v6031
      %v6033 = vpop.f32.mrb[0].mxu0
      %v6034 = vpop.f32.mrb[0].mxu0
      %v6035 = vpop.f32.mrb[0].mxu0
      %6036 = vdwg.mxu0
      %6037 = vmatprep.subr.bf16.mxu0 0
      %6038 = vmatpush1.bf16.msra.mxu0 %v4341
      %6039 = vmatprep.subr.bf16.mxu0 0
      %6040 = vmatpush1.bf16.msra.mxu0 %v4342
      %6041 = vmatprep.subr.bf16.mxu0 0
      %6042 = vmatpush1.bf16.msra.mxu0 %v4343
      %6043 = vmatprep.subr.bf16.mxu0 0
      %6044 = vmatpush1.bf16.msra.mxu0 %v4344
      %6045 = vmatprep.subr.bf16.mxu0 0
      %6046 = vmatpush1.bf16.msra.mxu0 %v4345
      %6047 = vmatprep.subr.bf16.mxu0 0
      %6048 = vmatpush1.bf16.msra.mxu0 %v4346
      %6049 = vmatprep.subr.bf16.mxu0 0
      %6050 = vmatpush1.bf16.msra.mxu0 %v4347
      %6051 = vmatprep.subr.bf16.mxu0 0
      %6052 = vmatpush1.bf16.msra.mxu0 %v4348
      %6053 = vmatprep.subr.bf16.mxu0 0
      %6054 = vmatpush1.bf16.msra.mxu0 %v4349
      %6055 = vmatprep.subr.bf16.mxu0 0
      %6056 = vmatpush1.bf16.msra.mxu0 %v4350
      %6057 = vmatprep.subr.bf16.mxu0 0
      %6058 = vmatpush1.bf16.msra.mxu0 %v4351
      %6059 = vmatprep.subr.bf16.mxu0 0
      %6060 = vmatpush1.bf16.msra.mxu0 %v4352
      %6061 = vmatprep.subr.bf16.mxu0 0
      %6062 = vmatpush1.bf16.msra.mxu0 %v4353
      %6063 = vmatprep.subr.bf16.mxu0 0
      %6064 = vmatpush1.bf16.msra.mxu0 %v4354
      %6065 = vmatprep.subr.bf16.mxu0 0
      %6066 = vmatpush1.bf16.msra.mxu0 %v4355
      %6067 = vmatprep.subr.bf16.mxu0 0
      %6068 = vmatpush1.bf16.msra.mxu0 %v4356
      %6069 = vmatprep.mubr.bf16.mxu0 %v1769
      %6070 = vmatmul.mubr.bf16.gmra.mrb[0].mxu0 %v1755
      %v6071 = vpop.f32.mrb[0].mxu0
      %v6072 = vadd.f32 %v6032, %v6071
      %v6073 = vpop.f32.mrb[0].mxu0
      %v6074 = vpop.f32.mrb[0].mxu0
      %v6075 = vpop.f32.mrb[0].mxu0
      %6076 = vdwg.mxu0
      %6077 = vmatprep.subr.bf16.mxu0 0
      %6078 = vmatpush1.bf16.msra.mxu0 %v4357
      %6079 = vmatprep.subr.bf16.mxu0 0
      %6080 = vmatpush1.bf16.msra.mxu0 %v4358
      %6081 = vmatprep.subr.bf16.mxu0 0
      %6082 = vmatpush1.bf16.msra.mxu0 %v4359
      %6083 = vmatprep.subr.bf16.mxu0 0
      %6084 = vmatpush1.bf16.msra.mxu0 %v4360
      %6085 = vmatprep.subr.bf16.mxu0 0
      %6086 = vmatpush1.bf16.msra.mxu0 %v4361
      %6087 = vmatprep.subr.bf16.mxu0 0
      %6088 = vmatpush1.bf16.msra.mxu0 %v4362
      %6089 = vmatprep.subr.bf16.mxu0 0
      %6090 = vmatpush1.bf16.msra.mxu0 %v4363
      %6091 = vmatprep.subr.bf16.mxu0 0
      %6092 = vmatpush1.bf16.msra.mxu0 %v4364
      %6093 = vmatprep.subr.bf16.mxu0 0
      %6094 = vmatpush1.bf16.msra.mxu0 %v4365
      %6095 = vmatprep.subr.bf16.mxu0 0
      %6096 = vmatpush1.bf16.msra.mxu0 %v4366
      %6097 = vmatprep.subr.bf16.mxu0 0
      %6098 = vmatpush1.bf16.msra.mxu0 %v4367
      %6099 = vmatprep.subr.bf16.mxu0 0
      %6100 = vmatpush1.bf16.msra.mxu0 %v4368
      %6101 = vmatprep.subr.bf16.mxu0 0
      %6102 = vmatpush1.bf16.msra.mxu0 %v4369
      %6103 = vmatprep.subr.bf16.mxu0 0
      %6104 = vmatpush1.bf16.msra.mxu0 %v4370
      %6105 = vmatprep.subr.bf16.mxu0 0
      %6106 = vmatpush1.bf16.msra.mxu0 %v4371
      %6107 = vmatprep.subr.bf16.mxu0 0
      %6108 = vmatpush1.bf16.msra.mxu0 %v4372
      %6109 = vmatprep.mubr.bf16.mxu0 %v1779
      %6110 = vmatmul.mubr.bf16.gmra.mrb[0].mxu0 %v1777
      %v6111 = vpop.f32.mrb[0].mxu0
      %v6112 = vadd.f32 %v6072, %v6111
      %v6113 = vpop.f32.mrb[0].mxu0
      %v6114 = vpop.f32.mrb[0].mxu0
      %v6115 = vpop.f32.mrb[0].mxu0
      %6116 = vdwg.mxu0
      %6117 = vmatprep.subr.bf16.mxu0 0
      %6118 = vmatpush1.bf16.msra.mxu0 %v4373
      %6119 = vmatprep.subr.bf16.mxu0 0
      %6120 = vmatpush1.bf16.msra.mxu0 %v4374
      %6121 = vmatprep.subr.bf16.mxu0 0
      %6122 = vmatpush1.bf16.msra.mxu0 %v4375
      %6123 = vmatprep.subr.bf16.mxu0 0
      %6124 = vmatpush1.bf16.msra.mxu0 %v4376
      %6125 = vmatprep.subr.bf16.mxu0 0
      %6126 = vmatpush1.bf16.msra.mxu0 %v4377
      %6127 = vmatprep.subr.bf16.mxu0 0
      %6128 = vmatpush1.bf16.msra.mxu0 %v4378
      %6129 = vmatprep.subr.bf16.mxu0 0
      %6130 = vmatpush1.bf16.msra.mxu0 %v4379
      %6131 = vmatprep.subr.bf16.mxu0 0
      %6132 = vmatpush1.bf16.msra.mxu0 %v4380
      %6133 = vmatprep.subr.bf16.mxu0 0
      %6134 = vmatpush1.bf16.msra.mxu0 %v4381
      %6135 = vmatprep.subr.bf16.mxu0 0
      %6136 = vmatpush1.bf16.msra.mxu0 %v4382
      %6137 = vmatprep.subr.bf16.mxu0 0
      %6138 = vmatpush1.bf16.msra.mxu0 %v4383
      %6139 = vmatprep.subr.bf16.mxu0 0
      %6140 = vmatpush1.bf16.msra.mxu0 %v4384
      %6141 = vmatprep.subr.bf16.mxu0 0
      %6142 = vmatpush1.bf16.msra.mxu0 %v4385
      %6143 = vmatprep.subr.bf16.mxu0 0
      %6144 = vmatpush1.bf16.msra.mxu0 %v4386
      %6145 = vmatprep.subr.bf16.mxu0 0
      %6146 = vmatpush1.bf16.msra.mxu0 %v4387
      %6147 = vmatprep.subr.bf16.mxu0 0
      %6148 = vmatpush1.bf16.msra.mxu0 %v4388
      %6149 = vmatprep.mubr.bf16.mxu0 %v1776
      %6150 = vmatmul.mubr.bf16.gmra.mrb[0].mxu0 %v1762
      %v6151 = vpop.f32.mrb[0].mxu0
      %v6152 = vadd.f32 %v6112, %v6151
      %v6153 = vpop.f32.mrb[0].mxu0
      %v6154 = vpop.f32.mrb[0].mxu0
      %v6155 = vpop.f32.mrb[0].mxu0
      %6156 = vdwg.mxu0
      %6157 = vmatprep.subr.bf16.mxu0 0
      %6158 = vmatpush1.bf16.msra.mxu0 %v4389
      %6159 = vmatprep.subr.bf16.mxu0 0
      %6160 = vmatpush1.bf16.msra.mxu0 %v4390
      %6161 = vmatprep.subr.bf16.mxu0 0
      %6162 = vmatpush1.bf16.msra.mxu0 %v4391
      %6163 = vmatprep.subr.bf16.mxu0 0
      %6164 = vmatpush1.bf16.msra.mxu0 %v4392
      %6165 = vmatprep.subr.bf16.mxu0 0
      %6166 = vmatpush1.bf16.msra.mxu0 %v4393
      %6167 = vmatprep.subr.bf16.mxu0 0
      %6168 = vmatpush1.bf16.msra.mxu0 %v4394
      %6169 = vmatprep.subr.bf16.mxu0 0
      %6170 = vmatpush1.bf16.msra.mxu0 %v4395
      %6171 = vmatprep.subr.bf16.mxu0 0
      %6172 = vmatpush1.bf16.msra.mxu0 %v4396
      %6173 = vmatprep.subr.bf16.mxu0 0
      %6174 = vmatpush1.bf16.msra.mxu0 %v4397
      %6175 = vmatprep.subr.bf16.mxu0 0
      %6176 = vmatpush1.bf16.msra.mxu0 %v4398
      %6177 = vmatprep.subr.bf16.mxu0 0
      %6178 = vmatpush1.bf16.msra.mxu0 %v4399
      %6179 = vmatprep.subr.bf16.mxu0 0
      %6180 = vmatpush1.bf16.msra.mxu0 %v4400
      %6181 = vmatprep.subr.bf16.mxu0 0
      %6182 = vmatpush1.bf16.msra.mxu0 %v4401
      %6183 = vmatprep.subr.bf16.mxu0 0
      %6184 = vmatpush1.bf16.msra.mxu0 %v4402
      %6185 = vmatprep.subr.bf16.mxu0 0
      %6186 = vmatpush1.bf16.msra.mxu0 %v4403
      %6187 = vmatprep.subr.bf16.mxu0 0
      %6188 = vmatpush1.bf16.msra.mxu0 %v4404
      %6189 = vmatprep.mubr.bf16.mxu0 %v1780
      %6190 = vmatmul.mubr.bf16.gmra.mrb[0].mxu0 %v1778
      %v6191 = vpop.f32.mrb[0].mxu0
      %v6192 = vadd.f32 %v6152, %v6191
      %v6193 = vpop.f32.mrb[0].mxu0
      %v6194 = vpop.f32.mrb[0].mxu0
      %v6195 = vpop.f32.mrb[0].mxu0
      %6196 = vdwg.mxu0
      %v6197 = vadd.f32 %v348, %v6192
      %vm6198 = vcmask 254976
      %6199 = vst.msk [vmem:[#allocation2] sm:$0x3] %vm6198, %v6197
      %p6200 = scmp.eq.s32.totalorder %s22, 3
      // Predicated region
      $region61: #{linear_logp_forward.3} parent=55 // pred_check
        %p6201 = pneg %p6200
      $region62: #{linear_logp_forward.3} parent=55 // pred_check_branch
        %6203 = sbr.rel (%p6201) target = $region64
      $region63: #{linear_logp_forward.3} parent=55 // pred_region
        %v6204 = vld [vmem:[%s2] sm:$0x3]
        %v6205 = vld [vmem:[%s3] sm:$0x1]
        %6207 = vset.pattern.permute.xlu0 0
        %6208 = vperm.xlu0 %6207, %v6204
        %v6209 = vpop.permute.xlu0 %6208
        %v6212 = vlaneseq
        %v6213 = vshrl.u32 %v6212, 7
        %v6214 = vsub.s32 0, %v6213
        %v6215 = vrot.slane %v6205, %v6214
        %v6217 = vmul.f32 %v6209, %v6215
        %v6218 = vld [vmem:[%s4] sm:$0x1]
        %v6220 = vlaneseq
        %v6221 = vshrl.u32 %v6220, 7
        %v6222 = vsub.s32 0, %v6221
        %v6223 = vrot.slane %v6218, %v6222
        %v6225 = vadd.f32 %v6217, %v6223
        %v6226 = vmax.f32 %v6225, 0.0
        %v6227 = vld [vmem:[#allocation2] sm:$0x3]
        %v6228 = vld [vmem:[%s5] sm:$0xff]
        %v6229 = vld [vmem:[%s5 + $0x8] sm:$0xff]
        %v6230 = vld [vmem:[%s5 + $0x10] sm:$0xff]
        %v6231 = vld [vmem:[%s5 + $0x18] sm:$0xff]
        %v6232 = vld [vmem:[%s5 + $0x20] sm:$0xff]
        %v6233 = vld [vmem:[%s5 + $0x28] sm:$0xff]
        %v6234 = vld [vmem:[%s5 + $0x30] sm:$0xff]
        %v6235 = vld [vmem:[%s5 + $0x38] sm:$0xff]
        %v6236 = vld [vmem:[%s5 + $0x40] sm:$0xff]
        %v6237 = vld [vmem:[%s5 + $0x48] sm:$0xff]
        %v6238 = vld [vmem:[%s5 + $0x50] sm:$0xff]
        %v6239 = vld [vmem:[%s5 + $0x58] sm:$0xff]
        %v6240 = vld [vmem:[%s5 + $0x60] sm:$0xff]
        %v6241 = vld [vmem:[%s5 + $0x68] sm:$0xff]
        %v6242 = vld [vmem:[%s5 + $0x70] sm:$0xff]
        %v6243 = vld [vmem:[%s5 + $0x78] sm:$0xff]
        %6244 = vmatprep.subr.mxu0 0.0
        %6245 = vmatpush1.msra.mxu0 %v6228
        %6246 = vmatprep.subr.mxu0 0.0
        %6247 = vmatpush1.msra.mxu0 %v6229
        %6248 = vmatprep.subr.mxu0 0.0
        %6249 = vmatpush1.msra.mxu0 %v6230
        %6250 = vmatprep.subr.mxu0 0.0
        %6251 = vmatpush1.msra.mxu0 %v6231
        %6252 = vmatprep.subr.mxu0 0.0
        %6253 = vmatpush1.msra.mxu0 %v6232
        %6254 = vmatprep.subr.mxu0 0.0
        %6255 = vmatpush1.msra.mxu0 %v6233
        %6256 = vmatprep.subr.mxu0 0.0
        %6257 = vmatpush1.msra.mxu0 %v6234
        %6258 = vmatprep.subr.mxu0 0.0
        %6259 = vmatpush1.msra.mxu0 %v6235
        %6260 = vmatprep.subr.mxu0 0.0
        %6261 = vmatpush1.msra.mxu0 %v6236
        %6262 = vmatprep.subr.mxu0 0.0
        %6263 = vmatpush1.msra.mxu0 %v6237
        %6264 = vmatprep.subr.mxu0 0.0
        %6265 = vmatpush1.msra.mxu0 %v6238
        %6266 = vmatprep.subr.mxu0 0.0
        %6267 = vmatpush1.msra.mxu0 %v6239
        %6268 = vmatprep.subr.mxu0 0.0
        %6269 = vmatpush1.msra.mxu0 %v6240
        %6270 = vmatprep.subr.mxu0 0.0
        %6271 = vmatpush1.msra.mxu0 %v6241
        %6272 = vmatprep.subr.mxu0 0.0
        %6273 = vmatpush1.msra.mxu0 %v6242
        %6274 = vmatprep.subr.mxu0 0.0
        %6275 = vmatpush1.msra.mxu0 %v6243
        %6276 = vmatprep.subr.mxu0 0.0
        %6277 = vmatpush1.msra.mxu0 0.0
        %6278 = vmatprep.subr.mxu0 0.0
        %6279 = vmatpush1.msra.mxu0 0.0
        %6280 = vmatprep.subr.mxu0 0.0
        %6281 = vmatpush1.msra.mxu0 0.0
        %6282 = vmatprep.subr.mxu0 0.0
        %6283 = vmatpush1.msra.mxu0 0.0
        %6284 = vmatprep.subr.mxu0 0.0
        %6285 = vmatpush1.msra.mxu0 0.0
        %6286 = vmatprep.subr.mxu0 0.0
        %6287 = vmatpush1.msra.mxu0 0.0
        %6288 = vmatprep.subr.mxu0 0.0
        %6289 = vmatpush1.msra.mxu0 0.0
        %6290 = vmatprep.subr.mxu0 0.0
        %6291 = vmatpush1.msra.mxu0 0.0
        %6292 = vmatprep.subr.mxu0 0.0
        %6293 = vmatpush1.msra.mxu0 0.0
        %6294 = vmatprep.subr.mxu0 0.0
        %6295 = vmatpush1.msra.mxu0 0.0
        %6296 = vmatprep.subr.mxu0 0.0
        %6297 = vmatpush1.msra.mxu0 0.0
        %6298 = vmatprep.subr.mxu0 0.0
        %6299 = vmatpush1.msra.mxu0 0.0
        %6300 = vmatprep.subr.mxu0 0.0
        %6301 = vmatpush1.msra.mxu0 0.0
        %6302 = vmatprep.subr.mxu0 0.0
        %6303 = vmatpush1.msra.mxu0 0.0
        %6304 = vmatprep.subr.mxu0 0.0
        %6305 = vmatpush1.msra.mxu0 0.0
        %6306 = vmatprep.subr.mxu0 0.0
        %6307 = vmatpush1.msra.mxu0 0.0
        %6308 = vmatprep.mubr.f32.mxu0 0.0
        %6309 = vmatmul.mubr.f32.gmra.mrb[0].mxu0 %v6226
        %v6310 = vpop.f32.mrb[0].mxu0
        %v6311 = vadd.f32 0.0, %v6310
        %v6312 = vpop.f32.mrb[0].mxu0
        %6313 = vdwg.mxu0
        %v6314 = vadd.f32 %v6227, %v6311
        %v6315 = vld [vmem:[%s6] sm:$0x1]
        %v6317 = vlaneseq
        %v6318 = vshrl.u32 %v6317, 7
        %v6319 = vsub.s32 0, %v6318
        %v6320 = vrot.slane %v6315, %v6319
        %v6322 = vadd.f32 %v6314, %v6320
        %v6323 = vld [vmem:[%s7] sm:$0x1]
        %v6325 = vlaneseq
        %v6326 = vshrl.u32 %v6325, 7
        %v6327 = vsub.s32 0, %v6326
        %v6328 = vrot.slane %v6323, %v6327
        %v6330 = vmul.f32 %v6322, %v6328
        %v6331 = vsel %vm6198, %v6330, 0.0
        %6332 = vadd.xlane.f32.xlu0 %v6331
        %v6333 = vpop.xlane.xlu0 %6332
        %v6334 = vld [vmem:[#allocation3] sm:$0x1]
        %v6336 = vlaneseq
        %v6337 = vshrl.u32 %v6336, 7
        %v6338 = vsub.s32 0, %v6337
        %v6339 = vrot.slane %v6334, %v6338
        %v6341 = vadd.f32 %v6333, %v6339
        %v6342 = vmax.f32 %v6341, 0.0
        %vm6343 = vcmask 1024
        %6344 = vst.msk [vmem:[%s9] sm:$0x3] %vm6343, %v6342
      $region64: #{linear_logp_forward.3} parent=55 // pred_fallthru
        _
      // Predicated region
      $region65: #{linear_logp_forward.3} parent=55 // pred_check
        %p6345 = pneg %p234
      $region66: #{linear_logp_forward.3} parent=55 // pred_check_branch
        %6347 = sbr.rel (%p6345) target = $region68
      $region67: #{linear_logp_forward.3} parent=55 // pred_region
        _
      $region68: #{linear_logp_forward.3} parent=55 // pred_fallthru
        _
      // Predicated region
      $region69: #{linear_logp_forward.3} parent=55 // pred_check
        %p6348 = pneg %p234
      $region70: #{linear_logp_forward.3} parent=55 // pred_check_branch
        %6350 = sbr.rel (%p6348) target = $region72
      $region71: #{linear_logp_forward.3} parent=55 // pred_region
        _
      $region72: #{linear_logp_forward.3} parent=55 // pred_fallthru
        _
    $region56: #{linear_logp_forward.3} parent=5 // pred_fallthru
      _
    %p6351 = scmp.le.s32.totalorder 2, %s17
    // Predicated region
    $region73: #{linear_logp_forward.3} parent=5 // pred_check
      %p6352 = pneg %p6351
    $region74: #{linear_logp_forward.3} parent=5 // pred_check_branch
      %6354 = sbr.rel (%p6352) target = $region76
    $region75: #{linear_logp_forward.3} parent=5 // pred_region
      %s6355 = ssub.s32 %s17, 2
    $region76: #{linear_logp_forward.3} parent=5 // pred_fallthru
      _
  $region6: #{linear_logp_forward.3} parent=0 // loop_footer
    %s21 = sadd.s32 1, %s17
  $region7: #{linear_logp_forward.3} parent=0 // loop_footer_branch
    %16 = sbr.rel target = $region3
  $region8: #{linear_logp_forward.3} parent=0 // loop_exit
    _

</llo_original>
